<compile_context>
chip_gen: v6e
topology: v6e:2x2x1
jax: 0.10.0
libtpu: 0.0.40
codegen_flags: <defaults>
</compile_context>

<pallas_src>
import functools

import jax
import jax.numpy as jnp
import numpy as np
from jax.experimental import pallas as pl
from jax.experimental.pallas import tpu as pltpu


def _glca_kernel(idx_ref, x_ref, wq_ref, bq_ref, wkv_ref, bkv_ref, wp_ref, bp_ref,
                 out_ref, o_scratch, *, num_heads, head_dim, bb, num_local, seq_len,
                 mxu_dtype, approx_recip):
    """GLCA cross-attention with fused gather/scatter for a block of `bb` batch rows.

    idx_ref:  (B, L)     int32 selected-token indices (full array, constant block)
    x_ref:    (bb, N, C) input block in its native dtype
    wq_ref:   (C, C)     query weight, 1/sqrt(head_dim) pre-folded, MXU dtype
    bq_ref:   (1, C)     query bias (scale folded), f32
    wkv_ref:  (C, 2C)    fused key|value weight, MXU dtype
    bkv_ref:  (1, 2C)    fused key|value bias, f32
    wp_ref:   (C, C)     output-projection weight, MXU dtype
    bp_ref:   (1, C)     output-projection bias, f32
    out_ref:  (bb, N, C) full-sequence output block in x dtype (scatter fused)
    o_scratch:(L, C)     VMEM f32 scratch for the normalized multi-head output
    """
    C = num_heads * head_dim
    L = num_local
    N = seq_len
    g = pl.program_id(0)

    wq, wkv, wp = wq_ref[...], wkv_ref[...], wp_ref[...]
    bq, bkv, bp = bq_ref[...], bkv_ref[...], bp_ref[...]

    for b in range(bb):  # static unroll; bb is a small tunable (1-4)
        x_rows = x_ref[b]                      # (N, C), native dtype (pass-through)
        xm = x_rows.astype(mxu_dtype)          # MXU-operand dtype

        # ---- fused top-R% gather: one-hot (N, L) from the index table; the selected
        #      rows are picked with a tiny MXU matmul (exact for {0,1} weights). ----
        idx = idx_ref[pl.ds(g * bb + b, 1), :]                      # (1, L) int32
        row_ids = jax.lax.broadcasted_iota(jnp.int32, (N, L), 0)    # row id per (n,l)
        onehot = (row_ids == idx).astype(jnp.float32)               # (N, L) {0,1}
        selq = jax.lax.dot_general(                                  # (L, C) gathered
            onehot.astype(mxu_dtype), xm, (((0,), (0,)), ((), ())),
            preferred_element_type=jnp.float32).astype(mxu_dtype)

        # ---- projections per batch element (2-D views, no misaligned flatten),
        #      f32 accumulation; kv fused as one (C, 2C) matmul. ----
        q = jnp.dot(selq, wq, preferred_element_type=jnp.float32) + bq    # (L, C)
        kv = jnp.dot(xm, wkv, preferred_element_type=jnp.float32) + bkv   # (N, 2C)

        # Attention-matmul operands in the MXU dtype (softmax/accum stay f32).
        qm = q.astype(mxu_dtype)
        km = kv[:, :C].astype(mxu_dtype)
        vm = kv[:, C:].astype(mxu_dtype)

        for h in range(num_heads):             # static; D small -> per-head MXU pushes
            sl = slice(h * head_dim, (h + 1) * head_dim)
            s = jax.lax.dot_general(qm[:, sl], km[:, sl], (((1,), (1,)), ((), ())),
                                    preferred_element_type=jnp.float32)   # (L, N)
            s = s - jnp.max(s, axis=-1, keepdims=True)
            p = jnp.exp(s)
            denom = jnp.sum(p, axis=-1, keepdims=True)                     # (L, 1)
            o = jnp.dot(p.astype(mxu_dtype), vm[:, sl],
                        preferred_element_type=jnp.float32)                # (L, D)
            # Deferred softmax normalization on the small head output (EUP recip).
            o = o * pl.reciprocal(denom, approx=approx_recip)
            # TODO(synk): pack two heads per store on v5e (full-lane vst instead of
            # D-wide masked stores) once D >= 64.
            o_scratch[:, sl] = o

        proj = jnp.dot(o_scratch[...].astype(mxu_dtype), wp,
                       preferred_element_type=jnp.float32) + bp            # (L, C)

        # ---- fused scatter-back: selected rows get the projected output, all other
        #      rows pass x through (matches the module's zeros + scatter + where). ----
        scattered = jnp.dot(onehot, proj, preferred_element_type=jnp.float32)  # (N, C)
        mask = jnp.sum(onehot, axis=-1, keepdims=True)                          # (N, 1)
        out_ref[b] = jnp.where(mask > 0.5, scattered,
                               x_rows.astype(jnp.float32)).astype(out_ref.dtype)


def prepare_params(params, *, num_heads):
    """One-time parameter transform: fold 1/sqrt(head_dim) into the q projection."""
    C = params["wq"].shape[0]
    scale = float(C // num_heads) ** -0.5
    out = dict(params)
    out["wq"] = params["wq"] * scale
    out["bq"] = params["bq"] * scale
    return out


def glca_forward(x, attention_rollout, kparams, *, num_heads, local_ratio,
                 mxu_dtype=jnp.float32, batch_block=1,
                 vmem_limit_bytes=32 * 1024 * 1024):
    """Full GLCA forward.  Top-k selection stays in XLA; gather, cross-attention,
    output projection and scatter-back are fused in one Pallas kernel over a batch
    grid.  `batch_block` (bb) and `vmem_limit_bytes` are per-generation knobs:
    v7x keep bb small / limit <= ~48 MiB; v5e/v6e can raise the limit to 64-96 MiB."""
    B, N, C = x.shape
    assert C % num_heads == 0
    head_dim = C // num_heads
    num_local = max(1, int(local_ratio * (N - 1)))

    # --- glue: attention-rollout based top-R% query selection (data-dependent sort
    #     stays in XLA); only the (B, L) int32 index table feeds the kernel. ---
    cls_attention = attention_rollout[:, 0, 1:]                    # (B, N-1)
    _, top_idx = jax.lax.top_k(cls_attention, num_local)           # (B, L)
    top_idx = (top_idx + 1).astype(jnp.int32)                      # skip CLS token

    # Batch-block grid: bb small, grid length B//bb (>= 2 feeds both v7x cores).
    bb = max(d for d in range(1, max(1, min(batch_block, B)) + 1) if B % d == 0)
    grid = (B // bb,)

    approx_recip = np.dtype(mxu_dtype) == np.dtype(jnp.bfloat16)
    mx = lambda a: a.astype(mxu_dtype)     # MXU operands (weights); bf16 OK on v5e too
    f32 = lambda a: a.astype(jnp.float32)  # biases stay f32

    kernel = functools.partial(
        _glca_kernel, num_heads=num_heads, head_dim=head_dim, bb=bb,
        num_local=num_local, seq_len=N, mxu_dtype=mxu_dtype,
        approx_recip=approx_recip)

    def build(weight_mode):
        def const_spec(shape):
            zeros = (0,) * len(shape)
            if weight_mode is None:
                return pl.BlockSpec(shape, lambda g: zeros)
            return pl.BlockSpec(shape, lambda g: zeros, pipeline_mode=weight_mode)

        in_specs = [
            const_spec((B, num_local)),                        # top_idx (tiny, const)
            pl.BlockSpec((bb, N, C), lambda g: (g, 0, 0)),     # x block
            const_spec((C, C)),                                # Wq (scale folded)
            const_spec((1, C)),                                # bq (scale folded)
            const_spec((C, 2 * C)),                            # Wkv (fused K|V)
            const_spec((1, 2 * C)),                            # bkv
            const_spec((C, C)),                                # Wp
            const_spec((1, C)),                                # bp
        ]
        return pl.pallas_call(
            kernel,
            out_shape=jax.ShapeDtypeStruct((B, N, C), x.dtype),
            grid=grid,
            in_specs=in_specs,
            out_specs=pl.BlockSpec((bb, N, C), lambda g: (g, 0, 0)),
            scratch_shapes=[pltpu.VMEM((num_local, C), jnp.float32)],
            compiler_params=pltpu.CompilerParams(
                dimension_semantics=("parallel",),
                vmem_limit_bytes=vmem_limit_bytes),
        )

    args = (top_idx, x,
            mx(kparams["wq"]), f32(kparams["bq"]),
            mx(kparams["wkv"]), f32(kparams["bkv"]),
            mx(kparams["wp"]), f32(kparams["bp"]))

    try:
        # Constant-index weights/biases single-buffered (frees ~5 MB VMEM/step at
        # ViT scale; matters most on v7x's 64 MiB VMEM).
        return build(pl.Buffered(1))(*args)
    except Exception:
        # Fallback if this jax build rejects pipeline_mode on pallas_call BlockSpecs:
        # default double-buffering is still correct, just slightly more VMEM.
        return build(None)(*args)


def reference_forward(x, attention_rollout, params, *, num_heads, local_ratio):
    """Pure-JAX reference mirroring the PyTorch module (eval mode, dropout = id)."""
    hi = jax.lax.Precision.HIGHEST
    B, N, C = x.shape
    D = C // num_heads
    scale = D ** -0.5
    num_local = max(1, int(local_ratio * (N - 1)))

    cls_attention = attention_rollout[:, 0, 1:]
    _, top_idx = jax.lax.top_k(cls_attention, num_local)
    top_idx = top_idx + 1
    sel_q = jnp.take_along_axis(x, top_idx[:, :, None], axis=1)

    q = jnp.einsum("blc,cd->bld", sel_q, params["wq"], precision=hi) + params["bq"]
    kv = jnp.einsum("bnc,cd->bnd", x, params["wkv"], precision=hi) + params["bkv"]
    k, v = kv[..., :C], kv[..., C:]

    qh = q.reshape(B, num_local, num_heads, D).transpose(0, 2, 1, 3)
    kh = k.reshape(B, N, num_heads, D).transpose(0, 2, 1, 3)
    vh = v.reshape(B, N, num_heads, D).transpose(0, 2, 1, 3)
    attn = jax.nn.softmax(
        jnp.einsum("bhld,bhnd->bhln", qh, kh, precision=hi) * scale, axis=-1)
    o = jnp.einsum("bhln,bhnd->bhld", attn, vh, precision=hi).transpose(0, 2, 1, 3)
    o = jnp.einsum("blc,cd->bld", o.reshape(B, num_local, C),
                   params["wp"], precision=hi) + params["bp"]

    batch_idx = jnp.arange(B)[:, None]
    return x.at[batch_idx, top_idx].set(o)


if __name__ == "__main__":
    B, N, C, H = 2, 17, 32, 4          # batch, seq (CLS + 16 patches), embed, heads
    local_ratio = 0.5                  # -> num_local = 8

    key = jax.random.PRNGKey(0)
    keys = jax.random.split(key, 8)
    x = jax.random.normal(keys[0], (B, N, C), jnp.float32)
    attention_rollout = jax.nn.softmax(
        jax.random.normal(keys[1], (B, N, N), jnp.float32), axis=-1)

    # Deterministic nn.Linear-style init, x @ W convention; kv is a single fused
    # (C, 2C) linear exactly like the module's kv_global layer.
    bound = 1.0 / np.sqrt(C)
    def u(k, shape):
        return jax.random.uniform(k, shape, jnp.float32, -bound, bound)
    params = {
        "wq":  u(keys[2], (C, C)),      "bq":  u(keys[3], (1, C)),
        "wkv": u(keys[4], (C, 2 * C)),  "bkv": u(keys[5], (1, 2 * C)),
        "wp":  u(keys[6], (C, C)),      "bp":  u(keys[7], (1, C)),
    }
    kparams = prepare_params(params, num_heads=H)   # fold softmax scale into Wq/bq

    ref = reference_forward(x, attention_rollout, params,
                            num_heads=H, local_ratio=local_ratio)

    # f32 MXU-operand path.  Tolerance is sized to be robust to how the MXU emulates
    # f32 matmuls (multi-bf16-pass); any logic/indexing bug would be O(0.1-1).
    out_f32 = jax.block_until_ready(
        glca_forward(x, attention_rollout, kparams, num_heads=H,
                     local_ratio=local_ratio, mxu_dtype=jnp.float32))
    np.testing.assert_allclose(np.asarray(out_f32), np.asarray(ref),
                               rtol=1e-2, atol=1e-2)

    # bf16 MXU-operand fast path (valid on v5e/v6e/v7x; softmax/accum stay f32,
    # output stays in x.dtype).  Looser tolerance for bf16 operand rounding.
    out_bf16 = jax.block_until_ready(
        glca_forward(x, attention_rollout, kparams, num_heads=H,
                     local_ratio=local_ratio, mxu_dtype=jnp.bfloat16))
    np.testing.assert_allclose(np.asarray(out_bf16), np.asarray(ref),
                               rtol=5e-2, atol=5e-2)

    print("KERNEL_OK")
</pallas_src>

<mosaic_0001>
module attributes {stable_mosaic.version = 11 : i64} {
  func.func @_glca_kernel(%arg0: i32, %arg1: memref<2x8xi32, #tpu.memory_space<vmem>>, %arg2: memref<1x17x32xf32, #tpu.memory_space<vmem>>, %arg3: memref<32x32xf32, #tpu.memory_space<vmem>>, %arg4: memref<1x32xf32, #tpu.memory_space<vmem>>, %arg5: memref<32x64xf32, #tpu.memory_space<vmem>>, %arg6: memref<1x64xf32, #tpu.memory_space<vmem>>, %arg7: memref<32x32xf32, #tpu.memory_space<vmem>>, %arg8: memref<1x32xf32, #tpu.memory_space<vmem>>, %arg9: memref<1x17x32xf32, #tpu.memory_space<vmem>>, %arg10: memref<8x32xf32, #tpu.memory_space<vmem>>) attributes {dimension_semantics = [#tpu.dimension_semantics<parallel>], iteration_bounds = array<i64: 2>, scalar_prefetch = 0 : i64, scratch_operands = 1 : i64, tpu.core_type = #tpu.core_type<tc>, window_params = [{pipeline_mode = #tpu.pipeline_mode<synchronous>, transform_indices = @transform_0, window_bounds = array<i64: 2, 8>}, {transform_indices = @transform_1, window_bounds = array<i64: 1, 17, 32>}, {pipeline_mode = #tpu.pipeline_mode<synchronous>, transform_indices = @transform_2, window_bounds = array<i64: 32, 32>}, {pipeline_mode = #tpu.pipeline_mode<synchronous>, transform_indices = @transform_3, window_bounds = array<i64: 1, 32>}, {pipeline_mode = #tpu.pipeline_mode<synchronous>, transform_indices = @transform_4, window_bounds = array<i64: 32, 64>}, {pipeline_mode = #tpu.pipeline_mode<synchronous>, transform_indices = @transform_5, window_bounds = array<i64: 1, 64>}, {pipeline_mode = #tpu.pipeline_mode<synchronous>, transform_indices = @transform_6, window_bounds = array<i64: 32, 32>}, {pipeline_mode = #tpu.pipeline_mode<synchronous>, transform_indices = @transform_7, window_bounds = array<i64: 1, 32>}, {transform_indices = @transform_8, window_bounds = array<i64: 1, 17, 32>}]} {
    %c0 = arith.constant 0 : index
    %c0_0 = arith.constant 0 : index
    %0 = vector.load %arg3[%c0, %c0_0] : memref<32x32xf32, #tpu.memory_space<vmem>>, vector<32x32xf32>
    %c0_1 = arith.constant 0 : index
    %c0_2 = arith.constant 0 : index
    %1 = vector.load %arg5[%c0_1, %c0_2] : memref<32x64xf32, #tpu.memory_space<vmem>>, vector<32x64xf32>
    %c0_3 = arith.constant 0 : index
    %c0_4 = arith.constant 0 : index
    %2 = vector.load %arg7[%c0_3, %c0_4] : memref<32x32xf32, #tpu.memory_space<vmem>>, vector<32x32xf32>
    %c0_5 = arith.constant 0 : index
    %c0_6 = arith.constant 0 : index
    %3 = vector.load %arg4[%c0_5, %c0_6] : memref<1x32xf32, #tpu.memory_space<vmem>>, vector<1x32xf32>
    %c0_7 = arith.constant 0 : index
    %c0_8 = arith.constant 0 : index
    %4 = vector.load %arg6[%c0_7, %c0_8] : memref<1x64xf32, #tpu.memory_space<vmem>>, vector<1x64xf32>
    %c0_9 = arith.constant 0 : index
    %c0_10 = arith.constant 0 : index
    %5 = vector.load %arg8[%c0_9, %c0_10] : memref<1x32xf32, #tpu.memory_space<vmem>>, vector<1x32xf32>
    %c0_11 = arith.constant 0 : index
    %c0_12 = arith.constant 0 : index
    %c0_13 = arith.constant 0 : index
    %6 = vector.load %arg2[%c0_11, %c0_12, %c0_13] : memref<1x17x32xf32, #tpu.memory_space<vmem>>, vector<1x17x32xf32>
    %7 = vector.shape_cast %6 : vector<1x17x32xf32> to vector<17x32xf32>
    %c1_i32 = arith.constant 1 : i32
    %8 = arith.muli %arg0, %c1_i32 : i32
    %c0_i32 = arith.constant 0 : i32
    %9 = arith.addi %8, %c0_i32 : i32
    %10 = arith.index_cast %9 : i32 to index
    %c0_14 = arith.constant 0 : index
    %11 = vector.load %arg1[%10, %c0_14] : memref<2x8xi32, #tpu.memory_space<vmem>>, vector<1x8xi32>
    %12 = tpu.iota {dimensions = array<i32: 0>} : vector<17x8xi32>
    %13 = vector.broadcast %11 : vector<1x8xi32> to vector<17x8xi32>
    %14 = arith.cmpi eq, %12, %13 : vector<17x8xi32>
    %15 = arith.extui %14 : vector<17x8xi1> to vector<17x8xi32>
    %16 = arith.sitofp %15 : vector<17x8xi32> to vector<17x8xf32>
    %cst = arith.constant dense<0.000000e+00> : vector<8x32xf32>
    %17 = tpu.matmul %16, %7, %cst {dimension_numbers = #tpu.dot_dimension_numbers<[0], [0], [1], [1], [0, 1, 1, 1], [], []>} : vector<17x8xf32>, vector<17x32xf32>, vector<8x32xf32> -> vector<8x32xf32>
    %cst_15 = arith.constant dense<0.000000e+00> : vector<8x32xf32>
    %18 = tpu.matmul %17, %0, %cst_15 {dimension_numbers = #tpu.dot_dimension_numbers<[1], [0], [0], [1], [0, 0, 1, 1], [], []>} : vector<8x32xf32>, vector<32x32xf32>, vector<8x32xf32> -> vector<8x32xf32>
    %19 = vector.broadcast %3 : vector<1x32xf32> to vector<8x32xf32>
    %20 = arith.addf %18, %19 : vector<8x32xf32>
    %cst_16 = arith.constant dense<0.000000e+00> : vector<17x64xf32>
    %21 = tpu.matmul %7, %1, %cst_16 {dimension_numbers = #tpu.dot_dimension_numbers<[1], [0], [0], [1], [0, 0, 1, 1], [], []>} : vector<17x32xf32>, vector<32x64xf32>, vector<17x64xf32> -> vector<17x64xf32>
    %22 = vector.broadcast %4 : vector<1x64xf32> to vector<17x64xf32>
    %23 = arith.addf %21, %22 : vector<17x64xf32>
    %24 = vector.extract_strided_slice %23 {offsets = [0, 0], sizes = [17, 32], strides = [1, 1]} : vector<17x64xf32> to vector<17x32xf32>
    %25 = vector.extract_strided_slice %23 {offsets = [0, 32], sizes = [17, 32], strides = [1, 1]} : vector<17x64xf32> to vector<17x32xf32>
    %26 = vector.extract_strided_slice %20 {offsets = [0, 0], sizes = [8, 8], strides = [1, 1]} : vector<8x32xf32> to vector<8x8xf32>
    %27 = vector.extract_strided_slice %24 {offsets = [0, 0], sizes = [17, 8], strides = [1, 1]} : vector<17x32xf32> to vector<17x8xf32>
    %cst_17 = arith.constant dense<0.000000e+00> : vector<8x17xf32>
    %28 = tpu.matmul %26, %27, %cst_17 {dimension_numbers = #tpu.dot_dimension_numbers<[1], [1], [0], [0], [0, 0, 1, 0], [], []>} : vector<8x8xf32>, vector<17x8xf32>, vector<8x17xf32> -> vector<8x17xf32>
    %cst_18 = arith.constant dense<0xFF800000> : vector<8xf32>
    %29 = vector.multi_reduction <maximumf>, %28, %cst_18 [1] : vector<8x17xf32> to vector<8xf32>
    %30 = vector.shape_cast %29 : vector<8xf32> to vector<8x1xf32>
    %31 = vector.broadcast %30 : vector<8x1xf32> to vector<8x17xf32>
    %32 = arith.subf %28, %31 : vector<8x17xf32>
    %33 = math.exp %32 : vector<8x17xf32>
    %cst_19 = arith.constant dense<0.000000e+00> : vector<8xf32>
    %34 = vector.multi_reduction <add>, %33, %cst_19 [1] : vector<8x17xf32> to vector<8xf32>
    %35 = vector.shape_cast %34 : vector<8xf32> to vector<8x1xf32>
    %36 = vector.extract_strided_slice %25 {offsets = [0, 0], sizes = [17, 8], strides = [1, 1]} : vector<17x32xf32> to vector<17x8xf32>
    %cst_20 = arith.constant dense<0.000000e+00> : vector<8x8xf32>
    %37 = tpu.matmul %33, %36, %cst_20 {dimension_numbers = #tpu.dot_dimension_numbers<[1], [0], [0], [1], [0, 0, 1, 1], [], []>} : vector<8x17xf32>, vector<17x8xf32>, vector<8x8xf32> -> vector<8x8xf32>
    %38 = tpu.reciprocal %35 : vector<8x1xf32> -> vector<8x1xf32>
    %39 = vector.broadcast %38 : vector<8x1xf32> to vector<8x8xf32>
    %40 = arith.mulf %37, %39 : vector<8x8xf32>
    %c0_21 = arith.constant 0 : index
    %c0_22 = arith.constant 0 : index
    %41 = vector.load %arg10[%c0_21, %c0_22] : memref<8x32xf32, #tpu.memory_space<vmem>>, vector<8x8xf32>
    tpu.vector_store %arg10[%c0_21, %c0_22], %40 {strides = array<i32>} : memref<8x32xf32, #tpu.memory_space<vmem>>, vector<8x8xf32>,
    %42 = vector.extract_strided_slice %20 {offsets = [0, 8], sizes = [8, 8], strides = [1, 1]} : vector<8x32xf32> to vector<8x8xf32>
    %43 = vector.extract_strided_slice %24 {offsets = [0, 8], sizes = [17, 8], strides = [1, 1]} : vector<17x32xf32> to vector<17x8xf32>
    %cst_23 = arith.constant dense<0.000000e+00> : vector<8x17xf32>
    %44 = tpu.matmul %42, %43, %cst_23 {dimension_numbers = #tpu.dot_dimension_numbers<[1], [1], [0], [0], [0, 0, 1, 0], [], []>} : vector<8x8xf32>, vector<17x8xf32>, vector<8x17xf32> -> vector<8x17xf32>
    %cst_24 = arith.constant dense<0xFF800000> : vector<8xf32>
    %45 = vector.multi_reduction <maximumf>, %44, %cst_24 [1] : vector<8x17xf32> to vector<8xf32>
    %46 = vector.shape_cast %45 : vector<8xf32> to vector<8x1xf32>
    %47 = vector.broadcast %46 : vector<8x1xf32> to vector<8x17xf32>
    %48 = arith.subf %44, %47 : vector<8x17xf32>
    %49 = math.exp %48 : vector<8x17xf32>
    %cst_25 = arith.constant dense<0.000000e+00> : vector<8xf32>
    %50 = vector.multi_reduction <add>, %49, %cst_25 [1] : vector<8x17xf32> to vector<8xf32>
    %51 = vector.shape_cast %50 : vector<8xf32> to vector<8x1xf32>
    %52 = vector.extract_strided_slice %25 {offsets = [0, 8], sizes = [17, 8], strides = [1, 1]} : vector<17x32xf32> to vector<17x8xf32>
    %cst_26 = arith.constant dense<0.000000e+00> : vector<8x8xf32>
    %53 = tpu.matmul %49, %52, %cst_26 {dimension_numbers = #tpu.dot_dimension_numbers<[1], [0], [0], [1], [0, 0, 1, 1], [], []>} : vector<8x17xf32>, vector<17x8xf32>, vector<8x8xf32> -> vector<8x8xf32>
    %54 = tpu.reciprocal %51 : vector<8x1xf32> -> vector<8x1xf32>
    %55 = vector.broadcast %54 : vector<8x1xf32> to vector<8x8xf32>
    %56 = arith.mulf %53, %55 : vector<8x8xf32>
    %c0_27 = arith.constant 0 : index
    %c8 = arith.constant 8 : index
    %57 = vector.load %arg10[%c0_27, %c8] : memref<8x32xf32, #tpu.memory_space<vmem>>, vector<8x8xf32>
    tpu.vector_store %arg10[%c0_27, %c8], %56 {strides = array<i32>} : memref<8x32xf32, #tpu.memory_space<vmem>>, vector<8x8xf32>,
    %58 = vector.extract_strided_slice %20 {offsets = [0, 16], sizes = [8, 8], strides = [1, 1]} : vector<8x32xf32> to vector<8x8xf32>
    %59 = vector.extract_strided_slice %24 {offsets = [0, 16], sizes = [17, 8], strides = [1, 1]} : vector<17x32xf32> to vector<17x8xf32>
    %cst_28 = arith.constant dense<0.000000e+00> : vector<8x17xf32>
    %60 = tpu.matmul %58, %59, %cst_28 {dimension_numbers = #tpu.dot_dimension_numbers<[1], [1], [0], [0], [0, 0, 1, 0], [], []>} : vector<8x8xf32>, vector<17x8xf32>, vector<8x17xf32> -> vector<8x17xf32>
    %cst_29 = arith.constant dense<0xFF800000> : vector<8xf32>
    %61 = vector.multi_reduction <maximumf>, %60, %cst_29 [1] : vector<8x17xf32> to vector<8xf32>
    %62 = vector.shape_cast %61 : vector<8xf32> to vector<8x1xf32>
    %63 = vector.broadcast %62 : vector<8x1xf32> to vector<8x17xf32>
    %64 = arith.subf %60, %63 : vector<8x17xf32>
    %65 = math.exp %64 : vector<8x17xf32>
    %cst_30 = arith.constant dense<0.000000e+00> : vector<8xf32>
    %66 = vector.multi_reduction <add>, %65, %cst_30 [1] : vector<8x17xf32> to vector<8xf32>
    %67 = vector.shape_cast %66 : vector<8xf32> to vector<8x1xf32>
    %68 = vector.extract_strided_slice %25 {offsets = [0, 16], sizes = [17, 8], strides = [1, 1]} : vector<17x32xf32> to vector<17x8xf32>
    %cst_31 = arith.constant dense<0.000000e+00> : vector<8x8xf32>
    %69 = tpu.matmul %65, %68, %cst_31 {dimension_numbers = #tpu.dot_dimension_numbers<[1], [0], [0], [1], [0, 0, 1, 1], [], []>} : vector<8x17xf32>, vector<17x8xf32>, vector<8x8xf32> -> vector<8x8xf32>
    %70 = tpu.reciprocal %67 : vector<8x1xf32> -> vector<8x1xf32>
    %71 = vector.broadcast %70 : vector<8x1xf32> to vector<8x8xf32>
    %72 = arith.mulf %69, %71 : vector<8x8xf32>
    %c0_32 = arith.constant 0 : index
    %c16 = arith.constant 16 : index
    %73 = vector.load %arg10[%c0_32, %c16] : memref<8x32xf32, #tpu.memory_space<vmem>>, vector<8x8xf32>
    tpu.vector_store %arg10[%c0_32, %c16], %72 {strides = array<i32>} : memref<8x32xf32, #tpu.memory_space<vmem>>, vector<8x8xf32>,
    %74 = vector.extract_strided_slice %20 {offsets = [0, 24], sizes = [8, 8], strides = [1, 1]} : vector<8x32xf32> to vector<8x8xf32>
    %75 = vector.extract_strided_slice %24 {offsets = [0, 24], sizes = [17, 8], strides = [1, 1]} : vector<17x32xf32> to vector<17x8xf32>
    %cst_33 = arith.constant dense<0.000000e+00> : vector<8x17xf32>
    %76 = tpu.matmul %74, %75, %cst_33 {dimension_numbers = #tpu.dot_dimension_numbers<[1], [1], [0], [0], [0, 0, 1, 0], [], []>} : vector<8x8xf32>, vector<17x8xf32>, vector<8x17xf32> -> vector<8x17xf32>
    %cst_34 = arith.constant dense<0xFF800000> : vector<8xf32>
    %77 = vector.multi_reduction <maximumf>, %76, %cst_34 [1] : vector<8x17xf32> to vector<8xf32>
    %78 = vector.shape_cast %77 : vector<8xf32> to vector<8x1xf32>
    %79 = vector.broadcast %78 : vector<8x1xf32> to vector<8x17xf32>
    %80 = arith.subf %76, %79 : vector<8x17xf32>
    %81 = math.exp %80 : vector<8x17xf32>
    %cst_35 = arith.constant dense<0.000000e+00> : vector<8xf32>
    %82 = vector.multi_reduction <add>, %81, %cst_35 [1] : vector<8x17xf32> to vector<8xf32>
    %83 = vector.shape_cast %82 : vector<8xf32> to vector<8x1xf32>
    %84 = vector.extract_strided_slice %25 {offsets = [0, 24], sizes = [17, 8], strides = [1, 1]} : vector<17x32xf32> to vector<17x8xf32>
    %cst_36 = arith.constant dense<0.000000e+00> : vector<8x8xf32>
    %85 = tpu.matmul %81, %84, %cst_36 {dimension_numbers = #tpu.dot_dimension_numbers<[1], [0], [0], [1], [0, 0, 1, 1], [], []>} : vector<8x17xf32>, vector<17x8xf32>, vector<8x8xf32> -> vector<8x8xf32>
    %86 = tpu.reciprocal %83 : vector<8x1xf32> -> vector<8x1xf32>
    %87 = vector.broadcast %86 : vector<8x1xf32> to vector<8x8xf32>
    %88 = arith.mulf %85, %87 : vector<8x8xf32>
    %c0_37 = arith.constant 0 : index
    %c24 = arith.constant 24 : index
    %89 = vector.load %arg10[%c0_37, %c24] : memref<8x32xf32, #tpu.memory_space<vmem>>, vector<8x8xf32>
    tpu.vector_store %arg10[%c0_37, %c24], %88 {strides = array<i32>} : memref<8x32xf32, #tpu.memory_space<vmem>>, vector<8x8xf32>,
    %c0_38 = arith.constant 0 : index
    %c0_39 = arith.constant 0 : index
    %90 = vector.load %arg10[%c0_38, %c0_39] : memref<8x32xf32, #tpu.memory_space<vmem>>, vector<8x32xf32>
    %cst_40 = arith.constant dense<0.000000e+00> : vector<8x32xf32>
    %91 = tpu.matmul %90, %2, %cst_40 {dimension_numbers = #tpu.dot_dimension_numbers<[1], [0], [0], [1], [0, 0, 1, 1], [], []>} : vector<8x32xf32>, vector<32x32xf32>, vector<8x32xf32> -> vector<8x32xf32>
    %92 = vector.broadcast %5 : vector<1x32xf32> to vector<8x32xf32>
    %93 = arith.addf %91, %92 : vector<8x32xf32>
    %cst_41 = arith.constant dense<0.000000e+00> : vector<17x32xf32>
    %94 = tpu.matmul %16, %93, %cst_41 {dimension_numbers = #tpu.dot_dimension_numbers<[1], [0], [0], [1], [0, 0, 1, 1], [], []>} : vector<17x8xf32>, vector<8x32xf32>, vector<17x32xf32> -> vector<17x32xf32>
    %cst_42 = arith.constant dense<0.000000e+00> : vector<17xf32>
    %95 = vector.multi_reduction <add>, %16, %cst_42 [1] : vector<17x8xf32> to vector<17xf32>
    %96 = vector.shape_cast %95 : vector<17xf32> to vector<17x1xf32>
    %cst_43 = arith.constant 5.000000e-01 : f32
    %97 = vector.broadcast %cst_43 : f32 to vector<17x1xf32>
    %98 = arith.cmpf ogt, %96, %97 : vector<17x1xf32>
    %99 = vector.shape_cast %98 : vector<17x1xi1> to vector<17x1xi1>
    %100 = vector.broadcast %99 : vector<17x1xi1> to vector<17x32xi1>
    %101 = arith.select %100, %94, %7 : vector<17x32xi1>, vector<17x32xf32>
    %c0_44 = arith.constant 0 : index
    %c0_45 = arith.constant 0 : index
    %c0_46 = arith.constant 0 : index
    %102 = vector.load %arg9[%c0_44, %c0_45, %c0_46] : memref<1x17x32xf32, #tpu.memory_space<vmem>>, vector<1x17x32xf32>
    %103 = vector.shape_cast %102 : vector<1x17x32xf32> to vector<17x32xf32>
    %104 = vector.shape_cast %101 : vector<17x32xf32> to vector<1x17x32xf32>
    tpu.vector_store %arg9[%c0_44, %c0_45, %c0_46], %104 {strides = array<i32>} : memref<1x17x32xf32, #tpu.memory_space<vmem>>, vector<1x17x32xf32>,
    return
  }
  func.func @transform_0(%arg0: i32) -> (i32, i32) {
    %c0_i32 = arith.constant 0 : i32
    %c0_i32_0 = arith.constant 0 : i32
    %c0_i32_1 = arith.constant 0 : i32
    return %c0_i32, %c0_i32_0 : i32, i32
  }
  func.func @transform_1(%arg0: i32) -> (i32, i32, i32) {
    %c0_i32 = arith.constant 0 : i32
    %c0_i32_0 = arith.constant 0 : i32
    %c0_i32_1 = arith.constant 0 : i32
    return %arg0, %c0_i32, %c0_i32_0 : i32, i32, i32
  }
  func.func @transform_2(%arg0: i32) -> (i32, i32) {
    %c0_i32 = arith.constant 0 : i32
    %c0_i32_0 = arith.constant 0 : i32
    %c0_i32_1 = arith.constant 0 : i32
    return %c0_i32, %c0_i32_0 : i32, i32
  }
  func.func @transform_3(%arg0: i32) -> (i32, i32) {
    %c0_i32 = arith.constant 0 : i32
    %c0_i32_0 = arith.constant 0 : i32
    %c0_i32_1 = arith.constant 0 : i32
    return %c0_i32, %c0_i32_0 : i32, i32
  }
  func.func @transform_4(%arg0: i32) -> (i32, i32) {
    %c0_i32 = arith.constant 0 : i32
    %c0_i32_0 = arith.constant 0 : i32
    %c0_i32_1 = arith.constant 0 : i32
    return %c0_i32, %c0_i32_0 : i32, i32
  }
  func.func @transform_5(%arg0: i32) -> (i32, i32) {
    %c0_i32 = arith.constant 0 : i32
    %c0_i32_0 = arith.constant 0 : i32
    %c0_i32_1 = arith.constant 0 : i32
    return %c0_i32, %c0_i32_0 : i32, i32
  }
  func.func @transform_6(%arg0: i32) -> (i32, i32) {
    %c0_i32 = arith.constant 0 : i32
    %c0_i32_0 = arith.constant 0 : i32
    %c0_i32_1 = arith.constant 0 : i32
    return %c0_i32, %c0_i32_0 : i32, i32
  }
  func.func @transform_7(%arg0: i32) -> (i32, i32) {
    %c0_i32 = arith.constant 0 : i32
    %c0_i32_0 = arith.constant 0 : i32
    %c0_i32_1 = arith.constant 0 : i32
    return %c0_i32, %c0_i32_0 : i32, i32
  }
  func.func @transform_8(%arg0: i32) -> (i32, i32, i32) {
    %c0_i32 = arith.constant 0 : i32
    %c0_i32_0 = arith.constant 0 : i32
    %c0_i32_1 = arith.constant 0 : i32
    return %arg0, %c0_i32, %c0_i32_0 : i32, i32, i32
  }
}

module attributes {stable_mosaic.version = 11 : i64} {
  func.func @_glca_kernel(%arg0: i32, %arg1: memref<2x8xi32, #tpu.memory_space<vmem>>, %arg2: memref<1x17x32xf32, #tpu.memory_space<vmem>>, %arg3: memref<32x32xf32, #tpu.memory_space<vmem>>, %arg4: memref<1x32xf32, #tpu.memory_space<vmem>>, %arg5: memref<32x64xf32, #tpu.memory_space<vmem>>, %arg6: memref<1x64xf32, #tpu.memory_space<vmem>>, %arg7: memref<32x32xf32, #tpu.memory_space<vmem>>, %arg8: memref<1x32xf32, #tpu.memory_space<vmem>>, %arg9: memref<1x17x32xf32, #tpu.memory_space<vmem>>, %arg10: memref<8x32xf32, #tpu.memory_space<vmem>>) attributes {dimension_semantics = [#tpu.dimension_semantics<parallel>], iteration_bounds = array<i64: 2>, scalar_prefetch = 0 : i64, scratch_operands = 1 : i64, tpu.core_type = #tpu.core_type<tc>, window_params = [{pipeline_mode = #tpu.pipeline_mode<synchronous>, transform_indices = @transform_0, window_bounds = array<i64: 2, 8>}, {transform_indices = @transform_1, window_bounds = array<i64: 1, 17, 32>}, {pipeline_mode = #tpu.pipeline_mode<synchronous>, transform_indices = @transform_2, window_bounds = array<i64: 32, 32>}, {pipeline_mode = #tpu.pipeline_mode<synchronous>, transform_indices = @transform_3, window_bounds = array<i64: 1, 32>}, {pipeline_mode = #tpu.pipeline_mode<synchronous>, transform_indices = @transform_4, window_bounds = array<i64: 32, 64>}, {pipeline_mode = #tpu.pipeline_mode<synchronous>, transform_indices = @transform_5, window_bounds = array<i64: 1, 64>}, {pipeline_mode = #tpu.pipeline_mode<synchronous>, transform_indices = @transform_6, window_bounds = array<i64: 32, 32>}, {pipeline_mode = #tpu.pipeline_mode<synchronous>, transform_indices = @transform_7, window_bounds = array<i64: 1, 32>}, {transform_indices = @transform_8, window_bounds = array<i64: 1, 17, 32>}]} {
    %c0 = arith.constant 0 : index
    %c0_0 = arith.constant 0 : index
    %0 = vector.load %arg3[%c0, %c0_0] : memref<32x32xf32, #tpu.memory_space<vmem>>, vector<32x32xf32>
    %c0_1 = arith.constant 0 : index
    %c0_2 = arith.constant 0 : index
    %1 = vector.load %arg5[%c0_1, %c0_2] : memref<32x64xf32, #tpu.memory_space<vmem>>, vector<32x64xf32>
    %c0_3 = arith.constant 0 : index
    %c0_4 = arith.constant 0 : index
    %2 = vector.load %arg7[%c0_3, %c0_4] : memref<32x32xf32, #tpu.memory_space<vmem>>, vector<32x32xf32>
    %c0_5 = arith.constant 0 : index
    %c0_6 = arith.constant 0 : index
    %3 = vector.load %arg4[%c0_5, %c0_6] : memref<1x32xf32, #tpu.memory_space<vmem>>, vector<1x32xf32>
    %c0_7 = arith.constant 0 : index
    %c0_8 = arith.constant 0 : index
    %4 = vector.load %arg6[%c0_7, %c0_8] : memref<1x64xf32, #tpu.memory_space<vmem>>, vector<1x64xf32>
    %c0_9 = arith.constant 0 : index
    %c0_10 = arith.constant 0 : index
    %5 = vector.load %arg8[%c0_9, %c0_10] : memref<1x32xf32, #tpu.memory_space<vmem>>, vector<1x32xf32>
    %c0_11 = arith.constant 0 : index
    %c0_12 = arith.constant 0 : index
    %c0_13 = arith.constant 0 : index
    %6 = vector.load %arg2[%c0_11, %c0_12, %c0_13] : memref<1x17x32xf32, #tpu.memory_space<vmem>>, vector<1x17x32xf32>
    %7 = vector.shape_cast %6 : vector<1x17x32xf32> to vector<17x32xf32>
    %c1_i32 = arith.constant 1 : i32
    %8 = arith.muli %arg0, %c1_i32 : i32
    %c0_i32 = arith.constant 0 : i32
    %9 = arith.addi %8, %c0_i32 : i32
    %10 = arith.index_cast %9 : i32 to index
    %c0_14 = arith.constant 0 : index
    %11 = vector.load %arg1[%10, %c0_14] : memref<2x8xi32, #tpu.memory_space<vmem>>, vector<1x8xi32>
    %12 = tpu.iota {dimensions = array<i32: 0>} : vector<17x8xi32>
    %13 = vector.broadcast %11 : vector<1x8xi32> to vector<17x8xi32>
    %14 = arith.cmpi eq, %12, %13 : vector<17x8xi32>
    %15 = arith.extui %14 : vector<17x8xi1> to vector<17x8xi32>
    %16 = arith.sitofp %15 : vector<17x8xi32> to vector<17x8xf32>
    %cst = arith.constant dense<0.000000e+00> : vector<8x32xf32>
    %17 = tpu.matmul %16, %7, %cst {dimension_numbers = #tpu.dot_dimension_numbers<[0], [0], [1], [1], [0, 1, 1, 1], [], []>} : vector<17x8xf32>, vector<17x32xf32>, vector<8x32xf32> -> vector<8x32xf32>
    %cst_15 = arith.constant dense<0.000000e+00> : vector<8x32xf32>
    %18 = tpu.matmul %17, %0, %cst_15 {dimension_numbers = #tpu.dot_dimension_numbers<[1], [0], [0], [1], [0, 0, 1, 1], [], []>} : vector<8x32xf32>, vector<32x32xf32>, vector<8x32xf32> -> vector<8x32xf32>
    %19 = vector.broadcast %3 : vector<1x32xf32> to vector<8x32xf32>
    %20 = arith.addf %18, %19 : vector<8x32xf32>
    %cst_16 = arith.constant dense<0.000000e+00> : vector<17x64xf32>
    %21 = tpu.matmul %7, %1, %cst_16 {dimension_numbers = #tpu.dot_dimension_numbers<[1], [0], [0], [1], [0, 0, 1, 1], [], []>} : vector<17x32xf32>, vector<32x64xf32>, vector<17x64xf32> -> vector<17x64xf32>
    %22 = vector.broadcast %4 : vector<1x64xf32> to vector<17x64xf32>
    %23 = arith.addf %21, %22 : vector<17x64xf32>
    %24 = vector.extract_strided_slice %23 {offsets = [0, 0], sizes = [17, 32], strides = [1, 1]} : vector<17x64xf32> to vector<17x32xf32>
    %25 = vector.extract_strided_slice %23 {offsets = [0, 32], sizes = [17, 32], strides = [1, 1]} : vector<17x64xf32> to vector<17x32xf32>
    %26 = vector.extract_strided_slice %20 {offsets = [0, 0], sizes = [8, 8], strides = [1, 1]} : vector<8x32xf32> to vector<8x8xf32>
    %27 = vector.extract_strided_slice %24 {offsets = [0, 0], sizes = [17, 8], strides = [1, 1]} : vector<17x32xf32> to vector<17x8xf32>
    %cst_17 = arith.constant dense<0.000000e+00> : vector<8x17xf32>
    %28 = tpu.matmul %26, %27, %cst_17 {dimension_numbers = #tpu.dot_dimension_numbers<[1], [1], [0], [0], [0, 0, 1, 0], [], []>} : vector<8x8xf32>, vector<17x8xf32>, vector<8x17xf32> -> vector<8x17xf32>
    %cst_18 = arith.constant dense<0xFF800000> : vector<8xf32>
    %29 = vector.multi_reduction <maximumf>, %28, %cst_18 [1] : vector<8x17xf32> to vector<8xf32>
    %30 = vector.shape_cast %29 : vector<8xf32> to vector<8x1xf32>
    %31 = vector.broadcast %30 : vector<8x1xf32> to vector<8x17xf32>
    %32 = arith.subf %28, %31 : vector<8x17xf32>
    %33 = math.exp %32 : vector<8x17xf32>
    %cst_19 = arith.constant dense<0.000000e+00> : vector<8xf32>
    %34 = vector.multi_reduction <add>, %33, %cst_19 [1] : vector<8x17xf32> to vector<8xf32>
    %35 = vector.shape_cast %34 : vector<8xf32> to vector<8x1xf32>
    %36 = vector.extract_strided_slice %25 {offsets = [0, 0], sizes = [17, 8], strides = [1, 1]} : vector<17x32xf32> to vector<17x8xf32>
    %cst_20 = arith.constant dense<0.000000e+00> : vector<8x8xf32>
    %37 = tpu.matmul %33, %36, %cst_20 {dimension_numbers = #tpu.dot_dimension_numbers<[1], [0], [0], [1], [0, 0, 1, 1], [], []>} : vector<8x17xf32>, vector<17x8xf32>, vector<8x8xf32> -> vector<8x8xf32>
    %38 = tpu.reciprocal %35 : vector<8x1xf32> -> vector<8x1xf32>
    %39 = vector.broadcast %38 : vector<8x1xf32> to vector<8x8xf32>
    %40 = arith.mulf %37, %39 : vector<8x8xf32>
    %c0_21 = arith.constant 0 : index
    %c0_22 = arith.constant 0 : index
    %41 = vector.load %arg10[%c0_21, %c0_22] : memref<8x32xf32, #tpu.memory_space<vmem>>, vector<8x8xf32>
    tpu.vector_store %arg10[%c0_21, %c0_22], %40 {strides = array<i32>} : memref<8x32xf32, #tpu.memory_space<vmem>>, vector<8x8xf32>,
    %42 = vector.extract_strided_slice %20 {offsets = [0, 8], sizes = [8, 8], strides = [1, 1]} : vector<8x32xf32> to vector<8x8xf32>
    %43 = vector.extract_strided_slice %24 {offsets = [0, 8], sizes = [17, 8], strides = [1, 1]} : vector<17x32xf32> to vector<17x8xf32>
    %cst_23 = arith.constant dense<0.000000e+00> : vector<8x17xf32>
    %44 = tpu.matmul %42, %43, %cst_23 {dimension_numbers = #tpu.dot_dimension_numbers<[1], [1], [0], [0], [0, 0, 1, 0], [], []>} : vector<8x8xf32>, vector<17x8xf32>, vector<8x17xf32> -> vector<8x17xf32>
    %cst_24 = arith.constant dense<0xFF800000> : vector<8xf32>
    %45 = vector.multi_reduction <maximumf>, %44, %cst_24 [1] : vector<8x17xf32> to vector<8xf32>
    %46 = vector.shape_cast %45 : vector<8xf32> to vector<8x1xf32>
    %47 = vector.broadcast %46 : vector<8x1xf32> to vector<8x17xf32>
    %48 = arith.subf %44, %47 : vector<8x17xf32>
    %49 = math.exp %48 : vector<8x17xf32>
    %cst_25 = arith.constant dense<0.000000e+00> : vector<8xf32>
    %50 = vector.multi_reduction <add>, %49, %cst_25 [1] : vector<8x17xf32> to vector<8xf32>
    %51 = vector.shape_cast %50 : vector<8xf32> to vector<8x1xf32>
    %52 = vector.extract_strided_slice %25 {offsets = [0, 8], sizes = [17, 8], strides = [1, 1]} : vector<17x32xf32> to vector<17x8xf32>
    %cst_26 = arith.constant dense<0.000000e+00> : vector<8x8xf32>
    %53 = tpu.matmul %49, %52, %cst_26 {dimension_numbers = #tpu.dot_dimension_numbers<[1], [0], [0], [1], [0, 0, 1, 1], [], []>} : vector<8x17xf32>, vector<17x8xf32>, vector<8x8xf32> -> vector<8x8xf32>
    %54 = tpu.reciprocal %51 : vector<8x1xf32> -> vector<8x1xf32>
    %55 = vector.broadcast %54 : vector<8x1xf32> to vector<8x8xf32>
    %56 = arith.mulf %53, %55 : vector<8x8xf32>
    %c0_27 = arith.constant 0 : index
    %c8 = arith.constant 8 : index
    %57 = vector.load %arg10[%c0_27, %c8] : memref<8x32xf32, #tpu.memory_space<vmem>>, vector<8x8xf32>
    tpu.vector_store %arg10[%c0_27, %c8], %56 {strides = array<i32>} : memref<8x32xf32, #tpu.memory_space<vmem>>, vector<8x8xf32>,
    %58 = vector.extract_strided_slice %20 {offsets = [0, 16], sizes = [8, 8], strides = [1, 1]} : vector<8x32xf32> to vector<8x8xf32>
    %59 = vector.extract_strided_slice %24 {offsets = [0, 16], sizes = [17, 8], strides = [1, 1]} : vector<17x32xf32> to vector<17x8xf32>
    %cst_28 = arith.constant dense<0.000000e+00> : vector<8x17xf32>
    %60 = tpu.matmul %58, %59, %cst_28 {dimension_numbers = #tpu.dot_dimension_numbers<[1], [1], [0], [0], [0, 0, 1, 0], [], []>} : vector<8x8xf32>, vector<17x8xf32>, vector<8x17xf32> -> vector<8x17xf32>
    %cst_29 = arith.constant dense<0xFF800000> : vector<8xf32>
    %61 = vector.multi_reduction <maximumf>, %60, %cst_29 [1] : vector<8x17xf32> to vector<8xf32>
    %62 = vector.shape_cast %61 : vector<8xf32> to vector<8x1xf32>
    %63 = vector.broadcast %62 : vector<8x1xf32> to vector<8x17xf32>
    %64 = arith.subf %60, %63 : vector<8x17xf32>
    %65 = math.exp %64 : vector<8x17xf32>
    %cst_30 = arith.constant dense<0.000000e+00> : vector<8xf32>
    %66 = vector.multi_reduction <add>, %65, %cst_30 [1] : vector<8x17xf32> to vector<8xf32>
    %67 = vector.shape_cast %66 : vector<8xf32> to vector<8x1xf32>
    %68 = vector.extract_strided_slice %25 {offsets = [0, 16], sizes = [17, 8], strides = [1, 1]} : vector<17x32xf32> to vector<17x8xf32>
    %cst_31 = arith.constant dense<0.000000e+00> : vector<8x8xf32>
    %69 = tpu.matmul %65, %68, %cst_31 {dimension_numbers = #tpu.dot_dimension_numbers<[1], [0], [0], [1], [0, 0, 1, 1], [], []>} : vector<8x17xf32>, vector<17x8xf32>, vector<8x8xf32> -> vector<8x8xf32>
    %70 = tpu.reciprocal %67 : vector<8x1xf32> -> vector<8x1xf32>
    %71 = vector.broadcast %70 : vector<8x1xf32> to vector<8x8xf32>
    %72 = arith.mulf %69, %71 : vector<8x8xf32>
    %c0_32 = arith.constant 0 : index
    %c16 = arith.constant 16 : index
    %73 = vector.load %arg10[%c0_32, %c16] : memref<8x32xf32, #tpu.memory_space<vmem>>, vector<8x8xf32>
    tpu.vector_store %arg10[%c0_32, %c16], %72 {strides = array<i32>} : memref<8x32xf32, #tpu.memory_space<vmem>>, vector<8x8xf32>,
    %74 = vector.extract_strided_slice %20 {offsets = [0, 24], sizes = [8, 8], strides = [1, 1]} : vector<8x32xf32> to vector<8x8xf32>
    %75 = vector.extract_strided_slice %24 {offsets = [0, 24], sizes = [17, 8], strides = [1, 1]} : vector<17x32xf32> to vector<17x8xf32>
    %cst_33 = arith.constant dense<0.000000e+00> : vector<8x17xf32>
    %76 = tpu.matmul %74, %75, %cst_33 {dimension_numbers = #tpu.dot_dimension_numbers<[1], [1], [0], [0], [0, 0, 1, 0], [], []>} : vector<8x8xf32>, vector<17x8xf32>, vector<8x17xf32> -> vector<8x17xf32>
    %cst_34 = arith.constant dense<0xFF800000> : vector<8xf32>
    %77 = vector.multi_reduction <maximumf>, %76, %cst_34 [1] : vector<8x17xf32> to vector<8xf32>
    %78 = vector.shape_cast %77 : vector<8xf32> to vector<8x1xf32>
    %79 = vector.broadcast %78 : vector<8x1xf32> to vector<8x17xf32>
    %80 = arith.subf %76, %79 : vector<8x17xf32>
    %81 = math.exp %80 : vector<8x17xf32>
    %cst_35 = arith.constant dense<0.000000e+00> : vector<8xf32>
    %82 = vector.multi_reduction <add>, %81, %cst_35 [1] : vector<8x17xf32> to vector<8xf32>
    %83 = vector.shape_cast %82 : vector<8xf32> to vector<8x1xf32>
    %84 = vector.extract_strided_slice %25 {offsets = [0, 24], sizes = [17, 8], strides = [1, 1]} : vector<17x32xf32> to vector<17x8xf32>
    %cst_36 = arith.constant dense<0.000000e+00> : vector<8x8xf32>
    %85 = tpu.matmul %81, %84, %cst_36 {dimension_numbers = #tpu.dot_dimension_numbers<[1], [0], [0], [1], [0, 0, 1, 1], [], []>} : vector<8x17xf32>, vector<17x8xf32>, vector<8x8xf32> -> vector<8x8xf32>
    %86 = tpu.reciprocal %83 : vector<8x1xf32> -> vector<8x1xf32>
    %87 = vector.broadcast %86 : vector<8x1xf32> to vector<8x8xf32>
    %88 = arith.mulf %85, %87 : vector<8x8xf32>
    %c0_37 = arith.constant 0 : index
    %c24 = arith.constant 24 : index
    %89 = vector.load %arg10[%c0_37, %c24] : memref<8x32xf32, #tpu.memory_space<vmem>>, vector<8x8xf32>
    tpu.vector_store %arg10[%c0_37, %c24], %88 {strides = array<i32>} : memref<8x32xf32, #tpu.memory_space<vmem>>, vector<8x8xf32>,
    %c0_38 = arith.constant 0 : index
    %c0_39 = arith.constant 0 : index
    %90 = vector.load %arg10[%c0_38, %c0_39] : memref<8x32xf32, #tpu.memory_space<vmem>>, vector<8x32xf32>
    %cst_40 = arith.constant dense<0.000000e+00> : vector<8x32xf32>
    %91 = tpu.matmul %90, %2, %cst_40 {dimension_numbers = #tpu.dot_dimension_numbers<[1], [0], [0], [1], [0, 0, 1, 1], [], []>} : vector<8x32xf32>, vector<32x32xf32>, vector<8x32xf32> -> vector<8x32xf32>
    %92 = vector.broadcast %5 : vector<1x32xf32> to vector<8x32xf32>
    %93 = arith.addf %91, %92 : vector<8x32xf32>
    %cst_41 = arith.constant dense<0.000000e+00> : vector<17x32xf32>
    %94 = tpu.matmul %16, %93, %cst_41 {dimension_numbers = #tpu.dot_dimension_numbers<[1], [0], [0], [1], [0, 0, 1, 1], [], []>} : vector<17x8xf32>, vector<8x32xf32>, vector<17x32xf32> -> vector<17x32xf32>
    %cst_42 = arith.constant dense<0.000000e+00> : vector<17xf32>
    %95 = vector.multi_reduction <add>, %16, %cst_42 [1] : vector<17x8xf32> to vector<17xf32>
    %96 = vector.shape_cast %95 : vector<17xf32> to vector<17x1xf32>
    %cst_43 = arith.constant 5.000000e-01 : f32
    %97 = vector.broadcast %cst_43 : f32 to vector<17x1xf32>
    %98 = arith.cmpf ogt, %96, %97 : vector<17x1xf32>
    %99 = vector.shape_cast %98 : vector<17x1xi1> to vector<17x1xi1>
    %100 = vector.broadcast %99 : vector<17x1xi1> to vector<17x32xi1>
    %101 = arith.select %100, %94, %7 : vector<17x32xi1>, vector<17x32xf32>
    %c0_44 = arith.constant 0 : index
    %c0_45 = arith.constant 0 : index
    %c0_46 = arith.constant 0 : index
    %102 = vector.load %arg9[%c0_44, %c0_45, %c0_46] : memref<1x17x32xf32, #tpu.memory_space<vmem>>, vector<1x17x32xf32>
    %103 = vector.shape_cast %102 : vector<1x17x32xf32> to vector<17x32xf32>
    %104 = vector.shape_cast %101 : vector<17x32xf32> to vector<1x17x32xf32>
    tpu.vector_store %arg9[%c0_44, %c0_45, %c0_46], %104 {strides = array<i32>} : memref<1x17x32xf32, #tpu.memory_space<vmem>>, vector<1x17x32xf32>,
    return
  }
  func.func @transform_0(%arg0: i32) -> (i32, i32) {
    %c0_i32 = arith.constant 0 : i32
    %c0_i32_0 = arith.constant 0 : i32
    %c0_i32_1 = arith.constant 0 : i32
    return %c0_i32, %c0_i32_0 : i32, i32
  }
  func.func @transform_1(%arg0: i32) -> (i32, i32, i32) {
    %c0_i32 = arith.constant 0 : i32
    %c0_i32_0 = arith.constant 0 : i32
    %c0_i32_1 = arith.constant 0 : i32
    return %arg0, %c0_i32, %c0_i32_0 : i32, i32, i32
  }
  func.func @transform_2(%arg0: i32) -> (i32, i32) {
    %c0_i32 = arith.constant 0 : i32
    %c0_i32_0 = arith.constant 0 : i32
    %c0_i32_1 = arith.constant 0 : i32
    return %c0_i32, %c0_i32_0 : i32, i32
  }
  func.func @transform_3(%arg0: i32) -> (i32, i32) {
    %c0_i32 = arith.constant 0 : i32
    %c0_i32_0 = arith.constant 0 : i32
    %c0_i32_1 = arith.constant 0 : i32
    return %c0_i32, %c0_i32_0 : i32, i32
  }
  func.func @transform_4(%arg0: i32) -> (i32, i32) {
    %c0_i32 = arith.constant 0 : i32
    %c0_i32_0 = arith.constant 0 : i32
    %c0_i32_1 = arith.constant 0 : i32
    return %c0_i32, %c0_i32_0 : i32, i32
  }
  func.func @transform_5(%arg0: i32) -> (i32, i32) {
    %c0_i32 = arith.constant 0 : i32
    %c0_i32_0 = arith.constant 0 : i32
    %c0_i32_1 = arith.constant 0 : i32
    return %c0_i32, %c0_i32_0 : i32, i32
  }
  func.func @transform_6(%arg0: i32) -> (i32, i32) {
    %c0_i32 = arith.constant 0 : i32
    %c0_i32_0 = arith.constant 0 : i32
    %c0_i32_1 = arith.constant 0 : i32
    return %c0_i32, %c0_i32_0 : i32, i32
  }
  func.func @transform_7(%arg0: i32) -> (i32, i32) {
    %c0_i32 = arith.constant 0 : i32
    %c0_i32_0 = arith.constant 0 : i32
    %c0_i32_1 = arith.constant 0 : i32
    return %c0_i32, %c0_i32_0 : i32, i32
  }
  func.func @transform_8(%arg0: i32) -> (i32, i32, i32) {
    %c0_i32 = arith.constant 0 : i32
    %c0_i32_0 = arith.constant 0 : i32
    %c0_i32_1 = arith.constant 0 : i32
    return %arg0, %c0_i32, %c0_i32_0 : i32, i32, i32
  }
}

</mosaic_0001>

<llo_original>
// kernel: tpu_custom_call.1
$region0: #{tpu_custom_call.1}
  #allocation0 [shape = 'u32[]', space=smem, size = 0x4, offset = 0x4, fixed_abs, tag = 'smem constant byte address 0x4 - core index']
  #allocation1 [shape = 'u32[144,128]{1,0:T(1,128)}', space=vmem, size = 0x12000, scoped, tag = 'internal scratch']
  #allocation2 [shape = 'f32[8,32]{1,0:T(8,128)}', space=vmem, size = 0x1000, scoped, tag = 'scratch operand']
  %s0 = inlined_call_operand.vmem [shape: s32[2,8], index: 0, kind: input, shape index: {}]
  %s1 = inlined_call_operand.vmem [shape: f32[2,17,32], index: 1, kind: input, shape index: {}]
  %s2 = inlined_call_operand.vmem [shape: f32[32,32], index: 2, kind: input, shape index: {}]
  %s3 = inlined_call_operand.vmem [shape: f32[1,32], index: 3, kind: input, shape index: {}]
  %s4 = inlined_call_operand.vmem [shape: f32[32,64], index: 4, kind: input, shape index: {}]
  %s5 = inlined_call_operand.vmem [shape: f32[1,64], index: 5, kind: input, shape index: {}]
  %s6 = inlined_call_operand.hbm [shape: f32[32,32], index: 6, kind: input, shape index: {}]
  %s7 = inlined_call_operand.vmem [shape: f32[1,32], index: 7, kind: input, shape index: {}]
  %s8 = inlined_call_operand.vmem [shape: f32[2,17,32], index: 8, kind: output, shape index: {}]
  %s9 = sld [smem:[#allocation0]]
  $region69: #{tpu_custom_call.1} parent=0
    _
  %s11 = ssub.s32 1, %s9
  %s12 = scalar_select 0, %s11, %s9
  $region1: #{tpu_custom_call.1} parent=0
    #allocation3 [shape = 'u8[16384]{0}', space=vmem, size = 0x4000, scoped, tag = 'input window, operand 6, single buffered']
    #allocation4 [shape = 's32[2]{0}', space=sflag, size = 0x8, scoped, tag = 'scoped memory for tpu_custom_call.1']
    %13 = vsyncpa [#allocation4], 0
    loop: start=0, step=1, limit=4
    $region2: #{tpu_custom_call.1} parent=1 // loop_pre_header
      _
    $region3: #{tpu_custom_call.1} parent=1 // loop_header
      %s15 = sphi 0, %s19
      %p16 = scmp.ge.s32.totalorder %s15, 4
      %s23 = sphi 0, %s23
      %s25 = sphi 0, %s23
      %s26 = sphi 0, %s25
      %s40 = sphi 0, %s26
      %s46 = sphi 0, %s48
      %s49 = sphi 0, %s46
      %s50 = sphi 0, %s49
      %s66 = sphi 0, %s50
      %s70 = sphi 0, %s70
      %s72 = sphi 0, %s70
      %s73 = sphi 0, %s72
      %s87 = sphi 0, %s73
      %s91 = sphi 0, %s91
      %s93 = sphi 0, %s91
      %s94 = sphi 0, %s93
      %s108 = sphi 0, %s94
      %s112 = sphi 0, %s112
      %s114 = sphi 0, %s112
      %s115 = sphi 0, %s114
      %s129 = sphi 0, %s115
      %s133 = sphi 0, %s133
      %s135 = sphi 0, %s133
      %s136 = sphi 0, %s135
      %s150 = sphi 0, %s136
      %s154 = sphi 0, %s154
      %s156 = sphi 0, %s154
      %s157 = sphi 0, %s156
      %s171 = sphi 0, %s157
      %s175 = sphi 0, %s175
      %s177 = sphi 0, %s175
      %s178 = sphi 0, %s177
      %s192 = sphi 0, %s178
      %s198 = sphi 0, %s200
      %s201 = sphi 0, %s198
      %s202 = sphi 0, %s201
      %s218 = sphi 0, %s202
    $region4: #{tpu_custom_call.1} parent=1 // loop_header_branch
      %18 = sbr.rel (%p16) target = $region8
    $region5: #{tpu_custom_call.1} parent=1 // loop_body
      %s20 = ssub.s32 %s15, 1
      %s21 = ssub.s32 %s15, 2
      %s22 = sadd.s32 %s15, 1
      %s24 = sadd.s32 %s23, 1
      %p27 = scmp.eq.s32.totalorder %s15, 1
      %p28 = scmp.ne.s32.totalorder %s23, %s25
      %p29 = scmp.eq.s32.totalorder %s15, 0
      %p30 = por %p28, %p29
      %p31 = scmp.ne.s32.totalorder %s23, %s25
      %p32 = scmp.eq.s32.totalorder %s20, 1
      %p33 = por %p31, %p32
      %p34 = scmp.ne.s32.totalorder %s25, %s26
      %p35 = scmp.eq.s32.totalorder %s20, 0
      %p36 = por %p34, %p35
      %p37 = scmp.ne.s32.totalorder %s25, %s26
      %p38 = scmp.eq.s32.totalorder %s21, 1
      %p39 = por %p37, %p38
      %p41 = scmp.ne.s32.totalorder %s26, %s40
      %p42 = scmp.eq.s32.totalorder %s21, 0
      %p43 = por %p41, %p42
      %s44 = ssub.s32 %s15, %s22
      %p45 = scmp.eq.s32.totalorder %s44, 0
      %s47 = sadd.s32 %s46, 1
      %s48 = scalar_select %p45, %s46, %s47
      %p51 = pneg %p45
      %p52 = scmp.eq.s32.totalorder %s15, 1
      %p53 = por %p51, %p52
      %p54 = scmp.ne.s32.totalorder %s46, %s49
      %p55 = scmp.eq.s32.totalorder %s15, 0
      %p56 = por %p54, %p55
      %p57 = scmp.ne.s32.totalorder %s46, %s49
      %p58 = scmp.eq.s32.totalorder %s20, 1
      %p59 = por %p57, %p58
      %p60 = scmp.ne.s32.totalorder %s49, %s50
      %p61 = scmp.eq.s32.totalorder %s20, 0
      %p62 = por %p60, %p61
      %p63 = scmp.ne.s32.totalorder %s49, %s50
      %p64 = scmp.eq.s32.totalorder %s21, 1
      %p65 = por %p63, %p64
      %p67 = scmp.ne.s32.totalorder %s50, %s66
      %p68 = scmp.eq.s32.totalorder %s21, 0
      %p69 = por %p67, %p68
      %s71 = sadd.s32 %s70, 1
      %p74 = scmp.eq.s32.totalorder %s15, 1
      %p75 = scmp.ne.s32.totalorder %s70, %s72
      %p76 = scmp.eq.s32.totalorder %s15, 0
      %p77 = por %p75, %p76
      %p78 = scmp.ne.s32.totalorder %s70, %s72
      %p79 = scmp.eq.s32.totalorder %s20, 1
      %p80 = por %p78, %p79
      %p81 = scmp.ne.s32.totalorder %s72, %s73
      %p82 = scmp.eq.s32.totalorder %s20, 0
      %p83 = por %p81, %p82
      %p84 = scmp.ne.s32.totalorder %s72, %s73
      %p85 = scmp.eq.s32.totalorder %s21, 1
      %p86 = por %p84, %p85
      %p88 = scmp.ne.s32.totalorder %s73, %s87
      %p89 = scmp.eq.s32.totalorder %s21, 0
      %p90 = por %p88, %p89
      %s92 = sadd.s32 %s91, 1
      %p95 = scmp.eq.s32.totalorder %s15, 1
      %p96 = scmp.ne.s32.totalorder %s91, %s93
      %p97 = scmp.eq.s32.totalorder %s15, 0
      %p98 = por %p96, %p97
      %p99 = scmp.ne.s32.totalorder %s91, %s93
      %p100 = scmp.eq.s32.totalorder %s20, 1
      %p101 = por %p99, %p100
      %p102 = scmp.ne.s32.totalorder %s93, %s94
      %p103 = scmp.eq.s32.totalorder %s20, 0
      %p104 = por %p102, %p103
      %p105 = scmp.ne.s32.totalorder %s93, %s94
      %p106 = scmp.eq.s32.totalorder %s21, 1
      %p107 = por %p105, %p106
      %p109 = scmp.ne.s32.totalorder %s94, %s108
      %p110 = scmp.eq.s32.totalorder %s21, 0
      %p111 = por %p109, %p110
      %s113 = sadd.s32 %s112, 1
      %p116 = scmp.eq.s32.totalorder %s15, 1
      %p117 = scmp.ne.s32.totalorder %s112, %s114
      %p118 = scmp.eq.s32.totalorder %s15, 0
      %p119 = por %p117, %p118
      %p120 = scmp.ne.s32.totalorder %s112, %s114
      %p121 = scmp.eq.s32.totalorder %s20, 1
      %p122 = por %p120, %p121
      %p123 = scmp.ne.s32.totalorder %s114, %s115
      %p124 = scmp.eq.s32.totalorder %s20, 0
      %p125 = por %p123, %p124
      %p126 = scmp.ne.s32.totalorder %s114, %s115
      %p127 = scmp.eq.s32.totalorder %s21, 1
      %p128 = por %p126, %p127
      %p130 = scmp.ne.s32.totalorder %s115, %s129
      %p131 = scmp.eq.s32.totalorder %s21, 0
      %p132 = por %p130, %p131
      %s134 = sadd.s32 %s133, 1
      %p137 = scmp.eq.s32.totalorder %s15, 1
      %p138 = scmp.ne.s32.totalorder %s133, %s135
      %p139 = scmp.eq.s32.totalorder %s15, 0
      %p140 = por %p138, %p139
      %p141 = scmp.ne.s32.totalorder %s133, %s135
      %p142 = scmp.eq.s32.totalorder %s20, 1
      %p143 = por %p141, %p142
      %p144 = scmp.ne.s32.totalorder %s135, %s136
      %p145 = scmp.eq.s32.totalorder %s20, 0
      %p146 = por %p144, %p145
      %p147 = scmp.ne.s32.totalorder %s135, %s136
      %p148 = scmp.eq.s32.totalorder %s21, 1
      %p149 = por %p147, %p148
      %p151 = scmp.ne.s32.totalorder %s136, %s150
      %p152 = scmp.eq.s32.totalorder %s21, 0
      %p153 = por %p151, %p152
      %s155 = sadd.s32 %s154, 1
      %p158 = scmp.eq.s32.totalorder %s15, 1
      %p159 = scmp.ne.s32.totalorder %s154, %s156
      %p160 = scmp.eq.s32.totalorder %s15, 0
      %p161 = por %p159, %p160
      %p162 = scmp.ne.s32.totalorder %s154, %s156
      %p163 = scmp.eq.s32.totalorder %s20, 1
      %p164 = por %p162, %p163
      %p165 = scmp.ne.s32.totalorder %s156, %s157
      %p166 = scmp.eq.s32.totalorder %s20, 0
      %p167 = por %p165, %p166
      %p168 = scmp.ne.s32.totalorder %s156, %s157
      %p169 = scmp.eq.s32.totalorder %s21, 1
      %p170 = por %p168, %p169
      %p172 = scmp.ne.s32.totalorder %s157, %s171
      %p173 = scmp.eq.s32.totalorder %s21, 0
      %p174 = por %p172, %p173
      %s176 = sadd.s32 %s175, 1
      %p179 = scmp.eq.s32.totalorder %s15, 1
      %p180 = scmp.ne.s32.totalorder %s175, %s177
      %p181 = scmp.eq.s32.totalorder %s15, 0
      %p182 = por %p180, %p181
      %p183 = scmp.ne.s32.totalorder %s175, %s177
      %p184 = scmp.eq.s32.totalorder %s20, 1
      %p185 = por %p183, %p184
      %p186 = scmp.ne.s32.totalorder %s177, %s178
      %p187 = scmp.eq.s32.totalorder %s20, 0
      %p188 = por %p186, %p187
      %p189 = scmp.ne.s32.totalorder %s177, %s178
      %p190 = scmp.eq.s32.totalorder %s21, 1
      %p191 = por %p189, %p190
      %p193 = scmp.ne.s32.totalorder %s178, %s192
      %p194 = scmp.eq.s32.totalorder %s21, 0
      %p195 = por %p193, %p194
      %s196 = ssub.s32 %s15, %s22
      %p197 = scmp.eq.s32.totalorder %s196, 0
      %s199 = sadd.s32 %s198, 1
      %s200 = scalar_select %p197, %s198, %s199
      %p203 = pneg %p197
      %p204 = scmp.eq.s32.totalorder %s15, 1
      %p205 = por %p203, %p204
      %p206 = scmp.ne.s32.totalorder %s198, %s201
      %p207 = scmp.eq.s32.totalorder %s15, 0
      %p208 = por %p206, %p207
      %p209 = scmp.ne.s32.totalorder %s198, %s201
      %p210 = scmp.eq.s32.totalorder %s20, 1
      %p211 = por %p209, %p210
      %p212 = scmp.ne.s32.totalorder %s201, %s202
      %p213 = scmp.eq.s32.totalorder %s20, 0
      %p214 = por %p212, %p213
      %p215 = scmp.ne.s32.totalorder %s201, %s202
      %p216 = scmp.eq.s32.totalorder %s21, 1
      %p217 = por %p215, %p216
      %p219 = scmp.ne.s32.totalorder %s202, %s218
      %p220 = scmp.eq.s32.totalorder %s21, 0
      %p221 = por %p219, %p220
      %p222 = scmp.le.s32.totalorder 1, %s15
      %p223 = scmp.lt.s32.totalorder %s15, 3
      %p224 = pnand %p222, %p223
      %p225 = pneg %p224
      // Predicated region
      $region9: #{tpu_custom_call.1} parent=5 // pred_check
        _
      $region10: #{tpu_custom_call.1} parent=5 // pred_check_branch
        %227 = sbr.rel (%p224) target = $region12
      $region11: #{tpu_custom_call.1} parent=5 // pred_region
        %s228 = ssub.s32 %s15, 1
        // Predicated region
        $region13: #{tpu_custom_call.1} parent=11 // pred_check
          %p229 = pneg %p36
        $region14: #{tpu_custom_call.1} parent=11 // pred_check_branch
          %231 = sbr.rel (%p229) target = $region16
        $region15: #{tpu_custom_call.1} parent=11 // pred_region
          _
        $region16: #{tpu_custom_call.1} parent=11 // pred_fallthru
          _
        // Predicated region
        $region17: #{tpu_custom_call.1} parent=11 // pred_check
          %p232 = pneg %p83
        $region18: #{tpu_custom_call.1} parent=11 // pred_check_branch
          %234 = sbr.rel (%p232) target = $region20
        $region19: #{tpu_custom_call.1} parent=11 // pred_region
          _
        $region20: #{tpu_custom_call.1} parent=11 // pred_fallthru
          _
        // Predicated region
        $region21: #{tpu_custom_call.1} parent=11 // pred_check
          %p235 = pneg %p104
        $region22: #{tpu_custom_call.1} parent=11 // pred_check_branch
          %237 = sbr.rel (%p235) target = $region24
        $region23: #{tpu_custom_call.1} parent=11 // pred_region
          _
        $region24: #{tpu_custom_call.1} parent=11 // pred_fallthru
          _
        // Predicated region
        $region25: #{tpu_custom_call.1} parent=11 // pred_check
          %p238 = pneg %p125
        $region26: #{tpu_custom_call.1} parent=11 // pred_check_branch
          %240 = sbr.rel (%p238) target = $region28
        $region27: #{tpu_custom_call.1} parent=11 // pred_region
          _
        $region28: #{tpu_custom_call.1} parent=11 // pred_fallthru
          _
        // Predicated region
        $region29: #{tpu_custom_call.1} parent=11 // pred_check
          %p241 = pneg %p146
        $region30: #{tpu_custom_call.1} parent=11 // pred_check_branch
          %243 = sbr.rel (%p241) target = $region32
        $region31: #{tpu_custom_call.1} parent=11 // pred_region
          _
        $region32: #{tpu_custom_call.1} parent=11 // pred_fallthru
          _
        // Predicated region
        $region33: #{tpu_custom_call.1} parent=11 // pred_check
          %p244 = pneg %p167
        $region34: #{tpu_custom_call.1} parent=11 // pred_check_branch
          %246 = sbr.rel (%p244) target = $region36
        $region35: #{tpu_custom_call.1} parent=11 // pred_region
          %s248 = ssub.s32 512, 512
          %249 = vsyncadd [#allocation4], %s248
          %s250 = sshll.u32 [#allocation3], 4
          %s251 = int_to_ptr.vmem [resolvable:$true] %s250
          %256 = dma.hbm_to_vmem [thread:$0]  %s6, 512, %s251, [#allocation4], 128, 128, 8
        $region36: #{tpu_custom_call.1} parent=11 // pred_fallthru
          _
        // Predicated region
        $region37: #{tpu_custom_call.1} parent=11 // pred_check
          %p257 = pneg %p188
        $region38: #{tpu_custom_call.1} parent=11 // pred_check_branch
          %259 = sbr.rel (%p257) target = $region40
        $region39: #{tpu_custom_call.1} parent=11 // pred_region
          _
        $region40: #{tpu_custom_call.1} parent=11 // pred_fallthru
          _
      $region12: #{tpu_custom_call.1} parent=5 // pred_fallthru
        _
      %p260 = scmp.lt.s32.totalorder %s15, 2
      // Predicated region
      $region41: #{tpu_custom_call.1} parent=5 // pred_check
        %p261 = pneg %p260
      $region42: #{tpu_custom_call.1} parent=5 // pred_check_branch
        %263 = sbr.rel (%p261) target = $region44
      $region43: #{tpu_custom_call.1} parent=5 // pred_region
        // Predicated region
        $region45: #{tpu_custom_call.1} parent=43 // pred_check
          %p264 = pneg %p56
        $region46: #{tpu_custom_call.1} parent=43 // pred_check_branch
          %266 = sbr.rel (%p264) target = $region48
        $region47: #{tpu_custom_call.1} parent=43 // pred_region
          %p267 = scmp.lt.s32.totalorder %s15, 1
          %s268 = scalar_select %p267, %s15, 1
          %s269 = smul.addr %s268, 3
          %s270 = smul.addr %s269, 8
          %s271 = scalar_lea.vmem %s1, %s270
        $region48: #{tpu_custom_call.1} parent=43 // pred_fallthru
          _
      $region44: #{tpu_custom_call.1} parent=5 // pred_fallthru
        _
      %p272 = scmp.le.s32.totalorder 1, %s15
      %p273 = scmp.lt.s32.totalorder %s15, 3
      %p274 = pnand %p272, %p273
      %p275 = pneg %p274
      // Predicated region
      $region49: #{tpu_custom_call.1} parent=5 // pred_check
        _
      $region50: #{tpu_custom_call.1} parent=5 // pred_check_branch
        %277 = sbr.rel (%p274) target = $region52
      $region51: #{tpu_custom_call.1} parent=5 // pred_region
        %s278 = ssub.s32 %s15, 1
        // Predicated region
        $region53: #{tpu_custom_call.1} parent=51 // pred_check
          %p279 = pneg %p167
        $region54: #{tpu_custom_call.1} parent=51 // pred_check_branch
          %281 = sbr.rel (%p279) target = $region56
        $region55: #{tpu_custom_call.1} parent=51 // pred_region
          %282 = dma.done [#allocation4], 512
        $region56: #{tpu_custom_call.1} parent=51 // pred_fallthru
          _
        %p283 = pneg %p36
        %p284 = pneg %p33
        %p285 = scmp.lt.s32.totalorder %s20, 1
        %s286 = scalar_select %p285, %s20, 1
        %s287 = smul.addr %s286, 3
        %s288 = smul.addr %s287, 8
        %s289 = scalar_lea.vmem %s1, %s288
        %p290 = pneg %p62
        %p291 = pneg %p59
        %p292 = pneg %p83
        %p293 = pneg %p80
        %p294 = pneg %p104
        %p295 = pneg %p101
        %p296 = pneg %p125
        %p297 = pneg %p122
        %p298 = pneg %p146
        %p299 = pneg %p143
        %p300 = pneg %p167
        %p301 = pneg %p164
        %p302 = pneg %p188
        %p303 = pneg %p185
        %p304 = pneg %p214
        %p305 = pneg %p211
        %p306 = scmp.lt.s32.totalorder %s20, 1
        %s307 = scalar_select %p306, %s20, 1
        %s308 = smul.addr %s307, 3
        %s309 = smul.addr %s308, 8
        %s310 = scalar_lea.vmem %s8, %s309
        %p311 = scmp.lt.s32.totalorder %s20, 1
        %s312 = scalar_select %p311, %s20, 1
        %s313 = smul.addr %s312, 3
        %s314 = smul.addr %s313, 8
        %s315 = scalar_lea.vmem %s1, %s314
        %p316 = scmp.lt.s32.totalorder %s20, 1
        %s317 = scalar_select %p316, %s20, 1
        %s318 = smul.addr %s317, 3
        %s319 = smul.addr %s318, 8
        %s320 = scalar_lea.vmem %s8, %s319
        %v321 = vld [vmem:[%s2] sm:$0xff]
        %v322 = vld [vmem:[%s2 + $0x8] sm:$0xff]
        %v323 = vld [vmem:[%s2 + $0x10] sm:$0xff]
        %v324 = vld [vmem:[%s2 + $0x18] sm:$0xff]
        %v325 = vld [vmem:[%s4] sm:$0xff]
        %v326 = vld [vmem:[%s4 + $0x8] sm:$0xff]
        %v327 = vld [vmem:[%s4 + $0x10] sm:$0xff]
        %v328 = vld [vmem:[%s4 + $0x18] sm:$0xff]
        %v329 = vld [vmem:[#allocation3] sm:$0xff]
        %v330 = vld [vmem:[#allocation3 + $0x8] sm:$0xff]
        %v331 = vld [vmem:[#allocation3 + $0x10] sm:$0xff]
        %v332 = vld [vmem:[#allocation3 + $0x18] sm:$0xff]
        %v333 = vld [vmem:[%s3] sm:$0x1]
        %v334 = vld [vmem:[%s5] sm:$0x1]
        %v335 = vld [vmem:[%s7] sm:$0x1]
        %v336 = vld [vmem:[%s315] sm:$0xff]
        %v337 = vld [vmem:[%s315 + $0x8] sm:$0xff]
        %v338 = vld [vmem:[%s315 + $0x10] sm:$0x1]
        %s339 = scalar_lea.vmem %s0, %s20
        %v340 = vld [vmem:[%s339] sm:$0x1]
        %v341 = vlaneseq
        %v342 = vshrl.u32 %v341, 7
        %v343 = vadd.s32 %v342, 8
        %v344 = vadd.s32 %v342, 16
        %v345 = vlaneseq
        %v346 = vshrl.u32 %v345, 7
        %v347 = vsub.s32 0, %v346
        %v348 = vrot.slane %v340, %v347
        %vm349 = vcmp.eq.s32.totalorder %v342, %v348
        %vm350 = vcmp.eq.s32.totalorder %v343, %v348
        %vm351 = vcmp.eq.s32.totalorder %v344, %v348
        %v352 = vsel %vm349, 1, 0
        %v353 = vsel %vm350, 1, 0
        %v354 = vsel %vm351, 1, 0
        %v355 = vcvt.s32.f32 %v352
        %v356 = vcvt.s32.f32 %v353
        %v357 = vcvt.s32.f32 %v354
        %358 = vxpose.xlu0.b32.start [1/16] %v355, 128
        %359 = vxpose.xlu0.b32.cont [2/16] %v356, 128
        %360 = vxpose.xlu0.b32.cont [3/16] %v357, 128
        %361 = vxpose.xlu0.b32.cont [4/16] 0.0, 128
        %362 = vxpose.xlu0.b32.cont [5/16] 0.0, 128
        %363 = vxpose.xlu0.b32.cont [6/16] 0.0, 128
        %364 = vxpose.xlu0.b32.cont [7/16] 0.0, 128
        %365 = vxpose.xlu0.b32.cont [8/16] 0.0, 128
        %366 = vxpose.xlu0.b32.cont [9/16] 0.0, 128
        %367 = vxpose.xlu0.b32.cont [10/16] 0.0, 128
        %368 = vxpose.xlu0.b32.cont [11/16] 0.0, 128
        %369 = vxpose.xlu0.b32.cont [12/16] 0.0, 128
        %370 = vxpose.xlu0.b32.cont [13/16] 0.0, 128
        %371 = vxpose.xlu0.b32.cont [14/16] 0.0, 128
        %372 = vxpose.xlu0.b32.cont [15/16] 0.0, 128
        %373 = vxpose.xlu0.b32.end [16/16] 0.0, 128
        %v374 = vpop.trf.xlu0
        %v375 = vpop.trf.xlu0
        %v376 = vpop.trf.xlu0
        %v377 = vpop.trf.xlu0
        %v378 = vpop.trf.xlu0
        %v379 = vpop.trf.xlu0
        %v380 = vpop.trf.xlu0
        %v381 = vpop.trf.xlu0
        %v382 = vpop.trf.xlu0
        %v383 = vpop.trf.xlu0
        %v384 = vpop.trf.xlu0
        %v385 = vpop.trf.xlu0
        %v386 = vpop.trf.xlu0
        %v387 = vpop.trf.xlu0
        %v388 = vpop.trf.xlu0
        %v389 = vpop.trf.xlu0
        %vm390 = vcmask 138240
        %v392 = vsel %vm390, %v374, 0
        %vm394 = vcmask 1040384
        %v396 = vsel %vm394, %v338, 0
        %398 = vmatprep.subr.mxu0 0.0
        %399 = vmatpush1.msra.mxu0 0.0
        %400 = vmatprep.subr.mxu0 0.0
        %401 = vmatpush1.msra.mxu0 0.0
        %402 = vmatprep.subr.mxu0 0.0
        %403 = vmatpush1.msra.mxu0 0.0
        %404 = vmatprep.subr.mxu0 0.0
        %405 = vmatpush1.msra.mxu0 0.0
        %406 = vmatprep.subr.mxu0 0.0
        %407 = vmatpush1.msra.mxu0 0.0
        %408 = vmatprep.subr.mxu0 0.0
        %409 = vmatpush1.msra.mxu0 0.0
        %410 = vmatprep.subr.mxu0 0.0
        %411 = vmatpush1.msra.mxu0 0.0
        %412 = vmatprep.subr.mxu0 0.0
        %413 = vmatpush1.msra.mxu0 0.0
        %414 = vmatprep.subr.mxu0 0.0
        %415 = vmatpush1.msra.mxu0 0.0
        %416 = vmatprep.subr.mxu0 0.0
        %417 = vmatpush1.msra.mxu0 0.0
        %418 = vmatprep.subr.mxu0 0.0
        %419 = vmatpush1.msra.mxu0 0.0
        %420 = vmatprep.subr.mxu0 0.0
        %421 = vmatpush1.msra.mxu0 0.0
        %422 = vmatprep.subr.mxu0 0.0
        %423 = vmatpush1.msra.mxu0 0.0
        %424 = vmatprep.subr.mxu0 0.0
        %425 = vmatpush1.msra.mxu0 %v396
        %426 = vmatprep.subr.mxu0 0.0
        %427 = vmatpush1.msra.mxu0 %v337
        %428 = vmatprep.subr.mxu0 0.0
        %429 = vmatpush1.msra.mxu0 %v336
        %430 = vmatprep.subr.mxu0 0.0
        %431 = vmatpush2.msra.mxu0 0.0
        %432 = vmatprep.subr.mxu0 0.0
        %433 = vmatpush2.msra.mxu0 0.0
        %434 = vmatprep.subr.mxu0 0.0
        %435 = vmatpush2.msra.mxu0 0.0
        %436 = vmatprep.subr.mxu0 0.0
        %437 = vmatpush2.msra.mxu0 0.0
        %438 = vmatprep.subr.mxu0 0.0
        %439 = vmatpush2.msra.mxu0 0.0
        %440 = vmatprep.subr.mxu0 0.0
        %441 = vmatpush2.msra.mxu0 0.0
        %442 = vmatprep.subr.mxu0 0.0
        %443 = vmatpush2.msra.mxu0 0.0
        %444 = vmatprep.subr.mxu0 0.0
        %445 = vmatpush2.msra.mxu0 0.0
        %446 = vmatprep.subr.mxu0 0.0
        %447 = vmatpush2.msra.mxu0 0.0
        %448 = vmatprep.subr.mxu0 0.0
        %449 = vmatpush2.msra.mxu0 0.0
        %450 = vmatprep.subr.mxu0 0.0
        %451 = vmatpush2.msra.mxu0 0.0
        %452 = vmatprep.subr.mxu0 0.0
        %453 = vmatpush2.msra.mxu0 0.0
        %454 = vmatprep.subr.mxu0 0.0
        %455 = vmatpush2.msra.mxu0 0.0
        %456 = vmatprep.subr.mxu0 0.0
        %457 = vmatpush2.msra.mxu0 0.0
        %458 = vmatprep.subr.mxu0 0.0
        %459 = vmatpush2.msra.mxu0 0.0
        %460 = vmatprep.subr.mxu0 0.0
        %461 = vmatpush2.msra.mxu0 0.0
        %462 = vmatprep.mubr.f32.mxu0 0.0
        %463 = vmatmul.mubr.f32.gmra.mxu0 %v392
        %v464 = vpop.f32.mrf.mxu0
        %v465 = vadd.f32 0.0, %v464
        %v466 = vpop.f32.mrf.mxu0
        %467 = vdwg.mxu0
        %v469 = vlaneseq
        %v470 = vshrl.u32 %v469, 7
        %v471 = vsub.s32 0, %v470
        %v472 = vrot.slane %v333, %v471
        %vm474 = vcmask 261120
        %v476 = vsel %vm474, %v465, 0
        %478 = vmatprep.subr.mxu0 0.0
        %479 = vmatpush1.msra.mxu0 0.0
        %480 = vmatprep.subr.mxu0 0.0
        %481 = vmatpush1.msra.mxu0 0.0
        %482 = vmatprep.subr.mxu0 0.0
        %483 = vmatpush1.msra.mxu0 0.0
        %484 = vmatprep.subr.mxu0 0.0
        %485 = vmatpush1.msra.mxu0 0.0
        %486 = vmatprep.subr.mxu0 0.0
        %487 = vmatpush1.msra.mxu0 0.0
        %488 = vmatprep.subr.mxu0 0.0
        %489 = vmatpush1.msra.mxu0 0.0
        %490 = vmatprep.subr.mxu0 0.0
        %491 = vmatpush1.msra.mxu0 0.0
        %492 = vmatprep.subr.mxu0 0.0
        %493 = vmatpush1.msra.mxu0 0.0
        %494 = vmatprep.subr.mxu0 0.0
        %495 = vmatpush1.msra.mxu0 0.0
        %496 = vmatprep.subr.mxu0 0.0
        %497 = vmatpush1.msra.mxu0 0.0
        %498 = vmatprep.subr.mxu0 0.0
        %499 = vmatpush1.msra.mxu0 0.0
        %500 = vmatprep.subr.mxu0 0.0
        %501 = vmatpush1.msra.mxu0 0.0
        %502 = vmatprep.subr.mxu0 0.0
        %503 = vmatpush1.msra.mxu0 %v324
        %504 = vmatprep.subr.mxu0 0.0
        %505 = vmatpush1.msra.mxu0 %v323
        %506 = vmatprep.subr.mxu0 0.0
        %507 = vmatpush1.msra.mxu0 %v322
        %508 = vmatprep.subr.mxu0 0.0
        %509 = vmatpush1.msra.mxu0 %v321
        %510 = vmatprep.subr.mxu0 0.0
        %511 = vmatpush2.msra.mxu0 0.0
        %512 = vmatprep.subr.mxu0 0.0
        %513 = vmatpush2.msra.mxu0 0.0
        %514 = vmatprep.subr.mxu0 0.0
        %515 = vmatpush2.msra.mxu0 0.0
        %516 = vmatprep.subr.mxu0 0.0
        %517 = vmatpush2.msra.mxu0 0.0
        %518 = vmatprep.subr.mxu0 0.0
        %519 = vmatpush2.msra.mxu0 0.0
        %520 = vmatprep.subr.mxu0 0.0
        %521 = vmatpush2.msra.mxu0 0.0
        %522 = vmatprep.subr.mxu0 0.0
        %523 = vmatpush2.msra.mxu0 0.0
        %524 = vmatprep.subr.mxu0 0.0
        %525 = vmatpush2.msra.mxu0 0.0
        %526 = vmatprep.subr.mxu0 0.0
        %527 = vmatpush2.msra.mxu0 0.0
        %528 = vmatprep.subr.mxu0 0.0
        %529 = vmatpush2.msra.mxu0 0.0
        %530 = vmatprep.subr.mxu0 0.0
        %531 = vmatpush2.msra.mxu0 0.0
        %532 = vmatprep.subr.mxu0 0.0
        %533 = vmatpush2.msra.mxu0 0.0
        %534 = vmatprep.subr.mxu0 0.0
        %535 = vmatpush2.msra.mxu0 0.0
        %536 = vmatprep.subr.mxu0 0.0
        %537 = vmatpush2.msra.mxu0 0.0
        %538 = vmatprep.subr.mxu0 0.0
        %539 = vmatpush2.msra.mxu0 0.0
        %540 = vmatprep.subr.mxu0 0.0
        %541 = vmatpush2.msra.mxu0 0.0
        %542 = vmatprep.mubr.f32.mxu0 0.0
        %543 = vmatmul.mubr.f32.gmra.mxu0 %v476
        %v544 = vpop.f32.mrf.mxu0
        %v545 = vadd.f32 %v472, %v544
        %v546 = vpop.f32.mrf.mxu0
        %547 = vdwg.mxu0
        %v549 = vlaneseq
        %v550 = vshrl.u32 %v549, 7
        %v551 = vsub.s32 0, %v550
        %v552 = vrot.slane %v334, %v551
        %v555 = vsel %vm474, %v336, 0
        %v558 = vsel %vm474, %v337, 0
        %v560 = vsel %vm474, %v338, 0
        %562 = vmatprep.subr.mxu0 0.0
        %563 = vmatpush1.msra.mxu0 0.0
        %564 = vmatprep.subr.mxu0 0.0
        %565 = vmatpush1.msra.mxu0 0.0
        %566 = vmatprep.subr.mxu0 0.0
        %567 = vmatpush1.msra.mxu0 0.0
        %568 = vmatprep.subr.mxu0 0.0
        %569 = vmatpush1.msra.mxu0 0.0
        %570 = vmatprep.subr.mxu0 0.0
        %571 = vmatpush1.msra.mxu0 0.0
        %572 = vmatprep.subr.mxu0 0.0
        %573 = vmatpush1.msra.mxu0 0.0
        %574 = vmatprep.subr.mxu0 0.0
        %575 = vmatpush1.msra.mxu0 0.0
        %576 = vmatprep.subr.mxu0 0.0
        %577 = vmatpush1.msra.mxu0 0.0
        %578 = vmatprep.subr.mxu0 0.0
        %579 = vmatpush1.msra.mxu0 0.0
        %580 = vmatprep.subr.mxu0 0.0
        %581 = vmatpush1.msra.mxu0 0.0
        %582 = vmatprep.subr.mxu0 0.0
        %583 = vmatpush1.msra.mxu0 0.0
        %584 = vmatprep.subr.mxu0 0.0
        %585 = vmatpush1.msra.mxu0 0.0
        %586 = vmatprep.subr.mxu0 0.0
        %587 = vmatpush1.msra.mxu0 %v328
        %588 = vmatprep.subr.mxu0 0.0
        %589 = vmatpush1.msra.mxu0 %v327
        %590 = vmatprep.subr.mxu0 0.0
        %591 = vmatpush1.msra.mxu0 %v326
        %592 = vmatprep.subr.mxu0 0.0
        %593 = vmatpush1.msra.mxu0 %v325
        %594 = vmatprep.subr.mxu0 0.0
        %595 = vmatpush2.msra.mxu0 0.0
        %596 = vmatprep.subr.mxu0 0.0
        %597 = vmatpush2.msra.mxu0 0.0
        %598 = vmatprep.subr.mxu0 0.0
        %599 = vmatpush2.msra.mxu0 0.0
        %600 = vmatprep.subr.mxu0 0.0
        %601 = vmatpush2.msra.mxu0 0.0
        %602 = vmatprep.subr.mxu0 0.0
        %603 = vmatpush2.msra.mxu0 0.0
        %604 = vmatprep.subr.mxu0 0.0
        %605 = vmatpush2.msra.mxu0 0.0
        %606 = vmatprep.subr.mxu0 0.0
        %607 = vmatpush2.msra.mxu0 0.0
        %608 = vmatprep.subr.mxu0 0.0
        %609 = vmatpush2.msra.mxu0 0.0
        %610 = vmatprep.subr.mxu0 0.0
        %611 = vmatpush2.msra.mxu0 0.0
        %612 = vmatprep.subr.mxu0 0.0
        %613 = vmatpush2.msra.mxu0 0.0
        %614 = vmatprep.subr.mxu0 0.0
        %615 = vmatpush2.msra.mxu0 0.0
        %616 = vmatprep.subr.mxu0 0.0
        %617 = vmatpush2.msra.mxu0 0.0
        %618 = vmatprep.subr.mxu0 0.0
        %619 = vmatpush2.msra.mxu0 0.0
        %620 = vmatprep.subr.mxu0 0.0
        %621 = vmatpush2.msra.mxu0 0.0
        %622 = vmatprep.subr.mxu0 0.0
        %623 = vmatpush2.msra.mxu0 0.0
        %624 = vmatprep.subr.mxu0 0.0
        %625 = vmatpush2.msra.mxu0 0.0
        %626 = vmatprep.mubr.f32.mxu0 0.0
        %627 = vmatmul.mubr.f32.gmra.mxu0 %v555
        %v628 = vpop.f32.mrf.mxu0
        %v629 = vadd.f32 %v552, %v628
        %v630 = vpop.f32.mrf.mxu0
        %631 = vmatprep.mubr.f32.mxu0 0.0
        %632 = vmatmul.mubr.f32.gmra.mxu0 %v558
        %v633 = vpop.f32.mrf.mxu0
        %v634 = vadd.f32 %v552, %v633
        %v635 = vpop.f32.mrf.mxu0
        %636 = vmatprep.mubr.f32.mxu0 0.0
        %637 = vmatmul.mubr.f32.gmra.mxu0 %v560
        %v638 = vpop.f32.mrf.mxu0
        %v639 = vadd.f32 %v552, %v638
        %v640 = vpop.f32.mrf.mxu0
        %641 = vdwg.mxu0
        %vm642 = vcmask 64512
        %v644 = vsel %vm642, %v545, 0
        %v647 = vsel %vm642, %v629, 0
        %v650 = vsel %vm642, %v634, 0
        %v653 = vsel %vm642, %v639, 0
        %655 = vmatprep.subr.mxu0 0.0
        %656 = vmatpush1.xpose.msra.mxu0 0.0
        %657 = vmatprep.subr.mxu0 0.0
        %658 = vmatpush1.xpose.msra.mxu0 0.0
        %659 = vmatprep.subr.mxu0 0.0
        %660 = vmatpush1.xpose.msra.mxu0 0.0
        %661 = vmatprep.subr.mxu0 0.0
        %662 = vmatpush1.xpose.msra.mxu0 0.0
        %663 = vmatprep.subr.mxu0 0.0
        %664 = vmatpush1.xpose.msra.mxu0 0.0
        %665 = vmatprep.subr.mxu0 0.0
        %666 = vmatpush1.xpose.msra.mxu0 0.0
        %667 = vmatprep.subr.mxu0 0.0
        %668 = vmatpush1.xpose.msra.mxu0 0.0
        %669 = vmatprep.subr.mxu0 0.0
        %670 = vmatpush1.xpose.msra.mxu0 0.0
        %671 = vmatprep.subr.mxu0 0.0
        %672 = vmatpush1.xpose.msra.mxu0 0.0
        %673 = vmatprep.subr.mxu0 0.0
        %674 = vmatpush1.xpose.msra.mxu0 0.0
        %675 = vmatprep.subr.mxu0 0.0
        %676 = vmatpush1.xpose.msra.mxu0 0.0
        %677 = vmatprep.subr.mxu0 0.0
        %678 = vmatpush1.xpose.msra.mxu0 0.0
        %679 = vmatprep.subr.mxu0 0.0
        %680 = vmatpush1.xpose.msra.mxu0 0.0
        %681 = vmatprep.subr.mxu0 0.0
        %682 = vmatpush1.xpose.msra.mxu0 %v653
        %683 = vmatprep.subr.mxu0 0.0
        %684 = vmatpush1.xpose.msra.mxu0 %v650
        %685 = vmatprep.subr.mxu0 0.0
        %686 = vmatpush1.xpose.msra.mxu0 %v647
        %687 = vmatprep.subr.mxu0 0.0
        %688 = vmatpush2.xpose.msra.mxu0 0.0
        %689 = vmatprep.subr.mxu0 0.0
        %690 = vmatpush2.xpose.msra.mxu0 0.0
        %691 = vmatprep.subr.mxu0 0.0
        %692 = vmatpush2.xpose.msra.mxu0 0.0
        %693 = vmatprep.subr.mxu0 0.0
        %694 = vmatpush2.xpose.msra.mxu0 0.0
        %695 = vmatprep.subr.mxu0 0.0
        %696 = vmatpush2.xpose.msra.mxu0 0.0
        %697 = vmatprep.subr.mxu0 0.0
        %698 = vmatpush2.xpose.msra.mxu0 0.0
        %699 = vmatprep.subr.mxu0 0.0
        %700 = vmatpush2.xpose.msra.mxu0 0.0
        %701 = vmatprep.subr.mxu0 0.0
        %702 = vmatpush2.xpose.msra.mxu0 0.0
        %703 = vmatprep.subr.mxu0 0.0
        %704 = vmatpush2.xpose.msra.mxu0 0.0
        %705 = vmatprep.subr.mxu0 0.0
        %706 = vmatpush2.xpose.msra.mxu0 0.0
        %707 = vmatprep.subr.mxu0 0.0
        %708 = vmatpush2.xpose.msra.mxu0 0.0
        %709 = vmatprep.subr.mxu0 0.0
        %710 = vmatpush2.xpose.msra.mxu0 0.0
        %711 = vmatprep.subr.mxu0 0.0
        %712 = vmatpush2.xpose.msra.mxu0 0.0
        %713 = vmatprep.subr.mxu0 0.0
        %714 = vmatpush2.xpose.msra.mxu0 0.0
        %715 = vmatprep.subr.mxu0 0.0
        %716 = vmatpush2.xpose.msra.mxu0 0.0
        %717 = vmatprep.subr.mxu0 0.0
        %718 = vmatpush2.xpose.msra.mxu0 0.0
        %719 = vmatprep.mubr.f32.mxu0 0.0
        %720 = vmatmul.mubr.f32.gmra.mxu0 %v644
        %v721 = vpop.f32.mrf.mxu0
        %v722 = vadd.f32 0.0, %v721
        %v723 = vpop.f32.mrf.mxu0
        %724 = vdwg.mxu0
        %v725 = vsel %vm390, %v722, -inf
        %726 = vmax.xlane.f32.xlu0 %v725
        %v727 = vpop.xlane.xlu0 %726
        %v728 = vsub.f32 %v722, %v727
        %v729 = vmul.f32 %v728, 1.442695
        %v730 = vpow.pop %v729
        %v731 = vsel %vm390, %v730, 0.0
        %732 = vadd.xlane.f32.xlu0 %v731
        %v733 = vpop.xlane.xlu0 %732
        %734 = vrot.lane.b32.xlu0 %v629, 96
        %v735 = vpop.permute.xlu0 %734
        %736 = vrot.lane.b32.xlu0 %v634, 96
        %v737 = vpop.permute.xlu0 %736
        %738 = vrot.lane.b32.xlu0 %v639, 96
        %v739 = vpop.permute.xlu0 %738
        %v743 = vsel %vm390, %v730, 0
        %v745 = vsel %vm394, %v739, 0
        %747 = vmatprep.subr.mxu0 0.0
        %748 = vmatpush1.msra.mxu0 0.0
        %749 = vmatprep.subr.mxu0 0.0
        %750 = vmatpush1.msra.mxu0 0.0
        %751 = vmatprep.subr.mxu0 0.0
        %752 = vmatpush1.msra.mxu0 0.0
        %753 = vmatprep.subr.mxu0 0.0
        %754 = vmatpush1.msra.mxu0 0.0
        %755 = vmatprep.subr.mxu0 0.0
        %756 = vmatpush1.msra.mxu0 0.0
        %757 = vmatprep.subr.mxu0 0.0
        %758 = vmatpush1.msra.mxu0 0.0
        %759 = vmatprep.subr.mxu0 0.0
        %760 = vmatpush1.msra.mxu0 0.0
        %761 = vmatprep.subr.mxu0 0.0
        %762 = vmatpush1.msra.mxu0 0.0
        %763 = vmatprep.subr.mxu0 0.0
        %764 = vmatpush1.msra.mxu0 0.0
        %765 = vmatprep.subr.mxu0 0.0
        %766 = vmatpush1.msra.mxu0 0.0
        %767 = vmatprep.subr.mxu0 0.0
        %768 = vmatpush1.msra.mxu0 0.0
        %769 = vmatprep.subr.mxu0 0.0
        %770 = vmatpush1.msra.mxu0 0.0
        %771 = vmatprep.subr.mxu0 0.0
        %772 = vmatpush1.msra.mxu0 0.0
        %773 = vmatprep.subr.mxu0 0.0
        %774 = vmatpush1.msra.mxu0 %v745
        %775 = vmatprep.subr.mxu0 0.0
        %776 = vmatpush1.msra.mxu0 %v737
        %777 = vmatprep.subr.mxu0 0.0
        %778 = vmatpush1.msra.mxu0 %v735
        %779 = vmatprep.subr.mxu0 0.0
        %780 = vmatpush2.msra.mxu0 0.0
        %781 = vmatprep.subr.mxu0 0.0
        %782 = vmatpush2.msra.mxu0 0.0
        %783 = vmatprep.subr.mxu0 0.0
        %784 = vmatpush2.msra.mxu0 0.0
        %785 = vmatprep.subr.mxu0 0.0
        %786 = vmatpush2.msra.mxu0 0.0
        %787 = vmatprep.subr.mxu0 0.0
        %788 = vmatpush2.msra.mxu0 0.0
        %789 = vmatprep.subr.mxu0 0.0
        %790 = vmatpush2.msra.mxu0 0.0
        %791 = vmatprep.subr.mxu0 0.0
        %792 = vmatpush2.msra.mxu0 0.0
        %793 = vmatprep.subr.mxu0 0.0
        %794 = vmatpush2.msra.mxu0 0.0
        %795 = vmatprep.subr.mxu0 0.0
        %796 = vmatpush2.msra.mxu0 0.0
        %797 = vmatprep.subr.mxu0 0.0
        %798 = vmatpush2.msra.mxu0 0.0
        %799 = vmatprep.subr.mxu0 0.0
        %800 = vmatpush2.msra.mxu0 0.0
        %801 = vmatprep.subr.mxu0 0.0
        %802 = vmatpush2.msra.mxu0 0.0
        %803 = vmatprep.subr.mxu0 0.0
        %804 = vmatpush2.msra.mxu0 0.0
        %805 = vmatprep.subr.mxu0 0.0
        %806 = vmatpush2.msra.mxu0 0.0
        %807 = vmatprep.subr.mxu0 0.0
        %808 = vmatpush2.msra.mxu0 0.0
        %809 = vmatprep.subr.mxu0 0.0
        %810 = vmatpush2.msra.mxu0 0.0
        %811 = vmatprep.mubr.f32.mxu0 0.0
        %812 = vmatmul.mubr.f32.gmra.mxu0 %v743
        %v813 = vpop.f32.mrf.mxu0
        %v814 = vadd.f32 0.0, %v813
        %v815 = vpop.f32.mrf.mxu0
        %816 = vdwg.mxu0
        %v817 = vrcp.pop %v733
        %v818 = vmul.f32 %v814, %v817
        %819 = vst.msk [vmem:[#allocation2] sm:$0xff] %vm642, %v818
        %820 = vrot.lane.b32.xlu0 %v545, 120
        %v821 = vpop.permute.xlu0 %820
        %822 = vrot.lane.b32.xlu0 %v629, 120
        %v823 = vpop.permute.xlu0 %822
        %824 = vrot.lane.b32.xlu0 %v634, 120
        %v825 = vpop.permute.xlu0 %824
        %826 = vrot.lane.b32.xlu0 %v639, 120
        %v827 = vpop.permute.xlu0 %826
        %v828 = vsel %vm642, %v821, 0
        %v830 = vsel %vm642, %v823, 0
        %v832 = vsel %vm642, %v825, 0
        %v834 = vsel %vm642, %v827, 0
        %836 = vmatprep.subr.mxu0 0.0
        %837 = vmatpush1.xpose.msra.mxu0 0.0
        %838 = vmatprep.subr.mxu0 0.0
        %839 = vmatpush1.xpose.msra.mxu0 0.0
        %840 = vmatprep.subr.mxu0 0.0
        %841 = vmatpush1.xpose.msra.mxu0 0.0
        %842 = vmatprep.subr.mxu0 0.0
        %843 = vmatpush1.xpose.msra.mxu0 0.0
        %844 = vmatprep.subr.mxu0 0.0
        %845 = vmatpush1.xpose.msra.mxu0 0.0
        %846 = vmatprep.subr.mxu0 0.0
        %847 = vmatpush1.xpose.msra.mxu0 0.0
        %848 = vmatprep.subr.mxu0 0.0
        %849 = vmatpush1.xpose.msra.mxu0 0.0
        %850 = vmatprep.subr.mxu0 0.0
        %851 = vmatpush1.xpose.msra.mxu0 0.0
        %852 = vmatprep.subr.mxu0 0.0
        %853 = vmatpush1.xpose.msra.mxu0 0.0
        %854 = vmatprep.subr.mxu0 0.0
        %855 = vmatpush1.xpose.msra.mxu0 0.0
        %856 = vmatprep.subr.mxu0 0.0
        %857 = vmatpush1.xpose.msra.mxu0 0.0
        %858 = vmatprep.subr.mxu0 0.0
        %859 = vmatpush1.xpose.msra.mxu0 0.0
        %860 = vmatprep.subr.mxu0 0.0
        %861 = vmatpush1.xpose.msra.mxu0 0.0
        %862 = vmatprep.subr.mxu0 0.0
        %863 = vmatpush1.xpose.msra.mxu0 %v834
        %864 = vmatprep.subr.mxu0 0.0
        %865 = vmatpush1.xpose.msra.mxu0 %v832
        %866 = vmatprep.subr.mxu0 0.0
        %867 = vmatpush1.xpose.msra.mxu0 %v830
        %868 = vmatprep.subr.mxu0 0.0
        %869 = vmatpush2.xpose.msra.mxu0 0.0
        %870 = vmatprep.subr.mxu0 0.0
        %871 = vmatpush2.xpose.msra.mxu0 0.0
        %872 = vmatprep.subr.mxu0 0.0
        %873 = vmatpush2.xpose.msra.mxu0 0.0
        %874 = vmatprep.subr.mxu0 0.0
        %875 = vmatpush2.xpose.msra.mxu0 0.0
        %876 = vmatprep.subr.mxu0 0.0
        %877 = vmatpush2.xpose.msra.mxu0 0.0
        %878 = vmatprep.subr.mxu0 0.0
        %879 = vmatpush2.xpose.msra.mxu0 0.0
        %880 = vmatprep.subr.mxu0 0.0
        %881 = vmatpush2.xpose.msra.mxu0 0.0
        %882 = vmatprep.subr.mxu0 0.0
        %883 = vmatpush2.xpose.msra.mxu0 0.0
        %884 = vmatprep.subr.mxu0 0.0
        %885 = vmatpush2.xpose.msra.mxu0 0.0
        %886 = vmatprep.subr.mxu0 0.0
        %887 = vmatpush2.xpose.msra.mxu0 0.0
        %888 = vmatprep.subr.mxu0 0.0
        %889 = vmatpush2.xpose.msra.mxu0 0.0
        %890 = vmatprep.subr.mxu0 0.0
        %891 = vmatpush2.xpose.msra.mxu0 0.0
        %892 = vmatprep.subr.mxu0 0.0
        %893 = vmatpush2.xpose.msra.mxu0 0.0
        %894 = vmatprep.subr.mxu0 0.0
        %895 = vmatpush2.xpose.msra.mxu0 0.0
        %896 = vmatprep.subr.mxu0 0.0
        %897 = vmatpush2.xpose.msra.mxu0 0.0
        %898 = vmatprep.subr.mxu0 0.0
        %899 = vmatpush2.xpose.msra.mxu0 0.0
        %900 = vmatprep.mubr.f32.mxu0 0.0
        %901 = vmatmul.mubr.f32.gmra.mxu0 %v828
        %v902 = vpop.f32.mrf.mxu0
        %v903 = vadd.f32 0.0, %v902
        %v904 = vpop.f32.mrf.mxu0
        %905 = vdwg.mxu0
        %v906 = vsel %vm390, %v903, -inf
        %907 = vmax.xlane.f32.xlu0 %v906
        %v908 = vpop.xlane.xlu0 %907
        %v909 = vsub.f32 %v903, %v908
        %v910 = vmul.f32 %v909, 1.442695
        %v911 = vpow.pop %v910
        %v912 = vsel %vm390, %v911, 0.0
        %913 = vadd.xlane.f32.xlu0 %v912
        %v914 = vpop.xlane.xlu0 %913
        %915 = vrot.lane.b32.xlu0 %v629, 88
        %v916 = vpop.permute.xlu0 %915
        %917 = vrot.lane.b32.xlu0 %v634, 88
        %v918 = vpop.permute.xlu0 %917
        %919 = vrot.lane.b32.xlu0 %v639, 88
        %v920 = vpop.permute.xlu0 %919
        %v924 = vsel %vm390, %v911, 0
        %v926 = vsel %vm394, %v920, 0
        %928 = vmatprep.subr.mxu0 0.0
        %929 = vmatpush1.msra.mxu0 0.0
        %930 = vmatprep.subr.mxu0 0.0
        %931 = vmatpush1.msra.mxu0 0.0
        %932 = vmatprep.subr.mxu0 0.0
        %933 = vmatpush1.msra.mxu0 0.0
        %934 = vmatprep.subr.mxu0 0.0
        %935 = vmatpush1.msra.mxu0 0.0
        %936 = vmatprep.subr.mxu0 0.0
        %937 = vmatpush1.msra.mxu0 0.0
        %938 = vmatprep.subr.mxu0 0.0
        %939 = vmatpush1.msra.mxu0 0.0
        %940 = vmatprep.subr.mxu0 0.0
        %941 = vmatpush1.msra.mxu0 0.0
        %942 = vmatprep.subr.mxu0 0.0
        %943 = vmatpush1.msra.mxu0 0.0
        %944 = vmatprep.subr.mxu0 0.0
        %945 = vmatpush1.msra.mxu0 0.0
        %946 = vmatprep.subr.mxu0 0.0
        %947 = vmatpush1.msra.mxu0 0.0
        %948 = vmatprep.subr.mxu0 0.0
        %949 = vmatpush1.msra.mxu0 0.0
        %950 = vmatprep.subr.mxu0 0.0
        %951 = vmatpush1.msra.mxu0 0.0
        %952 = vmatprep.subr.mxu0 0.0
        %953 = vmatpush1.msra.mxu0 0.0
        %954 = vmatprep.subr.mxu0 0.0
        %955 = vmatpush1.msra.mxu0 %v926
        %956 = vmatprep.subr.mxu0 0.0
        %957 = vmatpush1.msra.mxu0 %v918
        %958 = vmatprep.subr.mxu0 0.0
        %959 = vmatpush1.msra.mxu0 %v916
        %960 = vmatprep.subr.mxu0 0.0
        %961 = vmatpush2.msra.mxu0 0.0
        %962 = vmatprep.subr.mxu0 0.0
        %963 = vmatpush2.msra.mxu0 0.0
        %964 = vmatprep.subr.mxu0 0.0
        %965 = vmatpush2.msra.mxu0 0.0
        %966 = vmatprep.subr.mxu0 0.0
        %967 = vmatpush2.msra.mxu0 0.0
        %968 = vmatprep.subr.mxu0 0.0
        %969 = vmatpush2.msra.mxu0 0.0
        %970 = vmatprep.subr.mxu0 0.0
        %971 = vmatpush2.msra.mxu0 0.0
        %972 = vmatprep.subr.mxu0 0.0
        %973 = vmatpush2.msra.mxu0 0.0
        %974 = vmatprep.subr.mxu0 0.0
        %975 = vmatpush2.msra.mxu0 0.0
        %976 = vmatprep.subr.mxu0 0.0
        %977 = vmatpush2.msra.mxu0 0.0
        %978 = vmatprep.subr.mxu0 0.0
        %979 = vmatpush2.msra.mxu0 0.0
        %980 = vmatprep.subr.mxu0 0.0
        %981 = vmatpush2.msra.mxu0 0.0
        %982 = vmatprep.subr.mxu0 0.0
        %983 = vmatpush2.msra.mxu0 0.0
        %984 = vmatprep.subr.mxu0 0.0
        %985 = vmatpush2.msra.mxu0 0.0
        %986 = vmatprep.subr.mxu0 0.0
        %987 = vmatpush2.msra.mxu0 0.0
        %988 = vmatprep.subr.mxu0 0.0
        %989 = vmatpush2.msra.mxu0 0.0
        %990 = vmatprep.subr.mxu0 0.0
        %991 = vmatpush2.msra.mxu0 0.0
        %992 = vmatprep.mubr.f32.mxu0 0.0
        %993 = vmatmul.mubr.f32.gmra.mxu0 %v924
        %v994 = vpop.f32.mrf.mxu0
        %v995 = vadd.f32 0.0, %v994
        %v996 = vpop.f32.mrf.mxu0
        %997 = vdwg.mxu0
        %v998 = vrcp.pop %v914
        %v999 = vmul.f32 %v995, %v998
        %1001 = vrot.lane.b32.xlu0 %v999, 8
        %v1002 = vpop.permute.xlu0 %1001
        %vm1004 = vcmask 130112
        %1005 = vst.msk [vmem:[#allocation2] sm:$0xff] %vm1004, %v1002
        %1006 = vrot.lane.b32.xlu0 %v545, 112
        %v1007 = vpop.permute.xlu0 %1006
        %1008 = vrot.lane.b32.xlu0 %v629, 112
        %v1009 = vpop.permute.xlu0 %1008
        %1010 = vrot.lane.b32.xlu0 %v634, 112
        %v1011 = vpop.permute.xlu0 %1010
        %1012 = vrot.lane.b32.xlu0 %v639, 112
        %v1013 = vpop.permute.xlu0 %1012
        %v1014 = vsel %vm642, %v1007, 0
        %v1016 = vsel %vm642, %v1009, 0
        %v1018 = vsel %vm642, %v1011, 0
        %v1020 = vsel %vm642, %v1013, 0
        %1022 = vmatprep.subr.mxu0 0.0
        %1023 = vmatpush1.xpose.msra.mxu0 0.0
        %1024 = vmatprep.subr.mxu0 0.0
        %1025 = vmatpush1.xpose.msra.mxu0 0.0
        %1026 = vmatprep.subr.mxu0 0.0
        %1027 = vmatpush1.xpose.msra.mxu0 0.0
        %1028 = vmatprep.subr.mxu0 0.0
        %1029 = vmatpush1.xpose.msra.mxu0 0.0
        %1030 = vmatprep.subr.mxu0 0.0
        %1031 = vmatpush1.xpose.msra.mxu0 0.0
        %1032 = vmatprep.subr.mxu0 0.0
        %1033 = vmatpush1.xpose.msra.mxu0 0.0
        %1034 = vmatprep.subr.mxu0 0.0
        %1035 = vmatpush1.xpose.msra.mxu0 0.0
        %1036 = vmatprep.subr.mxu0 0.0
        %1037 = vmatpush1.xpose.msra.mxu0 0.0
        %1038 = vmatprep.subr.mxu0 0.0
        %1039 = vmatpush1.xpose.msra.mxu0 0.0
        %1040 = vmatprep.subr.mxu0 0.0
        %1041 = vmatpush1.xpose.msra.mxu0 0.0
        %1042 = vmatprep.subr.mxu0 0.0
        %1043 = vmatpush1.xpose.msra.mxu0 0.0
        %1044 = vmatprep.subr.mxu0 0.0
        %1045 = vmatpush1.xpose.msra.mxu0 0.0
        %1046 = vmatprep.subr.mxu0 0.0
        %1047 = vmatpush1.xpose.msra.mxu0 0.0
        %1048 = vmatprep.subr.mxu0 0.0
        %1049 = vmatpush1.xpose.msra.mxu0 %v1020
        %1050 = vmatprep.subr.mxu0 0.0
        %1051 = vmatpush1.xpose.msra.mxu0 %v1018
        %1052 = vmatprep.subr.mxu0 0.0
        %1053 = vmatpush1.xpose.msra.mxu0 %v1016
        %1054 = vmatprep.subr.mxu0 0.0
        %1055 = vmatpush2.xpose.msra.mxu0 0.0
        %1056 = vmatprep.subr.mxu0 0.0
        %1057 = vmatpush2.xpose.msra.mxu0 0.0
        %1058 = vmatprep.subr.mxu0 0.0
        %1059 = vmatpush2.xpose.msra.mxu0 0.0
        %1060 = vmatprep.subr.mxu0 0.0
        %1061 = vmatpush2.xpose.msra.mxu0 0.0
        %1062 = vmatprep.subr.mxu0 0.0
        %1063 = vmatpush2.xpose.msra.mxu0 0.0
        %1064 = vmatprep.subr.mxu0 0.0
        %1065 = vmatpush2.xpose.msra.mxu0 0.0
        %1066 = vmatprep.subr.mxu0 0.0
        %1067 = vmatpush2.xpose.msra.mxu0 0.0
        %1068 = vmatprep.subr.mxu0 0.0
        %1069 = vmatpush2.xpose.msra.mxu0 0.0
        %1070 = vmatprep.subr.mxu0 0.0
        %1071 = vmatpush2.xpose.msra.mxu0 0.0
        %1072 = vmatprep.subr.mxu0 0.0
        %1073 = vmatpush2.xpose.msra.mxu0 0.0
        %1074 = vmatprep.subr.mxu0 0.0
        %1075 = vmatpush2.xpose.msra.mxu0 0.0
        %1076 = vmatprep.subr.mxu0 0.0
        %1077 = vmatpush2.xpose.msra.mxu0 0.0
        %1078 = vmatprep.subr.mxu0 0.0
        %1079 = vmatpush2.xpose.msra.mxu0 0.0
        %1080 = vmatprep.subr.mxu0 0.0
        %1081 = vmatpush2.xpose.msra.mxu0 0.0
        %1082 = vmatprep.subr.mxu0 0.0
        %1083 = vmatpush2.xpose.msra.mxu0 0.0
        %1084 = vmatprep.subr.mxu0 0.0
        %1085 = vmatpush2.xpose.msra.mxu0 0.0
        %1086 = vmatprep.mubr.f32.mxu0 0.0
        %1087 = vmatmul.mubr.f32.gmra.mxu0 %v1014
        %v1088 = vpop.f32.mrf.mxu0
        %v1089 = vadd.f32 0.0, %v1088
        %v1090 = vpop.f32.mrf.mxu0
        %1091 = vdwg.mxu0
        %v1092 = vsel %vm390, %v1089, -inf
        %1093 = vmax.xlane.f32.xlu0 %v1092
        %v1094 = vpop.xlane.xlu0 %1093
        %v1095 = vsub.f32 %v1089, %v1094
        %v1096 = vmul.f32 %v1095, 1.442695
        %v1097 = vpow.pop %v1096
        %v1098 = vsel %vm390, %v1097, 0.0
        %1099 = vadd.xlane.f32.xlu0 %v1098
        %v1100 = vpop.xlane.xlu0 %1099
        %1101 = vrot.lane.b32.xlu0 %v629, 80
        %v1102 = vpop.permute.xlu0 %1101
        %1103 = vrot.lane.b32.xlu0 %v634, 80
        %v1104 = vpop.permute.xlu0 %1103
        %1105 = vrot.lane.b32.xlu0 %v639, 80
        %v1106 = vpop.permute.xlu0 %1105
        %v1110 = vsel %vm390, %v1097, 0
        %v1112 = vsel %vm394, %v1106, 0
        %1114 = vmatprep.subr.mxu0 0.0
        %1115 = vmatpush1.msra.mxu0 0.0
        %1116 = vmatprep.subr.mxu0 0.0
        %1117 = vmatpush1.msra.mxu0 0.0
        %1118 = vmatprep.subr.mxu0 0.0
        %1119 = vmatpush1.msra.mxu0 0.0
        %1120 = vmatprep.subr.mxu0 0.0
        %1121 = vmatpush1.msra.mxu0 0.0
        %1122 = vmatprep.subr.mxu0 0.0
        %1123 = vmatpush1.msra.mxu0 0.0
        %1124 = vmatprep.subr.mxu0 0.0
        %1125 = vmatpush1.msra.mxu0 0.0
        %1126 = vmatprep.subr.mxu0 0.0
        %1127 = vmatpush1.msra.mxu0 0.0
        %1128 = vmatprep.subr.mxu0 0.0
        %1129 = vmatpush1.msra.mxu0 0.0
        %1130 = vmatprep.subr.mxu0 0.0
        %1131 = vmatpush1.msra.mxu0 0.0
        %1132 = vmatprep.subr.mxu0 0.0
        %1133 = vmatpush1.msra.mxu0 0.0
        %1134 = vmatprep.subr.mxu0 0.0
        %1135 = vmatpush1.msra.mxu0 0.0
        %1136 = vmatprep.subr.mxu0 0.0
        %1137 = vmatpush1.msra.mxu0 0.0
        %1138 = vmatprep.subr.mxu0 0.0
        %1139 = vmatpush1.msra.mxu0 0.0
        %1140 = vmatprep.subr.mxu0 0.0
        %1141 = vmatpush1.msra.mxu0 %v1112
        %1142 = vmatprep.subr.mxu0 0.0
        %1143 = vmatpush1.msra.mxu0 %v1104
        %1144 = vmatprep.subr.mxu0 0.0
        %1145 = vmatpush1.msra.mxu0 %v1102
        %1146 = vmatprep.subr.mxu0 0.0
        %1147 = vmatpush2.msra.mxu0 0.0
        %1148 = vmatprep.subr.mxu0 0.0
        %1149 = vmatpush2.msra.mxu0 0.0
        %1150 = vmatprep.subr.mxu0 0.0
        %1151 = vmatpush2.msra.mxu0 0.0
        %1152 = vmatprep.subr.mxu0 0.0
        %1153 = vmatpush2.msra.mxu0 0.0
        %1154 = vmatprep.subr.mxu0 0.0
        %1155 = vmatpush2.msra.mxu0 0.0
        %1156 = vmatprep.subr.mxu0 0.0
        %1157 = vmatpush2.msra.mxu0 0.0
        %1158 = vmatprep.subr.mxu0 0.0
        %1159 = vmatpush2.msra.mxu0 0.0
        %1160 = vmatprep.subr.mxu0 0.0
        %1161 = vmatpush2.msra.mxu0 0.0
        %1162 = vmatprep.subr.mxu0 0.0
        %1163 = vmatpush2.msra.mxu0 0.0
        %1164 = vmatprep.subr.mxu0 0.0
        %1165 = vmatpush2.msra.mxu0 0.0
        %1166 = vmatprep.subr.mxu0 0.0
        %1167 = vmatpush2.msra.mxu0 0.0
        %1168 = vmatprep.subr.mxu0 0.0
        %1169 = vmatpush2.msra.mxu0 0.0
        %1170 = vmatprep.subr.mxu0 0.0
        %1171 = vmatpush2.msra.mxu0 0.0
        %1172 = vmatprep.subr.mxu0 0.0
        %1173 = vmatpush2.msra.mxu0 0.0
        %1174 = vmatprep.subr.mxu0 0.0
        %1175 = vmatpush2.msra.mxu0 0.0
        %1176 = vmatprep.subr.mxu0 0.0
        %1177 = vmatpush2.msra.mxu0 0.0
        %1178 = vmatprep.mubr.f32.mxu0 0.0
        %1179 = vmatmul.mubr.f32.gmra.mxu0 %v1110
        %v1180 = vpop.f32.mrf.mxu0
        %v1181 = vadd.f32 0.0, %v1180
        %v1182 = vpop.f32.mrf.mxu0
        %1183 = vdwg.mxu0
        %v1184 = vrcp.pop %v1100
        %v1185 = vmul.f32 %v1181, %v1184
        %1187 = vrot.lane.b32.xlu0 %v1185, 16
        %v1188 = vpop.permute.xlu0 %1187
        %vm1190 = vcmask 195712
        %1191 = vst.msk [vmem:[#allocation2] sm:$0xff] %vm1190, %v1188
        %1192 = vrot.lane.b32.xlu0 %v545, 104
        %v1193 = vpop.permute.xlu0 %1192
        %1194 = vrot.lane.b32.xlu0 %v629, 104
        %v1195 = vpop.permute.xlu0 %1194
        %1196 = vrot.lane.b32.xlu0 %v634, 104
        %v1197 = vpop.permute.xlu0 %1196
        %1198 = vrot.lane.b32.xlu0 %v639, 104
        %v1199 = vpop.permute.xlu0 %1198
        %v1200 = vsel %vm642, %v1193, 0
        %v1202 = vsel %vm642, %v1195, 0
        %v1204 = vsel %vm642, %v1197, 0
        %v1206 = vsel %vm642, %v1199, 0
        %1208 = vmatprep.subr.mxu0 0.0
        %1209 = vmatpush1.xpose.msra.mxu0 0.0
        %1210 = vmatprep.subr.mxu0 0.0
        %1211 = vmatpush1.xpose.msra.mxu0 0.0
        %1212 = vmatprep.subr.mxu0 0.0
        %1213 = vmatpush1.xpose.msra.mxu0 0.0
        %1214 = vmatprep.subr.mxu0 0.0
        %1215 = vmatpush1.xpose.msra.mxu0 0.0
        %1216 = vmatprep.subr.mxu0 0.0
        %1217 = vmatpush1.xpose.msra.mxu0 0.0
        %1218 = vmatprep.subr.mxu0 0.0
        %1219 = vmatpush1.xpose.msra.mxu0 0.0
        %1220 = vmatprep.subr.mxu0 0.0
        %1221 = vmatpush1.xpose.msra.mxu0 0.0
        %1222 = vmatprep.subr.mxu0 0.0
        %1223 = vmatpush1.xpose.msra.mxu0 0.0
        %1224 = vmatprep.subr.mxu0 0.0
        %1225 = vmatpush1.xpose.msra.mxu0 0.0
        %1226 = vmatprep.subr.mxu0 0.0
        %1227 = vmatpush1.xpose.msra.mxu0 0.0
        %1228 = vmatprep.subr.mxu0 0.0
        %1229 = vmatpush1.xpose.msra.mxu0 0.0
        %1230 = vmatprep.subr.mxu0 0.0
        %1231 = vmatpush1.xpose.msra.mxu0 0.0
        %1232 = vmatprep.subr.mxu0 0.0
        %1233 = vmatpush1.xpose.msra.mxu0 0.0
        %1234 = vmatprep.subr.mxu0 0.0
        %1235 = vmatpush1.xpose.msra.mxu0 %v1206
        %1236 = vmatprep.subr.mxu0 0.0
        %1237 = vmatpush1.xpose.msra.mxu0 %v1204
        %1238 = vmatprep.subr.mxu0 0.0
        %1239 = vmatpush1.xpose.msra.mxu0 %v1202
        %1240 = vmatprep.subr.mxu0 0.0
        %1241 = vmatpush2.xpose.msra.mxu0 0.0
        %1242 = vmatprep.subr.mxu0 0.0
        %1243 = vmatpush2.xpose.msra.mxu0 0.0
        %1244 = vmatprep.subr.mxu0 0.0
        %1245 = vmatpush2.xpose.msra.mxu0 0.0
        %1246 = vmatprep.subr.mxu0 0.0
        %1247 = vmatpush2.xpose.msra.mxu0 0.0
        %1248 = vmatprep.subr.mxu0 0.0
        %1249 = vmatpush2.xpose.msra.mxu0 0.0
        %1250 = vmatprep.subr.mxu0 0.0
        %1251 = vmatpush2.xpose.msra.mxu0 0.0
        %1252 = vmatprep.subr.mxu0 0.0
        %1253 = vmatpush2.xpose.msra.mxu0 0.0
        %1254 = vmatprep.subr.mxu0 0.0
        %1255 = vmatpush2.xpose.msra.mxu0 0.0
        %1256 = vmatprep.subr.mxu0 0.0
        %1257 = vmatpush2.xpose.msra.mxu0 0.0
        %1258 = vmatprep.subr.mxu0 0.0
        %1259 = vmatpush2.xpose.msra.mxu0 0.0
        %1260 = vmatprep.subr.mxu0 0.0
        %1261 = vmatpush2.xpose.msra.mxu0 0.0
        %1262 = vmatprep.subr.mxu0 0.0
        %1263 = vmatpush2.xpose.msra.mxu0 0.0
        %1264 = vmatprep.subr.mxu0 0.0
        %1265 = vmatpush2.xpose.msra.mxu0 0.0
        %1266 = vmatprep.subr.mxu0 0.0
        %1267 = vmatpush2.xpose.msra.mxu0 0.0
        %1268 = vmatprep.subr.mxu0 0.0
        %1269 = vmatpush2.xpose.msra.mxu0 0.0
        %1270 = vmatprep.subr.mxu0 0.0
        %1271 = vmatpush2.xpose.msra.mxu0 0.0
        %1272 = vmatprep.mubr.f32.mxu0 0.0
        %1273 = vmatmul.mubr.f32.gmra.mxu0 %v1200
        %v1274 = vpop.f32.mrf.mxu0
        %v1275 = vadd.f32 0.0, %v1274
        %v1276 = vpop.f32.mrf.mxu0
        %1277 = vdwg.mxu0
        %v1278 = vsel %vm390, %v1275, -inf
        %1279 = vmax.xlane.f32.xlu0 %v1278
        %v1280 = vpop.xlane.xlu0 %1279
        %v1281 = vsub.f32 %v1275, %v1280
        %v1282 = vmul.f32 %v1281, 1.442695
        %v1283 = vpow.pop %v1282
        %v1284 = vsel %vm390, %v1283, 0.0
        %1285 = vadd.xlane.f32.xlu0 %v1284
        %v1286 = vpop.xlane.xlu0 %1285
        %1287 = vrot.lane.b32.xlu0 %v629, 72
        %v1288 = vpop.permute.xlu0 %1287
        %1289 = vrot.lane.b32.xlu0 %v634, 72
        %v1290 = vpop.permute.xlu0 %1289
        %1291 = vrot.lane.b32.xlu0 %v639, 72
        %v1292 = vpop.permute.xlu0 %1291
        %v1296 = vsel %vm390, %v1283, 0
        %v1298 = vsel %vm394, %v1292, 0
        %1300 = vmatprep.subr.mxu0 0.0
        %1301 = vmatpush1.msra.mxu0 0.0
        %1302 = vmatprep.subr.mxu0 0.0
        %1303 = vmatpush1.msra.mxu0 0.0
        %1304 = vmatprep.subr.mxu0 0.0
        %1305 = vmatpush1.msra.mxu0 0.0
        %1306 = vmatprep.subr.mxu0 0.0
        %1307 = vmatpush1.msra.mxu0 0.0
        %1308 = vmatprep.subr.mxu0 0.0
        %1309 = vmatpush1.msra.mxu0 0.0
        %1310 = vmatprep.subr.mxu0 0.0
        %1311 = vmatpush1.msra.mxu0 0.0
        %1312 = vmatprep.subr.mxu0 0.0
        %1313 = vmatpush1.msra.mxu0 0.0
        %1314 = vmatprep.subr.mxu0 0.0
        %1315 = vmatpush1.msra.mxu0 0.0
        %1316 = vmatprep.subr.mxu0 0.0
        %1317 = vmatpush1.msra.mxu0 0.0
        %1318 = vmatprep.subr.mxu0 0.0
        %1319 = vmatpush1.msra.mxu0 0.0
        %1320 = vmatprep.subr.mxu0 0.0
        %1321 = vmatpush1.msra.mxu0 0.0
        %1322 = vmatprep.subr.mxu0 0.0
        %1323 = vmatpush1.msra.mxu0 0.0
        %1324 = vmatprep.subr.mxu0 0.0
        %1325 = vmatpush1.msra.mxu0 0.0
        %1326 = vmatprep.subr.mxu0 0.0
        %1327 = vmatpush1.msra.mxu0 %v1298
        %1328 = vmatprep.subr.mxu0 0.0
        %1329 = vmatpush1.msra.mxu0 %v1290
        %1330 = vmatprep.subr.mxu0 0.0
        %1331 = vmatpush1.msra.mxu0 %v1288
        %1332 = vmatprep.subr.mxu0 0.0
        %1333 = vmatpush2.msra.mxu0 0.0
        %1334 = vmatprep.subr.mxu0 0.0
        %1335 = vmatpush2.msra.mxu0 0.0
        %1336 = vmatprep.subr.mxu0 0.0
        %1337 = vmatpush2.msra.mxu0 0.0
        %1338 = vmatprep.subr.mxu0 0.0
        %1339 = vmatpush2.msra.mxu0 0.0
        %1340 = vmatprep.subr.mxu0 0.0
        %1341 = vmatpush2.msra.mxu0 0.0
        %1342 = vmatprep.subr.mxu0 0.0
        %1343 = vmatpush2.msra.mxu0 0.0
        %1344 = vmatprep.subr.mxu0 0.0
        %1345 = vmatpush2.msra.mxu0 0.0
        %1346 = vmatprep.subr.mxu0 0.0
        %1347 = vmatpush2.msra.mxu0 0.0
        %1348 = vmatprep.subr.mxu0 0.0
        %1349 = vmatpush2.msra.mxu0 0.0
        %1350 = vmatprep.subr.mxu0 0.0
        %1351 = vmatpush2.msra.mxu0 0.0
        %1352 = vmatprep.subr.mxu0 0.0
        %1353 = vmatpush2.msra.mxu0 0.0
        %1354 = vmatprep.subr.mxu0 0.0
        %1355 = vmatpush2.msra.mxu0 0.0
        %1356 = vmatprep.subr.mxu0 0.0
        %1357 = vmatpush2.msra.mxu0 0.0
        %1358 = vmatprep.subr.mxu0 0.0
        %1359 = vmatpush2.msra.mxu0 0.0
        %1360 = vmatprep.subr.mxu0 0.0
        %1361 = vmatpush2.msra.mxu0 0.0
        %1362 = vmatprep.subr.mxu0 0.0
        %1363 = vmatpush2.msra.mxu0 0.0
        %1364 = vmatprep.mubr.f32.mxu0 0.0
        %1365 = vmatmul.mubr.f32.gmra.mxu0 %v1296
        %v1366 = vpop.f32.mrf.mxu0
        %v1367 = vadd.f32 0.0, %v1366
        %v1368 = vpop.f32.mrf.mxu0
        %1369 = vdwg.mxu0
        %v1370 = vrcp.pop %v1286
        %v1371 = vmul.f32 %v1367, %v1370
        %1373 = vrot.lane.b32.xlu0 %v1371, 24
        %v1374 = vpop.permute.xlu0 %1373
        %vm1376 = vcmask 261312
        %1377 = vst.msk [vmem:[#allocation2] sm:$0xff] %vm1376, %v1374
        %v1378 = vld [vmem:[#allocation2] sm:$0xff]
        %v1380 = vlaneseq
        %v1381 = vshrl.u32 %v1380, 7
        %v1382 = vsub.s32 0, %v1381
        %v1383 = vrot.slane %v335, %v1382
        %v1386 = vsel %vm474, %v1378, 0
        %1388 = vmatprep.subr.mxu0 0.0
        %1389 = vmatpush1.msra.mxu0 0.0
        %1390 = vmatprep.subr.mxu0 0.0
        %1391 = vmatpush1.msra.mxu0 0.0
        %1392 = vmatprep.subr.mxu0 0.0
        %1393 = vmatpush1.msra.mxu0 0.0
        %1394 = vmatprep.subr.mxu0 0.0
        %1395 = vmatpush1.msra.mxu0 0.0
        %1396 = vmatprep.subr.mxu0 0.0
        %1397 = vmatpush1.msra.mxu0 0.0
        %1398 = vmatprep.subr.mxu0 0.0
        %1399 = vmatpush1.msra.mxu0 0.0
        %1400 = vmatprep.subr.mxu0 0.0
        %1401 = vmatpush1.msra.mxu0 0.0
        %1402 = vmatprep.subr.mxu0 0.0
        %1403 = vmatpush1.msra.mxu0 0.0
        %1404 = vmatprep.subr.mxu0 0.0
        %1405 = vmatpush1.msra.mxu0 0.0
        %1406 = vmatprep.subr.mxu0 0.0
        %1407 = vmatpush1.msra.mxu0 0.0
        %1408 = vmatprep.subr.mxu0 0.0
        %1409 = vmatpush1.msra.mxu0 0.0
        %1410 = vmatprep.subr.mxu0 0.0
        %1411 = vmatpush1.msra.mxu0 0.0
        %1412 = vmatprep.subr.mxu0 0.0
        %1413 = vmatpush1.msra.mxu0 %v332
        %1414 = vmatprep.subr.mxu0 0.0
        %1415 = vmatpush1.msra.mxu0 %v331
        %1416 = vmatprep.subr.mxu0 0.0
        %1417 = vmatpush1.msra.mxu0 %v330
        %1418 = vmatprep.subr.mxu0 0.0
        %1419 = vmatpush1.msra.mxu0 %v329
        %1420 = vmatprep.subr.mxu0 0.0
        %1421 = vmatpush2.msra.mxu0 0.0
        %1422 = vmatprep.subr.mxu0 0.0
        %1423 = vmatpush2.msra.mxu0 0.0
        %1424 = vmatprep.subr.mxu0 0.0
        %1425 = vmatpush2.msra.mxu0 0.0
        %1426 = vmatprep.subr.mxu0 0.0
        %1427 = vmatpush2.msra.mxu0 0.0
        %1428 = vmatprep.subr.mxu0 0.0
        %1429 = vmatpush2.msra.mxu0 0.0
        %1430 = vmatprep.subr.mxu0 0.0
        %1431 = vmatpush2.msra.mxu0 0.0
        %1432 = vmatprep.subr.mxu0 0.0
        %1433 = vmatpush2.msra.mxu0 0.0
        %1434 = vmatprep.subr.mxu0 0.0
        %1435 = vmatpush2.msra.mxu0 0.0
        %1436 = vmatprep.subr.mxu0 0.0
        %1437 = vmatpush2.msra.mxu0 0.0
        %1438 = vmatprep.subr.mxu0 0.0
        %1439 = vmatpush2.msra.mxu0 0.0
        %1440 = vmatprep.subr.mxu0 0.0
        %1441 = vmatpush2.msra.mxu0 0.0
        %1442 = vmatprep.subr.mxu0 0.0
        %1443 = vmatpush2.msra.mxu0 0.0
        %1444 = vmatprep.subr.mxu0 0.0
        %1445 = vmatpush2.msra.mxu0 0.0
        %1446 = vmatprep.subr.mxu0 0.0
        %1447 = vmatpush2.msra.mxu0 0.0
        %1448 = vmatprep.subr.mxu0 0.0
        %1449 = vmatpush2.msra.mxu0 0.0
        %1450 = vmatprep.subr.mxu0 0.0
        %1451 = vmatpush2.msra.mxu0 0.0
        %1452 = vmatprep.mubr.f32.mxu0 0.0
        %1453 = vmatmul.mubr.f32.gmra.mxu0 %v1386
        %v1454 = vpop.f32.mrf.mxu0
        %v1455 = vadd.f32 %v1383, %v1454
        %v1456 = vpop.f32.mrf.mxu0
        %1457 = vdwg.mxu0
        %v1459 = vsel %vm642, %v355, 0
        %v1462 = vsel %vm642, %v356, 0
        %v1465 = vsel %vm642, %v357, 0
        %1467 = vmatprep.subr.mxu0 0.0
        %1468 = vmatpush1.msra.mxu0 0.0
        %1469 = vmatprep.subr.mxu0 0.0
        %1470 = vmatpush1.msra.mxu0 0.0
        %1471 = vmatprep.subr.mxu0 0.0
        %1472 = vmatpush1.msra.mxu0 0.0
        %1473 = vmatprep.subr.mxu0 0.0
        %1474 = vmatpush1.msra.mxu0 0.0
        %1475 = vmatprep.subr.mxu0 0.0
        %1476 = vmatpush1.msra.mxu0 0.0
        %1477 = vmatprep.subr.mxu0 0.0
        %1478 = vmatpush1.msra.mxu0 0.0
        %1479 = vmatprep.subr.mxu0 0.0
        %1480 = vmatpush1.msra.mxu0 0.0
        %1481 = vmatprep.subr.mxu0 0.0
        %1482 = vmatpush1.msra.mxu0 0.0
        %1483 = vmatprep.subr.mxu0 0.0
        %1484 = vmatpush1.msra.mxu0 0.0
        %1485 = vmatprep.subr.mxu0 0.0
        %1486 = vmatpush1.msra.mxu0 0.0
        %1487 = vmatprep.subr.mxu0 0.0
        %1488 = vmatpush1.msra.mxu0 0.0
        %1489 = vmatprep.subr.mxu0 0.0
        %1490 = vmatpush1.msra.mxu0 0.0
        %1491 = vmatprep.subr.mxu0 0.0
        %1492 = vmatpush1.msra.mxu0 0.0
        %1493 = vmatprep.subr.mxu0 0.0
        %1494 = vmatpush1.msra.mxu0 0.0
        %1495 = vmatprep.subr.mxu0 0.0
        %1496 = vmatpush1.msra.mxu0 0.0
        %1497 = vmatprep.subr.mxu0 0.0
        %1498 = vmatpush1.msra.mxu0 %v1455
        %1499 = vmatprep.subr.mxu0 0.0
        %1500 = vmatpush2.msra.mxu0 0.0
        %1501 = vmatprep.subr.mxu0 0.0
        %1502 = vmatpush2.msra.mxu0 0.0
        %1503 = vmatprep.subr.mxu0 0.0
        %1504 = vmatpush2.msra.mxu0 0.0
        %1505 = vmatprep.subr.mxu0 0.0
        %1506 = vmatpush2.msra.mxu0 0.0
        %1507 = vmatprep.subr.mxu0 0.0
        %1508 = vmatpush2.msra.mxu0 0.0
        %1509 = vmatprep.subr.mxu0 0.0
        %1510 = vmatpush2.msra.mxu0 0.0
        %1511 = vmatprep.subr.mxu0 0.0
        %1512 = vmatpush2.msra.mxu0 0.0
        %1513 = vmatprep.subr.mxu0 0.0
        %1514 = vmatpush2.msra.mxu0 0.0
        %1515 = vmatprep.subr.mxu0 0.0
        %1516 = vmatpush2.msra.mxu0 0.0
        %1517 = vmatprep.subr.mxu0 0.0
        %1518 = vmatpush2.msra.mxu0 0.0
        %1519 = vmatprep.subr.mxu0 0.0
        %1520 = vmatpush2.msra.mxu0 0.0
        %1521 = vmatprep.subr.mxu0 0.0
        %1522 = vmatpush2.msra.mxu0 0.0
        %1523 = vmatprep.subr.mxu0 0.0
        %1524 = vmatpush2.msra.mxu0 0.0
        %1525 = vmatprep.subr.mxu0 0.0
        %1526 = vmatpush2.msra.mxu0 0.0
        %1527 = vmatprep.subr.mxu0 0.0
        %1528 = vmatpush2.msra.mxu0 0.0
        %1529 = vmatprep.subr.mxu0 0.0
        %1530 = vmatpush2.msra.mxu0 0.0
        %1531 = vmatprep.mubr.f32.mxu0 0.0
        %1532 = vmatmul.mubr.f32.gmra.mxu0 %v1459
        %v1533 = vpop.f32.mrf.mxu0
        %v1534 = vadd.f32 0.0, %v1533
        %v1535 = vpop.f32.mrf.mxu0
        %1536 = vmatprep.mubr.f32.mxu0 0.0
        %1537 = vmatmul.mubr.f32.gmra.mxu0 %v1462
        %v1538 = vpop.f32.mrf.mxu0
        %v1539 = vadd.f32 0.0, %v1538
        %v1540 = vpop.f32.mrf.mxu0
        %1541 = vmatprep.mubr.f32.mxu0 0.0
        %1542 = vmatmul.mubr.f32.gmra.mxu0 %v1465
        %v1543 = vpop.f32.mrf.mxu0
        %v1544 = vadd.f32 0.0, %v1543
        %v1545 = vpop.f32.mrf.mxu0
        %1546 = vdwg.mxu0
        %v1547 = vsel %vm642, %v355, 0.0
        %1548 = vadd.xlane.f32.xlu0 %v1547
        %v1549 = vpop.xlane.xlu0 %1548
        %v1550 = vsel %vm642, %v356, 0.0
        %1551 = vadd.xlane.f32.xlu0 %v1550
        %v1552 = vpop.xlane.xlu0 %1551
        %vm1553 = vcmask 57344
        %v1554 = vsel %vm1553, %v357, 0.0
        %1555 = vadd.xlane.f32.xlu0 %v1554
        %v1556 = vpop.xlane.xlu0 %1555
        %vm1557 = vcmp.gt.f32.partialorder %v1549, 0.5
        %vm1558 = vcmp.gt.f32.partialorder %v1552, 0.5
        %vm1559 = vcmp.gt.f32.partialorder %v1556, 0.5
        %v1560 = vsel %vm1557, 1, 0
        %v1561 = vsel %vm1558, 1, 0
        %v1562 = vsel %vm1559, 1, 0
        %vm1563 = vcmp.eq.s32.totalorder %v1560, 1
        %vm1564 = vcmp.eq.s32.totalorder %v1561, 1
        %vm1565 = vcmp.eq.s32.totalorder %v1562, 1
        %v1566 = vsel %vm1563, %v1534, %v336
        %v1567 = vsel %vm1564, %v1539, %v337
        %v1568 = vsel %vm1565, %v1544, %v338
        %1569 = vst.msk [vmem:[%s320] sm:$0xff] %vm474, %v1566
        %1570 = vst.msk [vmem:[%s320 + $0x8] sm:$0xff] %vm474, %v1567
        %vm1571 = vcmask 253952
        %1572 = vst.msk [vmem:[%s320 + $0x10] sm:$0x1] %vm1571, %v1568
        %p1573 = scmp.lt.s32.totalorder %s20, 1
        %s1574 = scalar_select %p1573, %s20, 1
        %s1575 = smul.addr %s1574, 3
        %s1576 = smul.addr %s1575, 8
        %s1577 = scalar_lea.vmem %s8, %s1576
        // Predicated region
        $region57: #{tpu_custom_call.1} parent=51 // pred_check
          %p1578 = pneg %p211
        $region58: #{tpu_custom_call.1} parent=51 // pred_check_branch
          %1580 = sbr.rel (%p1578) target = $region60
        $region59: #{tpu_custom_call.1} parent=51 // pred_region
          _
        $region60: #{tpu_custom_call.1} parent=51 // pred_fallthru
          _
      $region52: #{tpu_custom_call.1} parent=5 // pred_fallthru
        _
      %p1581 = scmp.le.s32.totalorder 2, %s15
      // Predicated region
      $region61: #{tpu_custom_call.1} parent=5 // pred_check
        %p1582 = pneg %p1581
      $region62: #{tpu_custom_call.1} parent=5 // pred_check_branch
        %1584 = sbr.rel (%p1582) target = $region64
      $region63: #{tpu_custom_call.1} parent=5 // pred_region
        %s1585 = ssub.s32 %s15, 2
        // Predicated region
        $region65: #{tpu_custom_call.1} parent=63 // pred_check
          %p1586 = pneg %p217
        $region66: #{tpu_custom_call.1} parent=63 // pred_check_branch
          %1588 = sbr.rel (%p1586) target = $region68
        $region67: #{tpu_custom_call.1} parent=63 // pred_region
          %p1589 = scmp.lt.s32.totalorder %s21, 1
          %s1590 = scalar_select %p1589, %s21, 1
          %s1591 = smul.addr %s1590, 3
          %s1592 = smul.addr %s1591, 8
          %s1593 = scalar_lea.vmem %s8, %s1592
        $region68: #{tpu_custom_call.1} parent=63 // pred_fallthru
          _
      $region64: #{tpu_custom_call.1} parent=5 // pred_fallthru
        _
    $region6: #{tpu_custom_call.1} parent=1 // loop_footer
      %s19 = sadd.s32 1, %s15
    $region7: #{tpu_custom_call.1} parent=1 // loop_footer_branch
      %14 = sbr.rel target = $region3
    $region8: #{tpu_custom_call.1} parent=1 // loop_exit
      _
    %1594 = vsyncpa [#allocation4], 1
    %s1595 = scalar_lea.sflag [#allocation4], 1
    %1596 = vsyncpa %s1595, 1

// kernel: tpu_custom_call.1
$region0: #{tpu_custom_call.1}
  #allocation0 [shape = 'u32[]', space=smem, size = 0x4, offset = 0x4, fixed_abs, tag = 'smem constant byte address 0x4 - core index']
  #allocation1 [shape = 'u32[144,128]{1,0:T(1,128)}', space=vmem, size = 0x12000, scoped, tag = 'internal scratch']
  #allocation2 [shape = 'f32[8,32]{1,0:T(8,128)}', space=vmem, size = 0x1000, scoped, tag = 'scratch operand']
  %s0 = inlined_call_operand.vmem [shape: s32[2,8], index: 0, kind: input, shape index: {}]
  %s1 = inlined_call_operand.vmem [shape: f32[2,17,32], index: 1, kind: input, shape index: {}]
  %s2 = inlined_call_operand.vmem [shape: f32[32,32], index: 2, kind: input, shape index: {}]
  %s3 = inlined_call_operand.vmem [shape: f32[1,32], index: 3, kind: input, shape index: {}]
  %s4 = inlined_call_operand.vmem [shape: f32[32,64], index: 4, kind: input, shape index: {}]
  %s5 = inlined_call_operand.vmem [shape: f32[1,64], index: 5, kind: input, shape index: {}]
  %s6 = inlined_call_operand.hbm [shape: f32[32,32], index: 6, kind: input, shape index: {}]
  %s7 = inlined_call_operand.vmem [shape: f32[1,32], index: 7, kind: input, shape index: {}]
  %s8 = inlined_call_operand.vmem [shape: f32[2,17,32], index: 8, kind: output, shape index: {}]
  %s9 = sld [smem:[#allocation0]]
  $region69: #{tpu_custom_call.1} parent=0
    _
  %s11 = ssub.s32 1, %s9
  %s12 = scalar_select 0, %s11, %s9
  $region1: #{tpu_custom_call.1} parent=0
    #allocation3 [shape = 'u8[16384]{0}', space=vmem, size = 0x4000, scoped, tag = 'input window, operand 6, single buffered']
    #allocation4 [shape = 's32[2]{0}', space=sflag, size = 0x8, scoped, tag = 'scoped memory for tpu_custom_call.1']
    %13 = vsyncpa [#allocation4], 0
    loop: start=0, step=1, limit=4
    $region2: #{tpu_custom_call.1} parent=1 // loop_pre_header
      _
    $region3: #{tpu_custom_call.1} parent=1 // loop_header
      %s15 = sphi 0, %s19
      %p16 = scmp.ge.s32.totalorder %s15, 4
      %s23 = sphi 0, %s23
      %s25 = sphi 0, %s23
      %s26 = sphi 0, %s25
      %s40 = sphi 0, %s26
      %s46 = sphi 0, %s48
      %s49 = sphi 0, %s46
      %s50 = sphi 0, %s49
      %s66 = sphi 0, %s50
      %s70 = sphi 0, %s70
      %s72 = sphi 0, %s70
      %s73 = sphi 0, %s72
      %s87 = sphi 0, %s73
      %s91 = sphi 0, %s91
      %s93 = sphi 0, %s91
      %s94 = sphi 0, %s93
      %s108 = sphi 0, %s94
      %s112 = sphi 0, %s112
      %s114 = sphi 0, %s112
      %s115 = sphi 0, %s114
      %s129 = sphi 0, %s115
      %s133 = sphi 0, %s133
      %s135 = sphi 0, %s133
      %s136 = sphi 0, %s135
      %s150 = sphi 0, %s136
      %s154 = sphi 0, %s154
      %s156 = sphi 0, %s154
      %s157 = sphi 0, %s156
      %s171 = sphi 0, %s157
      %s175 = sphi 0, %s175
      %s177 = sphi 0, %s175
      %s178 = sphi 0, %s177
      %s192 = sphi 0, %s178
      %s198 = sphi 0, %s200
      %s201 = sphi 0, %s198
      %s202 = sphi 0, %s201
      %s218 = sphi 0, %s202
    $region4: #{tpu_custom_call.1} parent=1 // loop_header_branch
      %18 = sbr.rel (%p16) target = $region8
    $region5: #{tpu_custom_call.1} parent=1 // loop_body
      %s20 = ssub.s32 %s15, 1
      %s21 = ssub.s32 %s15, 2
      %s22 = sadd.s32 %s15, 1
      %s24 = sadd.s32 %s23, 1
      %p27 = scmp.eq.s32.totalorder %s15, 1
      %p28 = scmp.ne.s32.totalorder %s23, %s25
      %p29 = scmp.eq.s32.totalorder %s15, 0
      %p30 = por %p28, %p29
      %p31 = scmp.ne.s32.totalorder %s23, %s25
      %p32 = scmp.eq.s32.totalorder %s20, 1
      %p33 = por %p31, %p32
      %p34 = scmp.ne.s32.totalorder %s25, %s26
      %p35 = scmp.eq.s32.totalorder %s20, 0
      %p36 = por %p34, %p35
      %p37 = scmp.ne.s32.totalorder %s25, %s26
      %p38 = scmp.eq.s32.totalorder %s21, 1
      %p39 = por %p37, %p38
      %p41 = scmp.ne.s32.totalorder %s26, %s40
      %p42 = scmp.eq.s32.totalorder %s21, 0
      %p43 = por %p41, %p42
      %s44 = ssub.s32 %s15, %s22
      %p45 = scmp.eq.s32.totalorder %s44, 0
      %s47 = sadd.s32 %s46, 1
      %s48 = scalar_select %p45, %s46, %s47
      %p51 = pneg %p45
      %p52 = scmp.eq.s32.totalorder %s15, 1
      %p53 = por %p51, %p52
      %p54 = scmp.ne.s32.totalorder %s46, %s49
      %p55 = scmp.eq.s32.totalorder %s15, 0
      %p56 = por %p54, %p55
      %p57 = scmp.ne.s32.totalorder %s46, %s49
      %p58 = scmp.eq.s32.totalorder %s20, 1
      %p59 = por %p57, %p58
      %p60 = scmp.ne.s32.totalorder %s49, %s50
      %p61 = scmp.eq.s32.totalorder %s20, 0
      %p62 = por %p60, %p61
      %p63 = scmp.ne.s32.totalorder %s49, %s50
      %p64 = scmp.eq.s32.totalorder %s21, 1
      %p65 = por %p63, %p64
      %p67 = scmp.ne.s32.totalorder %s50, %s66
      %p68 = scmp.eq.s32.totalorder %s21, 0
      %p69 = por %p67, %p68
      %s71 = sadd.s32 %s70, 1
      %p74 = scmp.eq.s32.totalorder %s15, 1
      %p75 = scmp.ne.s32.totalorder %s70, %s72
      %p76 = scmp.eq.s32.totalorder %s15, 0
      %p77 = por %p75, %p76
      %p78 = scmp.ne.s32.totalorder %s70, %s72
      %p79 = scmp.eq.s32.totalorder %s20, 1
      %p80 = por %p78, %p79
      %p81 = scmp.ne.s32.totalorder %s72, %s73
      %p82 = scmp.eq.s32.totalorder %s20, 0
      %p83 = por %p81, %p82
      %p84 = scmp.ne.s32.totalorder %s72, %s73
      %p85 = scmp.eq.s32.totalorder %s21, 1
      %p86 = por %p84, %p85
      %p88 = scmp.ne.s32.totalorder %s73, %s87
      %p89 = scmp.eq.s32.totalorder %s21, 0
      %p90 = por %p88, %p89
      %s92 = sadd.s32 %s91, 1
      %p95 = scmp.eq.s32.totalorder %s15, 1
      %p96 = scmp.ne.s32.totalorder %s91, %s93
      %p97 = scmp.eq.s32.totalorder %s15, 0
      %p98 = por %p96, %p97
      %p99 = scmp.ne.s32.totalorder %s91, %s93
      %p100 = scmp.eq.s32.totalorder %s20, 1
      %p101 = por %p99, %p100
      %p102 = scmp.ne.s32.totalorder %s93, %s94
      %p103 = scmp.eq.s32.totalorder %s20, 0
      %p104 = por %p102, %p103
      %p105 = scmp.ne.s32.totalorder %s93, %s94
      %p106 = scmp.eq.s32.totalorder %s21, 1
      %p107 = por %p105, %p106
      %p109 = scmp.ne.s32.totalorder %s94, %s108
      %p110 = scmp.eq.s32.totalorder %s21, 0
      %p111 = por %p109, %p110
      %s113 = sadd.s32 %s112, 1
      %p116 = scmp.eq.s32.totalorder %s15, 1
      %p117 = scmp.ne.s32.totalorder %s112, %s114
      %p118 = scmp.eq.s32.totalorder %s15, 0
      %p119 = por %p117, %p118
      %p120 = scmp.ne.s32.totalorder %s112, %s114
      %p121 = scmp.eq.s32.totalorder %s20, 1
      %p122 = por %p120, %p121
      %p123 = scmp.ne.s32.totalorder %s114, %s115
      %p124 = scmp.eq.s32.totalorder %s20, 0
      %p125 = por %p123, %p124
      %p126 = scmp.ne.s32.totalorder %s114, %s115
      %p127 = scmp.eq.s32.totalorder %s21, 1
      %p128 = por %p126, %p127
      %p130 = scmp.ne.s32.totalorder %s115, %s129
      %p131 = scmp.eq.s32.totalorder %s21, 0
      %p132 = por %p130, %p131
      %s134 = sadd.s32 %s133, 1
      %p137 = scmp.eq.s32.totalorder %s15, 1
      %p138 = scmp.ne.s32.totalorder %s133, %s135
      %p139 = scmp.eq.s32.totalorder %s15, 0
      %p140 = por %p138, %p139
      %p141 = scmp.ne.s32.totalorder %s133, %s135
      %p142 = scmp.eq.s32.totalorder %s20, 1
      %p143 = por %p141, %p142
      %p144 = scmp.ne.s32.totalorder %s135, %s136
      %p145 = scmp.eq.s32.totalorder %s20, 0
      %p146 = por %p144, %p145
      %p147 = scmp.ne.s32.totalorder %s135, %s136
      %p148 = scmp.eq.s32.totalorder %s21, 1
      %p149 = por %p147, %p148
      %p151 = scmp.ne.s32.totalorder %s136, %s150
      %p152 = scmp.eq.s32.totalorder %s21, 0
      %p153 = por %p151, %p152
      %s155 = sadd.s32 %s154, 1
      %p158 = scmp.eq.s32.totalorder %s15, 1
      %p159 = scmp.ne.s32.totalorder %s154, %s156
      %p160 = scmp.eq.s32.totalorder %s15, 0
      %p161 = por %p159, %p160
      %p162 = scmp.ne.s32.totalorder %s154, %s156
      %p163 = scmp.eq.s32.totalorder %s20, 1
      %p164 = por %p162, %p163
      %p165 = scmp.ne.s32.totalorder %s156, %s157
      %p166 = scmp.eq.s32.totalorder %s20, 0
      %p167 = por %p165, %p166
      %p168 = scmp.ne.s32.totalorder %s156, %s157
      %p169 = scmp.eq.s32.totalorder %s21, 1
      %p170 = por %p168, %p169
      %p172 = scmp.ne.s32.totalorder %s157, %s171
      %p173 = scmp.eq.s32.totalorder %s21, 0
      %p174 = por %p172, %p173
      %s176 = sadd.s32 %s175, 1
      %p179 = scmp.eq.s32.totalorder %s15, 1
      %p180 = scmp.ne.s32.totalorder %s175, %s177
      %p181 = scmp.eq.s32.totalorder %s15, 0
      %p182 = por %p180, %p181
      %p183 = scmp.ne.s32.totalorder %s175, %s177
      %p184 = scmp.eq.s32.totalorder %s20, 1
      %p185 = por %p183, %p184
      %p186 = scmp.ne.s32.totalorder %s177, %s178
      %p187 = scmp.eq.s32.totalorder %s20, 0
      %p188 = por %p186, %p187
      %p189 = scmp.ne.s32.totalorder %s177, %s178
      %p190 = scmp.eq.s32.totalorder %s21, 1
      %p191 = por %p189, %p190
      %p193 = scmp.ne.s32.totalorder %s178, %s192
      %p194 = scmp.eq.s32.totalorder %s21, 0
      %p195 = por %p193, %p194
      %s196 = ssub.s32 %s15, %s22
      %p197 = scmp.eq.s32.totalorder %s196, 0
      %s199 = sadd.s32 %s198, 1
      %s200 = scalar_select %p197, %s198, %s199
      %p203 = pneg %p197
      %p204 = scmp.eq.s32.totalorder %s15, 1
      %p205 = por %p203, %p204
      %p206 = scmp.ne.s32.totalorder %s198, %s201
      %p207 = scmp.eq.s32.totalorder %s15, 0
      %p208 = por %p206, %p207
      %p209 = scmp.ne.s32.totalorder %s198, %s201
      %p210 = scmp.eq.s32.totalorder %s20, 1
      %p211 = por %p209, %p210
      %p212 = scmp.ne.s32.totalorder %s201, %s202
      %p213 = scmp.eq.s32.totalorder %s20, 0
      %p214 = por %p212, %p213
      %p215 = scmp.ne.s32.totalorder %s201, %s202
      %p216 = scmp.eq.s32.totalorder %s21, 1
      %p217 = por %p215, %p216
      %p219 = scmp.ne.s32.totalorder %s202, %s218
      %p220 = scmp.eq.s32.totalorder %s21, 0
      %p221 = por %p219, %p220
      %p222 = scmp.le.s32.totalorder 1, %s15
      %p223 = scmp.lt.s32.totalorder %s15, 3
      %p224 = pnand %p222, %p223
      %p225 = pneg %p224
      // Predicated region
      $region9: #{tpu_custom_call.1} parent=5 // pred_check
        _
      $region10: #{tpu_custom_call.1} parent=5 // pred_check_branch
        %227 = sbr.rel (%p224) target = $region12
      $region11: #{tpu_custom_call.1} parent=5 // pred_region
        %s228 = ssub.s32 %s15, 1
        // Predicated region
        $region13: #{tpu_custom_call.1} parent=11 // pred_check
          %p229 = pneg %p36
        $region14: #{tpu_custom_call.1} parent=11 // pred_check_branch
          %231 = sbr.rel (%p229) target = $region16
        $region15: #{tpu_custom_call.1} parent=11 // pred_region
          _
        $region16: #{tpu_custom_call.1} parent=11 // pred_fallthru
          _
        // Predicated region
        $region17: #{tpu_custom_call.1} parent=11 // pred_check
          %p232 = pneg %p83
        $region18: #{tpu_custom_call.1} parent=11 // pred_check_branch
          %234 = sbr.rel (%p232) target = $region20
        $region19: #{tpu_custom_call.1} parent=11 // pred_region
          _
        $region20: #{tpu_custom_call.1} parent=11 // pred_fallthru
          _
        // Predicated region
        $region21: #{tpu_custom_call.1} parent=11 // pred_check
          %p235 = pneg %p104
        $region22: #{tpu_custom_call.1} parent=11 // pred_check_branch
          %237 = sbr.rel (%p235) target = $region24
        $region23: #{tpu_custom_call.1} parent=11 // pred_region
          _
        $region24: #{tpu_custom_call.1} parent=11 // pred_fallthru
          _
        // Predicated region
        $region25: #{tpu_custom_call.1} parent=11 // pred_check
          %p238 = pneg %p125
        $region26: #{tpu_custom_call.1} parent=11 // pred_check_branch
          %240 = sbr.rel (%p238) target = $region28
        $region27: #{tpu_custom_call.1} parent=11 // pred_region
          _
        $region28: #{tpu_custom_call.1} parent=11 // pred_fallthru
          _
        // Predicated region
        $region29: #{tpu_custom_call.1} parent=11 // pred_check
          %p241 = pneg %p146
        $region30: #{tpu_custom_call.1} parent=11 // pred_check_branch
          %243 = sbr.rel (%p241) target = $region32
        $region31: #{tpu_custom_call.1} parent=11 // pred_region
          _
        $region32: #{tpu_custom_call.1} parent=11 // pred_fallthru
          _
        // Predicated region
        $region33: #{tpu_custom_call.1} parent=11 // pred_check
          %p244 = pneg %p167
        $region34: #{tpu_custom_call.1} parent=11 // pred_check_branch
          %246 = sbr.rel (%p244) target = $region36
        $region35: #{tpu_custom_call.1} parent=11 // pred_region
          %s248 = ssub.s32 512, 512
          %249 = vsyncadd [#allocation4], %s248
          %s250 = sshll.u32 [#allocation3], 4
          %s251 = int_to_ptr.vmem [resolvable:$true] %s250
          %256 = dma.hbm_to_vmem [thread:$0]  %s6, 512, %s251, [#allocation4], 128, 128, 8
        $region36: #{tpu_custom_call.1} parent=11 // pred_fallthru
          _
        // Predicated region
        $region37: #{tpu_custom_call.1} parent=11 // pred_check
          %p257 = pneg %p188
        $region38: #{tpu_custom_call.1} parent=11 // pred_check_branch
          %259 = sbr.rel (%p257) target = $region40
        $region39: #{tpu_custom_call.1} parent=11 // pred_region
          _
        $region40: #{tpu_custom_call.1} parent=11 // pred_fallthru
          _
      $region12: #{tpu_custom_call.1} parent=5 // pred_fallthru
        _
      %p260 = scmp.lt.s32.totalorder %s15, 2
      // Predicated region
      $region41: #{tpu_custom_call.1} parent=5 // pred_check
        %p261 = pneg %p260
      $region42: #{tpu_custom_call.1} parent=5 // pred_check_branch
        %263 = sbr.rel (%p261) target = $region44
      $region43: #{tpu_custom_call.1} parent=5 // pred_region
        // Predicated region
        $region45: #{tpu_custom_call.1} parent=43 // pred_check
          %p264 = pneg %p56
        $region46: #{tpu_custom_call.1} parent=43 // pred_check_branch
          %266 = sbr.rel (%p264) target = $region48
        $region47: #{tpu_custom_call.1} parent=43 // pred_region
          %p267 = scmp.lt.s32.totalorder %s15, 1
          %s268 = scalar_select %p267, %s15, 1
          %s269 = smul.addr %s268, 3
          %s270 = smul.addr %s269, 8
          %s271 = scalar_lea.vmem %s1, %s270
        $region48: #{tpu_custom_call.1} parent=43 // pred_fallthru
          _
      $region44: #{tpu_custom_call.1} parent=5 // pred_fallthru
        _
      %p272 = scmp.le.s32.totalorder 1, %s15
      %p273 = scmp.lt.s32.totalorder %s15, 3
      %p274 = pnand %p272, %p273
      %p275 = pneg %p274
      // Predicated region
      $region49: #{tpu_custom_call.1} parent=5 // pred_check
        _
      $region50: #{tpu_custom_call.1} parent=5 // pred_check_branch
        %277 = sbr.rel (%p274) target = $region52
      $region51: #{tpu_custom_call.1} parent=5 // pred_region
        %s278 = ssub.s32 %s15, 1
        // Predicated region
        $region53: #{tpu_custom_call.1} parent=51 // pred_check
          %p279 = pneg %p167
        $region54: #{tpu_custom_call.1} parent=51 // pred_check_branch
          %281 = sbr.rel (%p279) target = $region56
        $region55: #{tpu_custom_call.1} parent=51 // pred_region
          %282 = dma.done [#allocation4], 512
        $region56: #{tpu_custom_call.1} parent=51 // pred_fallthru
          _
        %p283 = pneg %p36
        %p284 = pneg %p33
        %p285 = scmp.lt.s32.totalorder %s20, 1
        %s286 = scalar_select %p285, %s20, 1
        %s287 = smul.addr %s286, 3
        %s288 = smul.addr %s287, 8
        %s289 = scalar_lea.vmem %s1, %s288
        %p290 = pneg %p62
        %p291 = pneg %p59
        %p292 = pneg %p83
        %p293 = pneg %p80
        %p294 = pneg %p104
        %p295 = pneg %p101
        %p296 = pneg %p125
        %p297 = pneg %p122
        %p298 = pneg %p146
        %p299 = pneg %p143
        %p300 = pneg %p167
        %p301 = pneg %p164
        %p302 = pneg %p188
        %p303 = pneg %p185
        %p304 = pneg %p214
        %p305 = pneg %p211
        %p306 = scmp.lt.s32.totalorder %s20, 1
        %s307 = scalar_select %p306, %s20, 1
        %s308 = smul.addr %s307, 3
        %s309 = smul.addr %s308, 8
        %s310 = scalar_lea.vmem %s8, %s309
        %p311 = scmp.lt.s32.totalorder %s20, 1
        %s312 = scalar_select %p311, %s20, 1
        %s313 = smul.addr %s312, 3
        %s314 = smul.addr %s313, 8
        %s315 = scalar_lea.vmem %s1, %s314
        %p316 = scmp.lt.s32.totalorder %s20, 1
        %s317 = scalar_select %p316, %s20, 1
        %s318 = smul.addr %s317, 3
        %s319 = smul.addr %s318, 8
        %s320 = scalar_lea.vmem %s8, %s319
        %v321 = vld [vmem:[%s2] sm:$0xff]
        %v322 = vld [vmem:[%s2 + $0x8] sm:$0xff]
        %v323 = vld [vmem:[%s2 + $0x10] sm:$0xff]
        %v324 = vld [vmem:[%s2 + $0x18] sm:$0xff]
        %v325 = vld [vmem:[%s4] sm:$0xff]
        %v326 = vld [vmem:[%s4 + $0x8] sm:$0xff]
        %v327 = vld [vmem:[%s4 + $0x10] sm:$0xff]
        %v328 = vld [vmem:[%s4 + $0x18] sm:$0xff]
        %v329 = vld [vmem:[#allocation3] sm:$0xff]
        %v330 = vld [vmem:[#allocation3 + $0x8] sm:$0xff]
        %v331 = vld [vmem:[#allocation3 + $0x10] sm:$0xff]
        %v332 = vld [vmem:[#allocation3 + $0x18] sm:$0xff]
        %v333 = vld [vmem:[%s3] sm:$0x1]
        %v334 = vld [vmem:[%s5] sm:$0x1]
        %v335 = vld [vmem:[%s7] sm:$0x1]
        %v336 = vld [vmem:[%s315] sm:$0xff]
        %v337 = vld [vmem:[%s315 + $0x8] sm:$0xff]
        %v338 = vld [vmem:[%s315 + $0x10] sm:$0x1]
        %s339 = scalar_lea.vmem %s0, %s20
        %v340 = vld [vmem:[%s339] sm:$0x1]
        %v341 = vlaneseq
        %v342 = vshrl.u32 %v341, 7
        %v343 = vadd.s32 %v342, 8
        %v344 = vadd.s32 %v342, 16
        %v345 = vlaneseq
        %v346 = vshrl.u32 %v345, 7
        %v347 = vsub.s32 0, %v346
        %v348 = vrot.slane %v340, %v347
        %vm349 = vcmp.eq.s32.totalorder %v342, %v348
        %vm350 = vcmp.eq.s32.totalorder %v343, %v348
        %vm351 = vcmp.eq.s32.totalorder %v344, %v348
        %v352 = vsel %vm349, 1, 0
        %v353 = vsel %vm350, 1, 0
        %v354 = vsel %vm351, 1, 0
        %v355 = vcvt.s32.f32 %v352
        %v356 = vcvt.s32.f32 %v353
        %v357 = vcvt.s32.f32 %v354
        %358 = vxpose.xlu0.b32.start [1/16] %v355, 128
        %359 = vxpose.xlu0.b32.cont [2/16] %v356, 128
        %360 = vxpose.xlu0.b32.cont [3/16] %v357, 128
        %361 = vxpose.xlu0.b32.cont [4/16] 0.0, 128
        %362 = vxpose.xlu0.b32.cont [5/16] 0.0, 128
        %363 = vxpose.xlu0.b32.cont [6/16] 0.0, 128
        %364 = vxpose.xlu0.b32.cont [7/16] 0.0, 128
        %365 = vxpose.xlu0.b32.cont [8/16] 0.0, 128
        %366 = vxpose.xlu0.b32.cont [9/16] 0.0, 128
        %367 = vxpose.xlu0.b32.cont [10/16] 0.0, 128
        %368 = vxpose.xlu0.b32.cont [11/16] 0.0, 128
        %369 = vxpose.xlu0.b32.cont [12/16] 0.0, 128
        %370 = vxpose.xlu0.b32.cont [13/16] 0.0, 128
        %371 = vxpose.xlu0.b32.cont [14/16] 0.0, 128
        %372 = vxpose.xlu0.b32.cont [15/16] 0.0, 128
        %373 = vxpose.xlu0.b32.end [16/16] 0.0, 128
        %v374 = vpop.trf.xlu0
        %v375 = vpop.trf.xlu0
        %v376 = vpop.trf.xlu0
        %v377 = vpop.trf.xlu0
        %v378 = vpop.trf.xlu0
        %v379 = vpop.trf.xlu0
        %v380 = vpop.trf.xlu0
        %v381 = vpop.trf.xlu0
        %v382 = vpop.trf.xlu0
        %v383 = vpop.trf.xlu0
        %v384 = vpop.trf.xlu0
        %v385 = vpop.trf.xlu0
        %v386 = vpop.trf.xlu0
        %v387 = vpop.trf.xlu0
        %v388 = vpop.trf.xlu0
        %v389 = vpop.trf.xlu0
        %vm390 = vcmask 138240
        %v392 = vsel %vm390, %v374, 0
        %vm394 = vcmask 1040384
        %v396 = vsel %vm394, %v338, 0
        %398 = vmatprep.subr.mxu0 0.0
        %399 = vmatpush1.msra.mxu0 0.0
        %400 = vmatprep.subr.mxu0 0.0
        %401 = vmatpush1.msra.mxu0 0.0
        %402 = vmatprep.subr.mxu0 0.0
        %403 = vmatpush1.msra.mxu0 0.0
        %404 = vmatprep.subr.mxu0 0.0
        %405 = vmatpush1.msra.mxu0 0.0
        %406 = vmatprep.subr.mxu0 0.0
        %407 = vmatpush1.msra.mxu0 0.0
        %408 = vmatprep.subr.mxu0 0.0
        %409 = vmatpush1.msra.mxu0 0.0
        %410 = vmatprep.subr.mxu0 0.0
        %411 = vmatpush1.msra.mxu0 0.0
        %412 = vmatprep.subr.mxu0 0.0
        %413 = vmatpush1.msra.mxu0 0.0
        %414 = vmatprep.subr.mxu0 0.0
        %415 = vmatpush1.msra.mxu0 0.0
        %416 = vmatprep.subr.mxu0 0.0
        %417 = vmatpush1.msra.mxu0 0.0
        %418 = vmatprep.subr.mxu0 0.0
        %419 = vmatpush1.msra.mxu0 0.0
        %420 = vmatprep.subr.mxu0 0.0
        %421 = vmatpush1.msra.mxu0 0.0
        %422 = vmatprep.subr.mxu0 0.0
        %423 = vmatpush1.msra.mxu0 0.0
        %424 = vmatprep.subr.mxu0 0.0
        %425 = vmatpush1.msra.mxu0 %v396
        %426 = vmatprep.subr.mxu0 0.0
        %427 = vmatpush1.msra.mxu0 %v337
        %428 = vmatprep.subr.mxu0 0.0
        %429 = vmatpush1.msra.mxu0 %v336
        %430 = vmatprep.subr.mxu0 0.0
        %431 = vmatpush2.msra.mxu0 0.0
        %432 = vmatprep.subr.mxu0 0.0
        %433 = vmatpush2.msra.mxu0 0.0
        %434 = vmatprep.subr.mxu0 0.0
        %435 = vmatpush2.msra.mxu0 0.0
        %436 = vmatprep.subr.mxu0 0.0
        %437 = vmatpush2.msra.mxu0 0.0
        %438 = vmatprep.subr.mxu0 0.0
        %439 = vmatpush2.msra.mxu0 0.0
        %440 = vmatprep.subr.mxu0 0.0
        %441 = vmatpush2.msra.mxu0 0.0
        %442 = vmatprep.subr.mxu0 0.0
        %443 = vmatpush2.msra.mxu0 0.0
        %444 = vmatprep.subr.mxu0 0.0
        %445 = vmatpush2.msra.mxu0 0.0
        %446 = vmatprep.subr.mxu0 0.0
        %447 = vmatpush2.msra.mxu0 0.0
        %448 = vmatprep.subr.mxu0 0.0
        %449 = vmatpush2.msra.mxu0 0.0
        %450 = vmatprep.subr.mxu0 0.0
        %451 = vmatpush2.msra.mxu0 0.0
        %452 = vmatprep.subr.mxu0 0.0
        %453 = vmatpush2.msra.mxu0 0.0
        %454 = vmatprep.subr.mxu0 0.0
        %455 = vmatpush2.msra.mxu0 0.0
        %456 = vmatprep.subr.mxu0 0.0
        %457 = vmatpush2.msra.mxu0 0.0
        %458 = vmatprep.subr.mxu0 0.0
        %459 = vmatpush2.msra.mxu0 0.0
        %460 = vmatprep.subr.mxu0 0.0
        %461 = vmatpush2.msra.mxu0 0.0
        %462 = vmatprep.mubr.f32.mxu0 0.0
        %463 = vmatmul.mubr.f32.gmra.mxu0 %v392
        %v464 = vpop.f32.mrf.mxu0
        %v465 = vadd.f32 0.0, %v464
        %v466 = vpop.f32.mrf.mxu0
        %467 = vdwg.mxu0
        %v469 = vlaneseq
        %v470 = vshrl.u32 %v469, 7
        %v471 = vsub.s32 0, %v470
        %v472 = vrot.slane %v333, %v471
        %vm474 = vcmask 261120
        %v476 = vsel %vm474, %v465, 0
        %478 = vmatprep.subr.mxu0 0.0
        %479 = vmatpush1.msra.mxu0 0.0
        %480 = vmatprep.subr.mxu0 0.0
        %481 = vmatpush1.msra.mxu0 0.0
        %482 = vmatprep.subr.mxu0 0.0
        %483 = vmatpush1.msra.mxu0 0.0
        %484 = vmatprep.subr.mxu0 0.0
        %485 = vmatpush1.msra.mxu0 0.0
        %486 = vmatprep.subr.mxu0 0.0
        %487 = vmatpush1.msra.mxu0 0.0
        %488 = vmatprep.subr.mxu0 0.0
        %489 = vmatpush1.msra.mxu0 0.0
        %490 = vmatprep.subr.mxu0 0.0
        %491 = vmatpush1.msra.mxu0 0.0
        %492 = vmatprep.subr.mxu0 0.0
        %493 = vmatpush1.msra.mxu0 0.0
        %494 = vmatprep.subr.mxu0 0.0
        %495 = vmatpush1.msra.mxu0 0.0
        %496 = vmatprep.subr.mxu0 0.0
        %497 = vmatpush1.msra.mxu0 0.0
        %498 = vmatprep.subr.mxu0 0.0
        %499 = vmatpush1.msra.mxu0 0.0
        %500 = vmatprep.subr.mxu0 0.0
        %501 = vmatpush1.msra.mxu0 0.0
        %502 = vmatprep.subr.mxu0 0.0
        %503 = vmatpush1.msra.mxu0 %v324
        %504 = vmatprep.subr.mxu0 0.0
        %505 = vmatpush1.msra.mxu0 %v323
        %506 = vmatprep.subr.mxu0 0.0
        %507 = vmatpush1.msra.mxu0 %v322
        %508 = vmatprep.subr.mxu0 0.0
        %509 = vmatpush1.msra.mxu0 %v321
        %510 = vmatprep.subr.mxu0 0.0
        %511 = vmatpush2.msra.mxu0 0.0
        %512 = vmatprep.subr.mxu0 0.0
        %513 = vmatpush2.msra.mxu0 0.0
        %514 = vmatprep.subr.mxu0 0.0
        %515 = vmatpush2.msra.mxu0 0.0
        %516 = vmatprep.subr.mxu0 0.0
        %517 = vmatpush2.msra.mxu0 0.0
        %518 = vmatprep.subr.mxu0 0.0
        %519 = vmatpush2.msra.mxu0 0.0
        %520 = vmatprep.subr.mxu0 0.0
        %521 = vmatpush2.msra.mxu0 0.0
        %522 = vmatprep.subr.mxu0 0.0
        %523 = vmatpush2.msra.mxu0 0.0
        %524 = vmatprep.subr.mxu0 0.0
        %525 = vmatpush2.msra.mxu0 0.0
        %526 = vmatprep.subr.mxu0 0.0
        %527 = vmatpush2.msra.mxu0 0.0
        %528 = vmatprep.subr.mxu0 0.0
        %529 = vmatpush2.msra.mxu0 0.0
        %530 = vmatprep.subr.mxu0 0.0
        %531 = vmatpush2.msra.mxu0 0.0
        %532 = vmatprep.subr.mxu0 0.0
        %533 = vmatpush2.msra.mxu0 0.0
        %534 = vmatprep.subr.mxu0 0.0
        %535 = vmatpush2.msra.mxu0 0.0
        %536 = vmatprep.subr.mxu0 0.0
        %537 = vmatpush2.msra.mxu0 0.0
        %538 = vmatprep.subr.mxu0 0.0
        %539 = vmatpush2.msra.mxu0 0.0
        %540 = vmatprep.subr.mxu0 0.0
        %541 = vmatpush2.msra.mxu0 0.0
        %542 = vmatprep.mubr.f32.mxu0 0.0
        %543 = vmatmul.mubr.f32.gmra.mxu0 %v476
        %v544 = vpop.f32.mrf.mxu0
        %v545 = vadd.f32 %v472, %v544
        %v546 = vpop.f32.mrf.mxu0
        %547 = vdwg.mxu0
        %v549 = vlaneseq
        %v550 = vshrl.u32 %v549, 7
        %v551 = vsub.s32 0, %v550
        %v552 = vrot.slane %v334, %v551
        %v555 = vsel %vm474, %v336, 0
        %v558 = vsel %vm474, %v337, 0
        %v560 = vsel %vm474, %v338, 0
        %562 = vmatprep.subr.mxu0 0.0
        %563 = vmatpush1.msra.mxu0 0.0
        %564 = vmatprep.subr.mxu0 0.0
        %565 = vmatpush1.msra.mxu0 0.0
        %566 = vmatprep.subr.mxu0 0.0
        %567 = vmatpush1.msra.mxu0 0.0
        %568 = vmatprep.subr.mxu0 0.0
        %569 = vmatpush1.msra.mxu0 0.0
        %570 = vmatprep.subr.mxu0 0.0
        %571 = vmatpush1.msra.mxu0 0.0
        %572 = vmatprep.subr.mxu0 0.0
        %573 = vmatpush1.msra.mxu0 0.0
        %574 = vmatprep.subr.mxu0 0.0
        %575 = vmatpush1.msra.mxu0 0.0
        %576 = vmatprep.subr.mxu0 0.0
        %577 = vmatpush1.msra.mxu0 0.0
        %578 = vmatprep.subr.mxu0 0.0
        %579 = vmatpush1.msra.mxu0 0.0
        %580 = vmatprep.subr.mxu0 0.0
        %581 = vmatpush1.msra.mxu0 0.0
        %582 = vmatprep.subr.mxu0 0.0
        %583 = vmatpush1.msra.mxu0 0.0
        %584 = vmatprep.subr.mxu0 0.0
        %585 = vmatpush1.msra.mxu0 0.0
        %586 = vmatprep.subr.mxu0 0.0
        %587 = vmatpush1.msra.mxu0 %v328
        %588 = vmatprep.subr.mxu0 0.0
        %589 = vmatpush1.msra.mxu0 %v327
        %590 = vmatprep.subr.mxu0 0.0
        %591 = vmatpush1.msra.mxu0 %v326
        %592 = vmatprep.subr.mxu0 0.0
        %593 = vmatpush1.msra.mxu0 %v325
        %594 = vmatprep.subr.mxu0 0.0
        %595 = vmatpush2.msra.mxu0 0.0
        %596 = vmatprep.subr.mxu0 0.0
        %597 = vmatpush2.msra.mxu0 0.0
        %598 = vmatprep.subr.mxu0 0.0
        %599 = vmatpush2.msra.mxu0 0.0
        %600 = vmatprep.subr.mxu0 0.0
        %601 = vmatpush2.msra.mxu0 0.0
        %602 = vmatprep.subr.mxu0 0.0
        %603 = vmatpush2.msra.mxu0 0.0
        %604 = vmatprep.subr.mxu0 0.0
        %605 = vmatpush2.msra.mxu0 0.0
        %606 = vmatprep.subr.mxu0 0.0
        %607 = vmatpush2.msra.mxu0 0.0
        %608 = vmatprep.subr.mxu0 0.0
        %609 = vmatpush2.msra.mxu0 0.0
        %610 = vmatprep.subr.mxu0 0.0
        %611 = vmatpush2.msra.mxu0 0.0
        %612 = vmatprep.subr.mxu0 0.0
        %613 = vmatpush2.msra.mxu0 0.0
        %614 = vmatprep.subr.mxu0 0.0
        %615 = vmatpush2.msra.mxu0 0.0
        %616 = vmatprep.subr.mxu0 0.0
        %617 = vmatpush2.msra.mxu0 0.0
        %618 = vmatprep.subr.mxu0 0.0
        %619 = vmatpush2.msra.mxu0 0.0
        %620 = vmatprep.subr.mxu0 0.0
        %621 = vmatpush2.msra.mxu0 0.0
        %622 = vmatprep.subr.mxu0 0.0
        %623 = vmatpush2.msra.mxu0 0.0
        %624 = vmatprep.subr.mxu0 0.0
        %625 = vmatpush2.msra.mxu0 0.0
        %626 = vmatprep.mubr.f32.mxu0 0.0
        %627 = vmatmul.mubr.f32.gmra.mxu0 %v555
        %v628 = vpop.f32.mrf.mxu0
        %v629 = vadd.f32 %v552, %v628
        %v630 = vpop.f32.mrf.mxu0
        %631 = vmatprep.mubr.f32.mxu0 0.0
        %632 = vmatmul.mubr.f32.gmra.mxu0 %v558
        %v633 = vpop.f32.mrf.mxu0
        %v634 = vadd.f32 %v552, %v633
        %v635 = vpop.f32.mrf.mxu0
        %636 = vmatprep.mubr.f32.mxu0 0.0
        %637 = vmatmul.mubr.f32.gmra.mxu0 %v560
        %v638 = vpop.f32.mrf.mxu0
        %v639 = vadd.f32 %v552, %v638
        %v640 = vpop.f32.mrf.mxu0
        %641 = vdwg.mxu0
        %vm642 = vcmask 64512
        %v644 = vsel %vm642, %v545, 0
        %v647 = vsel %vm642, %v629, 0
        %v650 = vsel %vm642, %v634, 0
        %v653 = vsel %vm642, %v639, 0
        %655 = vmatprep.subr.mxu0 0.0
        %656 = vmatpush1.xpose.msra.mxu0 0.0
        %657 = vmatprep.subr.mxu0 0.0
        %658 = vmatpush1.xpose.msra.mxu0 0.0
        %659 = vmatprep.subr.mxu0 0.0
        %660 = vmatpush1.xpose.msra.mxu0 0.0
        %661 = vmatprep.subr.mxu0 0.0
        %662 = vmatpush1.xpose.msra.mxu0 0.0
        %663 = vmatprep.subr.mxu0 0.0
        %664 = vmatpush1.xpose.msra.mxu0 0.0
        %665 = vmatprep.subr.mxu0 0.0
        %666 = vmatpush1.xpose.msra.mxu0 0.0
        %667 = vmatprep.subr.mxu0 0.0
        %668 = vmatpush1.xpose.msra.mxu0 0.0
        %669 = vmatprep.subr.mxu0 0.0
        %670 = vmatpush1.xpose.msra.mxu0 0.0
        %671 = vmatprep.subr.mxu0 0.0
        %672 = vmatpush1.xpose.msra.mxu0 0.0
        %673 = vmatprep.subr.mxu0 0.0
        %674 = vmatpush1.xpose.msra.mxu0 0.0
        %675 = vmatprep.subr.mxu0 0.0
        %676 = vmatpush1.xpose.msra.mxu0 0.0
        %677 = vmatprep.subr.mxu0 0.0
        %678 = vmatpush1.xpose.msra.mxu0 0.0
        %679 = vmatprep.subr.mxu0 0.0
        %680 = vmatpush1.xpose.msra.mxu0 0.0
        %681 = vmatprep.subr.mxu0 0.0
        %682 = vmatpush1.xpose.msra.mxu0 %v653
        %683 = vmatprep.subr.mxu0 0.0
        %684 = vmatpush1.xpose.msra.mxu0 %v650
        %685 = vmatprep.subr.mxu0 0.0
        %686 = vmatpush1.xpose.msra.mxu0 %v647
        %687 = vmatprep.subr.mxu0 0.0
        %688 = vmatpush2.xpose.msra.mxu0 0.0
        %689 = vmatprep.subr.mxu0 0.0
        %690 = vmatpush2.xpose.msra.mxu0 0.0
        %691 = vmatprep.subr.mxu0 0.0
        %692 = vmatpush2.xpose.msra.mxu0 0.0
        %693 = vmatprep.subr.mxu0 0.0
        %694 = vmatpush2.xpose.msra.mxu0 0.0
        %695 = vmatprep.subr.mxu0 0.0
        %696 = vmatpush2.xpose.msra.mxu0 0.0
        %697 = vmatprep.subr.mxu0 0.0
        %698 = vmatpush2.xpose.msra.mxu0 0.0
        %699 = vmatprep.subr.mxu0 0.0
        %700 = vmatpush2.xpose.msra.mxu0 0.0
        %701 = vmatprep.subr.mxu0 0.0
        %702 = vmatpush2.xpose.msra.mxu0 0.0
        %703 = vmatprep.subr.mxu0 0.0
        %704 = vmatpush2.xpose.msra.mxu0 0.0
        %705 = vmatprep.subr.mxu0 0.0
        %706 = vmatpush2.xpose.msra.mxu0 0.0
        %707 = vmatprep.subr.mxu0 0.0
        %708 = vmatpush2.xpose.msra.mxu0 0.0
        %709 = vmatprep.subr.mxu0 0.0
        %710 = vmatpush2.xpose.msra.mxu0 0.0
        %711 = vmatprep.subr.mxu0 0.0
        %712 = vmatpush2.xpose.msra.mxu0 0.0
        %713 = vmatprep.subr.mxu0 0.0
        %714 = vmatpush2.xpose.msra.mxu0 0.0
        %715 = vmatprep.subr.mxu0 0.0
        %716 = vmatpush2.xpose.msra.mxu0 0.0
        %717 = vmatprep.subr.mxu0 0.0
        %718 = vmatpush2.xpose.msra.mxu0 0.0
        %719 = vmatprep.mubr.f32.mxu0 0.0
        %720 = vmatmul.mubr.f32.gmra.mxu0 %v644
        %v721 = vpop.f32.mrf.mxu0
        %v722 = vadd.f32 0.0, %v721
        %v723 = vpop.f32.mrf.mxu0
        %724 = vdwg.mxu0
        %v725 = vsel %vm390, %v722, -inf
        %726 = vmax.xlane.f32.xlu0 %v725
        %v727 = vpop.xlane.xlu0 %726
        %v728 = vsub.f32 %v722, %v727
        %v729 = vmul.f32 %v728, 1.442695
        %v730 = vpow.pop %v729
        %v731 = vsel %vm390, %v730, 0.0
        %732 = vadd.xlane.f32.xlu0 %v731
        %v733 = vpop.xlane.xlu0 %732
        %734 = vrot.lane.b32.xlu0 %v629, 96
        %v735 = vpop.permute.xlu0 %734
        %736 = vrot.lane.b32.xlu0 %v634, 96
        %v737 = vpop.permute.xlu0 %736
        %738 = vrot.lane.b32.xlu0 %v639, 96
        %v739 = vpop.permute.xlu0 %738
        %v743 = vsel %vm390, %v730, 0
        %v745 = vsel %vm394, %v739, 0
        %747 = vmatprep.subr.mxu0 0.0
        %748 = vmatpush1.msra.mxu0 0.0
        %749 = vmatprep.subr.mxu0 0.0
        %750 = vmatpush1.msra.mxu0 0.0
        %751 = vmatprep.subr.mxu0 0.0
        %752 = vmatpush1.msra.mxu0 0.0
        %753 = vmatprep.subr.mxu0 0.0
        %754 = vmatpush1.msra.mxu0 0.0
        %755 = vmatprep.subr.mxu0 0.0
        %756 = vmatpush1.msra.mxu0 0.0
        %757 = vmatprep.subr.mxu0 0.0
        %758 = vmatpush1.msra.mxu0 0.0
        %759 = vmatprep.subr.mxu0 0.0
        %760 = vmatpush1.msra.mxu0 0.0
        %761 = vmatprep.subr.mxu0 0.0
        %762 = vmatpush1.msra.mxu0 0.0
        %763 = vmatprep.subr.mxu0 0.0
        %764 = vmatpush1.msra.mxu0 0.0
        %765 = vmatprep.subr.mxu0 0.0
        %766 = vmatpush1.msra.mxu0 0.0
        %767 = vmatprep.subr.mxu0 0.0
        %768 = vmatpush1.msra.mxu0 0.0
        %769 = vmatprep.subr.mxu0 0.0
        %770 = vmatpush1.msra.mxu0 0.0
        %771 = vmatprep.subr.mxu0 0.0
        %772 = vmatpush1.msra.mxu0 0.0
        %773 = vmatprep.subr.mxu0 0.0
        %774 = vmatpush1.msra.mxu0 %v745
        %775 = vmatprep.subr.mxu0 0.0
        %776 = vmatpush1.msra.mxu0 %v737
        %777 = vmatprep.subr.mxu0 0.0
        %778 = vmatpush1.msra.mxu0 %v735
        %779 = vmatprep.subr.mxu0 0.0
        %780 = vmatpush2.msra.mxu0 0.0
        %781 = vmatprep.subr.mxu0 0.0
        %782 = vmatpush2.msra.mxu0 0.0
        %783 = vmatprep.subr.mxu0 0.0
        %784 = vmatpush2.msra.mxu0 0.0
        %785 = vmatprep.subr.mxu0 0.0
        %786 = vmatpush2.msra.mxu0 0.0
        %787 = vmatprep.subr.mxu0 0.0
        %788 = vmatpush2.msra.mxu0 0.0
        %789 = vmatprep.subr.mxu0 0.0
        %790 = vmatpush2.msra.mxu0 0.0
        %791 = vmatprep.subr.mxu0 0.0
        %792 = vmatpush2.msra.mxu0 0.0
        %793 = vmatprep.subr.mxu0 0.0
        %794 = vmatpush2.msra.mxu0 0.0
        %795 = vmatprep.subr.mxu0 0.0
        %796 = vmatpush2.msra.mxu0 0.0
        %797 = vmatprep.subr.mxu0 0.0
        %798 = vmatpush2.msra.mxu0 0.0
        %799 = vmatprep.subr.mxu0 0.0
        %800 = vmatpush2.msra.mxu0 0.0
        %801 = vmatprep.subr.mxu0 0.0
        %802 = vmatpush2.msra.mxu0 0.0
        %803 = vmatprep.subr.mxu0 0.0
        %804 = vmatpush2.msra.mxu0 0.0
        %805 = vmatprep.subr.mxu0 0.0
        %806 = vmatpush2.msra.mxu0 0.0
        %807 = vmatprep.subr.mxu0 0.0
        %808 = vmatpush2.msra.mxu0 0.0
        %809 = vmatprep.subr.mxu0 0.0
        %810 = vmatpush2.msra.mxu0 0.0
        %811 = vmatprep.mubr.f32.mxu0 0.0
        %812 = vmatmul.mubr.f32.gmra.mxu0 %v743
        %v813 = vpop.f32.mrf.mxu0
        %v814 = vadd.f32 0.0, %v813
        %v815 = vpop.f32.mrf.mxu0
        %816 = vdwg.mxu0
        %v817 = vrcp.pop %v733
        %v818 = vmul.f32 %v814, %v817
        %819 = vst.msk [vmem:[#allocation2] sm:$0xff] %vm642, %v818
        %820 = vrot.lane.b32.xlu0 %v545, 120
        %v821 = vpop.permute.xlu0 %820
        %822 = vrot.lane.b32.xlu0 %v629, 120
        %v823 = vpop.permute.xlu0 %822
        %824 = vrot.lane.b32.xlu0 %v634, 120
        %v825 = vpop.permute.xlu0 %824
        %826 = vrot.lane.b32.xlu0 %v639, 120
        %v827 = vpop.permute.xlu0 %826
        %v828 = vsel %vm642, %v821, 0
        %v830 = vsel %vm642, %v823, 0
        %v832 = vsel %vm642, %v825, 0
        %v834 = vsel %vm642, %v827, 0
        %836 = vmatprep.subr.mxu0 0.0
        %837 = vmatpush1.xpose.msra.mxu0 0.0
        %838 = vmatprep.subr.mxu0 0.0
        %839 = vmatpush1.xpose.msra.mxu0 0.0
        %840 = vmatprep.subr.mxu0 0.0
        %841 = vmatpush1.xpose.msra.mxu0 0.0
        %842 = vmatprep.subr.mxu0 0.0
        %843 = vmatpush1.xpose.msra.mxu0 0.0
        %844 = vmatprep.subr.mxu0 0.0
        %845 = vmatpush1.xpose.msra.mxu0 0.0
        %846 = vmatprep.subr.mxu0 0.0
        %847 = vmatpush1.xpose.msra.mxu0 0.0
        %848 = vmatprep.subr.mxu0 0.0
        %849 = vmatpush1.xpose.msra.mxu0 0.0
        %850 = vmatprep.subr.mxu0 0.0
        %851 = vmatpush1.xpose.msra.mxu0 0.0
        %852 = vmatprep.subr.mxu0 0.0
        %853 = vmatpush1.xpose.msra.mxu0 0.0
        %854 = vmatprep.subr.mxu0 0.0
        %855 = vmatpush1.xpose.msra.mxu0 0.0
        %856 = vmatprep.subr.mxu0 0.0
        %857 = vmatpush1.xpose.msra.mxu0 0.0
        %858 = vmatprep.subr.mxu0 0.0
        %859 = vmatpush1.xpose.msra.mxu0 0.0
        %860 = vmatprep.subr.mxu0 0.0
        %861 = vmatpush1.xpose.msra.mxu0 0.0
        %862 = vmatprep.subr.mxu0 0.0
        %863 = vmatpush1.xpose.msra.mxu0 %v834
        %864 = vmatprep.subr.mxu0 0.0
        %865 = vmatpush1.xpose.msra.mxu0 %v832
        %866 = vmatprep.subr.mxu0 0.0
        %867 = vmatpush1.xpose.msra.mxu0 %v830
        %868 = vmatprep.subr.mxu0 0.0
        %869 = vmatpush2.xpose.msra.mxu0 0.0
        %870 = vmatprep.subr.mxu0 0.0
        %871 = vmatpush2.xpose.msra.mxu0 0.0
        %872 = vmatprep.subr.mxu0 0.0
        %873 = vmatpush2.xpose.msra.mxu0 0.0
        %874 = vmatprep.subr.mxu0 0.0
        %875 = vmatpush2.xpose.msra.mxu0 0.0
        %876 = vmatprep.subr.mxu0 0.0
        %877 = vmatpush2.xpose.msra.mxu0 0.0
        %878 = vmatprep.subr.mxu0 0.0
        %879 = vmatpush2.xpose.msra.mxu0 0.0
        %880 = vmatprep.subr.mxu0 0.0
        %881 = vmatpush2.xpose.msra.mxu0 0.0
        %882 = vmatprep.subr.mxu0 0.0
        %883 = vmatpush2.xpose.msra.mxu0 0.0
        %884 = vmatprep.subr.mxu0 0.0
        %885 = vmatpush2.xpose.msra.mxu0 0.0
        %886 = vmatprep.subr.mxu0 0.0
        %887 = vmatpush2.xpose.msra.mxu0 0.0
        %888 = vmatprep.subr.mxu0 0.0
        %889 = vmatpush2.xpose.msra.mxu0 0.0
        %890 = vmatprep.subr.mxu0 0.0
        %891 = vmatpush2.xpose.msra.mxu0 0.0
        %892 = vmatprep.subr.mxu0 0.0
        %893 = vmatpush2.xpose.msra.mxu0 0.0
        %894 = vmatprep.subr.mxu0 0.0
        %895 = vmatpush2.xpose.msra.mxu0 0.0
        %896 = vmatprep.subr.mxu0 0.0
        %897 = vmatpush2.xpose.msra.mxu0 0.0
        %898 = vmatprep.subr.mxu0 0.0
        %899 = vmatpush2.xpose.msra.mxu0 0.0
        %900 = vmatprep.mubr.f32.mxu0 0.0
        %901 = vmatmul.mubr.f32.gmra.mxu0 %v828
        %v902 = vpop.f32.mrf.mxu0
        %v903 = vadd.f32 0.0, %v902
        %v904 = vpop.f32.mrf.mxu0
        %905 = vdwg.mxu0
        %v906 = vsel %vm390, %v903, -inf
        %907 = vmax.xlane.f32.xlu0 %v906
        %v908 = vpop.xlane.xlu0 %907
        %v909 = vsub.f32 %v903, %v908
        %v910 = vmul.f32 %v909, 1.442695
        %v911 = vpow.pop %v910
        %v912 = vsel %vm390, %v911, 0.0
        %913 = vadd.xlane.f32.xlu0 %v912
        %v914 = vpop.xlane.xlu0 %913
        %915 = vrot.lane.b32.xlu0 %v629, 88
        %v916 = vpop.permute.xlu0 %915
        %917 = vrot.lane.b32.xlu0 %v634, 88
        %v918 = vpop.permute.xlu0 %917
        %919 = vrot.lane.b32.xlu0 %v639, 88
        %v920 = vpop.permute.xlu0 %919
        %v924 = vsel %vm390, %v911, 0
        %v926 = vsel %vm394, %v920, 0
        %928 = vmatprep.subr.mxu0 0.0
        %929 = vmatpush1.msra.mxu0 0.0
        %930 = vmatprep.subr.mxu0 0.0
        %931 = vmatpush1.msra.mxu0 0.0
        %932 = vmatprep.subr.mxu0 0.0
        %933 = vmatpush1.msra.mxu0 0.0
        %934 = vmatprep.subr.mxu0 0.0
        %935 = vmatpush1.msra.mxu0 0.0
        %936 = vmatprep.subr.mxu0 0.0
        %937 = vmatpush1.msra.mxu0 0.0
        %938 = vmatprep.subr.mxu0 0.0
        %939 = vmatpush1.msra.mxu0 0.0
        %940 = vmatprep.subr.mxu0 0.0
        %941 = vmatpush1.msra.mxu0 0.0
        %942 = vmatprep.subr.mxu0 0.0
        %943 = vmatpush1.msra.mxu0 0.0
        %944 = vmatprep.subr.mxu0 0.0
        %945 = vmatpush1.msra.mxu0 0.0
        %946 = vmatprep.subr.mxu0 0.0
        %947 = vmatpush1.msra.mxu0 0.0
        %948 = vmatprep.subr.mxu0 0.0
        %949 = vmatpush1.msra.mxu0 0.0
        %950 = vmatprep.subr.mxu0 0.0
        %951 = vmatpush1.msra.mxu0 0.0
        %952 = vmatprep.subr.mxu0 0.0
        %953 = vmatpush1.msra.mxu0 0.0
        %954 = vmatprep.subr.mxu0 0.0
        %955 = vmatpush1.msra.mxu0 %v926
        %956 = vmatprep.subr.mxu0 0.0
        %957 = vmatpush1.msra.mxu0 %v918
        %958 = vmatprep.subr.mxu0 0.0
        %959 = vmatpush1.msra.mxu0 %v916
        %960 = vmatprep.subr.mxu0 0.0
        %961 = vmatpush2.msra.mxu0 0.0
        %962 = vmatprep.subr.mxu0 0.0
        %963 = vmatpush2.msra.mxu0 0.0
        %964 = vmatprep.subr.mxu0 0.0
        %965 = vmatpush2.msra.mxu0 0.0
        %966 = vmatprep.subr.mxu0 0.0
        %967 = vmatpush2.msra.mxu0 0.0
        %968 = vmatprep.subr.mxu0 0.0
        %969 = vmatpush2.msra.mxu0 0.0
        %970 = vmatprep.subr.mxu0 0.0
        %971 = vmatpush2.msra.mxu0 0.0
        %972 = vmatprep.subr.mxu0 0.0
        %973 = vmatpush2.msra.mxu0 0.0
        %974 = vmatprep.subr.mxu0 0.0
        %975 = vmatpush2.msra.mxu0 0.0
        %976 = vmatprep.subr.mxu0 0.0
        %977 = vmatpush2.msra.mxu0 0.0
        %978 = vmatprep.subr.mxu0 0.0
        %979 = vmatpush2.msra.mxu0 0.0
        %980 = vmatprep.subr.mxu0 0.0
        %981 = vmatpush2.msra.mxu0 0.0
        %982 = vmatprep.subr.mxu0 0.0
        %983 = vmatpush2.msra.mxu0 0.0
        %984 = vmatprep.subr.mxu0 0.0
        %985 = vmatpush2.msra.mxu0 0.0
        %986 = vmatprep.subr.mxu0 0.0
        %987 = vmatpush2.msra.mxu0 0.0
        %988 = vmatprep.subr.mxu0 0.0
        %989 = vmatpush2.msra.mxu0 0.0
        %990 = vmatprep.subr.mxu0 0.0
        %991 = vmatpush2.msra.mxu0 0.0
        %992 = vmatprep.mubr.f32.mxu0 0.0
        %993 = vmatmul.mubr.f32.gmra.mxu0 %v924
        %v994 = vpop.f32.mrf.mxu0
        %v995 = vadd.f32 0.0, %v994
        %v996 = vpop.f32.mrf.mxu0
        %997 = vdwg.mxu0
        %v998 = vrcp.pop %v914
        %v999 = vmul.f32 %v995, %v998
        %1001 = vrot.lane.b32.xlu0 %v999, 8
        %v1002 = vpop.permute.xlu0 %1001
        %vm1004 = vcmask 130112
        %1005 = vst.msk [vmem:[#allocation2] sm:$0xff] %vm1004, %v1002
        %1006 = vrot.lane.b32.xlu0 %v545, 112
        %v1007 = vpop.permute.xlu0 %1006
        %1008 = vrot.lane.b32.xlu0 %v629, 112
        %v1009 = vpop.permute.xlu0 %1008
        %1010 = vrot.lane.b32.xlu0 %v634, 112
        %v1011 = vpop.permute.xlu0 %1010
        %1012 = vrot.lane.b32.xlu0 %v639, 112
        %v1013 = vpop.permute.xlu0 %1012
        %v1014 = vsel %vm642, %v1007, 0
        %v1016 = vsel %vm642, %v1009, 0
        %v1018 = vsel %vm642, %v1011, 0
        %v1020 = vsel %vm642, %v1013, 0
        %1022 = vmatprep.subr.mxu0 0.0
        %1023 = vmatpush1.xpose.msra.mxu0 0.0
        %1024 = vmatprep.subr.mxu0 0.0
        %1025 = vmatpush1.xpose.msra.mxu0 0.0
        %1026 = vmatprep.subr.mxu0 0.0
        %1027 = vmatpush1.xpose.msra.mxu0 0.0
        %1028 = vmatprep.subr.mxu0 0.0
        %1029 = vmatpush1.xpose.msra.mxu0 0.0
        %1030 = vmatprep.subr.mxu0 0.0
        %1031 = vmatpush1.xpose.msra.mxu0 0.0
        %1032 = vmatprep.subr.mxu0 0.0
        %1033 = vmatpush1.xpose.msra.mxu0 0.0
        %1034 = vmatprep.subr.mxu0 0.0
        %1035 = vmatpush1.xpose.msra.mxu0 0.0
        %1036 = vmatprep.subr.mxu0 0.0
        %1037 = vmatpush1.xpose.msra.mxu0 0.0
        %1038 = vmatprep.subr.mxu0 0.0
        %1039 = vmatpush1.xpose.msra.mxu0 0.0
        %1040 = vmatprep.subr.mxu0 0.0
        %1041 = vmatpush1.xpose.msra.mxu0 0.0
        %1042 = vmatprep.subr.mxu0 0.0
        %1043 = vmatpush1.xpose.msra.mxu0 0.0
        %1044 = vmatprep.subr.mxu0 0.0
        %1045 = vmatpush1.xpose.msra.mxu0 0.0
        %1046 = vmatprep.subr.mxu0 0.0
        %1047 = vmatpush1.xpose.msra.mxu0 0.0
        %1048 = vmatprep.subr.mxu0 0.0
        %1049 = vmatpush1.xpose.msra.mxu0 %v1020
        %1050 = vmatprep.subr.mxu0 0.0
        %1051 = vmatpush1.xpose.msra.mxu0 %v1018
        %1052 = vmatprep.subr.mxu0 0.0
        %1053 = vmatpush1.xpose.msra.mxu0 %v1016
        %1054 = vmatprep.subr.mxu0 0.0
        %1055 = vmatpush2.xpose.msra.mxu0 0.0
        %1056 = vmatprep.subr.mxu0 0.0
        %1057 = vmatpush2.xpose.msra.mxu0 0.0
        %1058 = vmatprep.subr.mxu0 0.0
        %1059 = vmatpush2.xpose.msra.mxu0 0.0
        %1060 = vmatprep.subr.mxu0 0.0
        %1061 = vmatpush2.xpose.msra.mxu0 0.0
        %1062 = vmatprep.subr.mxu0 0.0
        %1063 = vmatpush2.xpose.msra.mxu0 0.0
        %1064 = vmatprep.subr.mxu0 0.0
        %1065 = vmatpush2.xpose.msra.mxu0 0.0
        %1066 = vmatprep.subr.mxu0 0.0
        %1067 = vmatpush2.xpose.msra.mxu0 0.0
        %1068 = vmatprep.subr.mxu0 0.0
        %1069 = vmatpush2.xpose.msra.mxu0 0.0
        %1070 = vmatprep.subr.mxu0 0.0
        %1071 = vmatpush2.xpose.msra.mxu0 0.0
        %1072 = vmatprep.subr.mxu0 0.0
        %1073 = vmatpush2.xpose.msra.mxu0 0.0
        %1074 = vmatprep.subr.mxu0 0.0
        %1075 = vmatpush2.xpose.msra.mxu0 0.0
        %1076 = vmatprep.subr.mxu0 0.0
        %1077 = vmatpush2.xpose.msra.mxu0 0.0
        %1078 = vmatprep.subr.mxu0 0.0
        %1079 = vmatpush2.xpose.msra.mxu0 0.0
        %1080 = vmatprep.subr.mxu0 0.0
        %1081 = vmatpush2.xpose.msra.mxu0 0.0
        %1082 = vmatprep.subr.mxu0 0.0
        %1083 = vmatpush2.xpose.msra.mxu0 0.0
        %1084 = vmatprep.subr.mxu0 0.0
        %1085 = vmatpush2.xpose.msra.mxu0 0.0
        %1086 = vmatprep.mubr.f32.mxu0 0.0
        %1087 = vmatmul.mubr.f32.gmra.mxu0 %v1014
        %v1088 = vpop.f32.mrf.mxu0
        %v1089 = vadd.f32 0.0, %v1088
        %v1090 = vpop.f32.mrf.mxu0
        %1091 = vdwg.mxu0
        %v1092 = vsel %vm390, %v1089, -inf
        %1093 = vmax.xlane.f32.xlu0 %v1092
        %v1094 = vpop.xlane.xlu0 %1093
        %v1095 = vsub.f32 %v1089, %v1094
        %v1096 = vmul.f32 %v1095, 1.442695
        %v1097 = vpow.pop %v1096
        %v1098 = vsel %vm390, %v1097, 0.0
        %1099 = vadd.xlane.f32.xlu0 %v1098
        %v1100 = vpop.xlane.xlu0 %1099
        %1101 = vrot.lane.b32.xlu0 %v629, 80
        %v1102 = vpop.permute.xlu0 %1101
        %1103 = vrot.lane.b32.xlu0 %v634, 80
        %v1104 = vpop.permute.xlu0 %1103
        %1105 = vrot.lane.b32.xlu0 %v639, 80
        %v1106 = vpop.permute.xlu0 %1105
        %v1110 = vsel %vm390, %v1097, 0
        %v1112 = vsel %vm394, %v1106, 0
        %1114 = vmatprep.subr.mxu0 0.0
        %1115 = vmatpush1.msra.mxu0 0.0
        %1116 = vmatprep.subr.mxu0 0.0
        %1117 = vmatpush1.msra.mxu0 0.0
        %1118 = vmatprep.subr.mxu0 0.0
        %1119 = vmatpush1.msra.mxu0 0.0
        %1120 = vmatprep.subr.mxu0 0.0
        %1121 = vmatpush1.msra.mxu0 0.0
        %1122 = vmatprep.subr.mxu0 0.0
        %1123 = vmatpush1.msra.mxu0 0.0
        %1124 = vmatprep.subr.mxu0 0.0
        %1125 = vmatpush1.msra.mxu0 0.0
        %1126 = vmatprep.subr.mxu0 0.0
        %1127 = vmatpush1.msra.mxu0 0.0
        %1128 = vmatprep.subr.mxu0 0.0
        %1129 = vmatpush1.msra.mxu0 0.0
        %1130 = vmatprep.subr.mxu0 0.0
        %1131 = vmatpush1.msra.mxu0 0.0
        %1132 = vmatprep.subr.mxu0 0.0
        %1133 = vmatpush1.msra.mxu0 0.0
        %1134 = vmatprep.subr.mxu0 0.0
        %1135 = vmatpush1.msra.mxu0 0.0
        %1136 = vmatprep.subr.mxu0 0.0
        %1137 = vmatpush1.msra.mxu0 0.0
        %1138 = vmatprep.subr.mxu0 0.0
        %1139 = vmatpush1.msra.mxu0 0.0
        %1140 = vmatprep.subr.mxu0 0.0
        %1141 = vmatpush1.msra.mxu0 %v1112
        %1142 = vmatprep.subr.mxu0 0.0
        %1143 = vmatpush1.msra.mxu0 %v1104
        %1144 = vmatprep.subr.mxu0 0.0
        %1145 = vmatpush1.msra.mxu0 %v1102
        %1146 = vmatprep.subr.mxu0 0.0
        %1147 = vmatpush2.msra.mxu0 0.0
        %1148 = vmatprep.subr.mxu0 0.0
        %1149 = vmatpush2.msra.mxu0 0.0
        %1150 = vmatprep.subr.mxu0 0.0
        %1151 = vmatpush2.msra.mxu0 0.0
        %1152 = vmatprep.subr.mxu0 0.0
        %1153 = vmatpush2.msra.mxu0 0.0
        %1154 = vmatprep.subr.mxu0 0.0
        %1155 = vmatpush2.msra.mxu0 0.0
        %1156 = vmatprep.subr.mxu0 0.0
        %1157 = vmatpush2.msra.mxu0 0.0
        %1158 = vmatprep.subr.mxu0 0.0
        %1159 = vmatpush2.msra.mxu0 0.0
        %1160 = vmatprep.subr.mxu0 0.0
        %1161 = vmatpush2.msra.mxu0 0.0
        %1162 = vmatprep.subr.mxu0 0.0
        %1163 = vmatpush2.msra.mxu0 0.0
        %1164 = vmatprep.subr.mxu0 0.0
        %1165 = vmatpush2.msra.mxu0 0.0
        %1166 = vmatprep.subr.mxu0 0.0
        %1167 = vmatpush2.msra.mxu0 0.0
        %1168 = vmatprep.subr.mxu0 0.0
        %1169 = vmatpush2.msra.mxu0 0.0
        %1170 = vmatprep.subr.mxu0 0.0
        %1171 = vmatpush2.msra.mxu0 0.0
        %1172 = vmatprep.subr.mxu0 0.0
        %1173 = vmatpush2.msra.mxu0 0.0
        %1174 = vmatprep.subr.mxu0 0.0
        %1175 = vmatpush2.msra.mxu0 0.0
        %1176 = vmatprep.subr.mxu0 0.0
        %1177 = vmatpush2.msra.mxu0 0.0
        %1178 = vmatprep.mubr.f32.mxu0 0.0
        %1179 = vmatmul.mubr.f32.gmra.mxu0 %v1110
        %v1180 = vpop.f32.mrf.mxu0
        %v1181 = vadd.f32 0.0, %v1180
        %v1182 = vpop.f32.mrf.mxu0
        %1183 = vdwg.mxu0
        %v1184 = vrcp.pop %v1100
        %v1185 = vmul.f32 %v1181, %v1184
        %1187 = vrot.lane.b32.xlu0 %v1185, 16
        %v1188 = vpop.permute.xlu0 %1187
        %vm1190 = vcmask 195712
        %1191 = vst.msk [vmem:[#allocation2] sm:$0xff] %vm1190, %v1188
        %1192 = vrot.lane.b32.xlu0 %v545, 104
        %v1193 = vpop.permute.xlu0 %1192
        %1194 = vrot.lane.b32.xlu0 %v629, 104
        %v1195 = vpop.permute.xlu0 %1194
        %1196 = vrot.lane.b32.xlu0 %v634, 104
        %v1197 = vpop.permute.xlu0 %1196
        %1198 = vrot.lane.b32.xlu0 %v639, 104
        %v1199 = vpop.permute.xlu0 %1198
        %v1200 = vsel %vm642, %v1193, 0
        %v1202 = vsel %vm642, %v1195, 0
        %v1204 = vsel %vm642, %v1197, 0
        %v1206 = vsel %vm642, %v1199, 0
        %1208 = vmatprep.subr.mxu0 0.0
        %1209 = vmatpush1.xpose.msra.mxu0 0.0
        %1210 = vmatprep.subr.mxu0 0.0
        %1211 = vmatpush1.xpose.msra.mxu0 0.0
        %1212 = vmatprep.subr.mxu0 0.0
        %1213 = vmatpush1.xpose.msra.mxu0 0.0
        %1214 = vmatprep.subr.mxu0 0.0
        %1215 = vmatpush1.xpose.msra.mxu0 0.0
        %1216 = vmatprep.subr.mxu0 0.0
        %1217 = vmatpush1.xpose.msra.mxu0 0.0
        %1218 = vmatprep.subr.mxu0 0.0
        %1219 = vmatpush1.xpose.msra.mxu0 0.0
        %1220 = vmatprep.subr.mxu0 0.0
        %1221 = vmatpush1.xpose.msra.mxu0 0.0
        %1222 = vmatprep.subr.mxu0 0.0
        %1223 = vmatpush1.xpose.msra.mxu0 0.0
        %1224 = vmatprep.subr.mxu0 0.0
        %1225 = vmatpush1.xpose.msra.mxu0 0.0
        %1226 = vmatprep.subr.mxu0 0.0
        %1227 = vmatpush1.xpose.msra.mxu0 0.0
        %1228 = vmatprep.subr.mxu0 0.0
        %1229 = vmatpush1.xpose.msra.mxu0 0.0
        %1230 = vmatprep.subr.mxu0 0.0
        %1231 = vmatpush1.xpose.msra.mxu0 0.0
        %1232 = vmatprep.subr.mxu0 0.0
        %1233 = vmatpush1.xpose.msra.mxu0 0.0
        %1234 = vmatprep.subr.mxu0 0.0
        %1235 = vmatpush1.xpose.msra.mxu0 %v1206
        %1236 = vmatprep.subr.mxu0 0.0
        %1237 = vmatpush1.xpose.msra.mxu0 %v1204
        %1238 = vmatprep.subr.mxu0 0.0
        %1239 = vmatpush1.xpose.msra.mxu0 %v1202
        %1240 = vmatprep.subr.mxu0 0.0
        %1241 = vmatpush2.xpose.msra.mxu0 0.0
        %1242 = vmatprep.subr.mxu0 0.0
        %1243 = vmatpush2.xpose.msra.mxu0 0.0
        %1244 = vmatprep.subr.mxu0 0.0
        %1245 = vmatpush2.xpose.msra.mxu0 0.0
        %1246 = vmatprep.subr.mxu0 0.0
        %1247 = vmatpush2.xpose.msra.mxu0 0.0
        %1248 = vmatprep.subr.mxu0 0.0
        %1249 = vmatpush2.xpose.msra.mxu0 0.0
        %1250 = vmatprep.subr.mxu0 0.0
        %1251 = vmatpush2.xpose.msra.mxu0 0.0
        %1252 = vmatprep.subr.mxu0 0.0
        %1253 = vmatpush2.xpose.msra.mxu0 0.0
        %1254 = vmatprep.subr.mxu0 0.0
        %1255 = vmatpush2.xpose.msra.mxu0 0.0
        %1256 = vmatprep.subr.mxu0 0.0
        %1257 = vmatpush2.xpose.msra.mxu0 0.0
        %1258 = vmatprep.subr.mxu0 0.0
        %1259 = vmatpush2.xpose.msra.mxu0 0.0
        %1260 = vmatprep.subr.mxu0 0.0
        %1261 = vmatpush2.xpose.msra.mxu0 0.0
        %1262 = vmatprep.subr.mxu0 0.0
        %1263 = vmatpush2.xpose.msra.mxu0 0.0
        %1264 = vmatprep.subr.mxu0 0.0
        %1265 = vmatpush2.xpose.msra.mxu0 0.0
        %1266 = vmatprep.subr.mxu0 0.0
        %1267 = vmatpush2.xpose.msra.mxu0 0.0
        %1268 = vmatprep.subr.mxu0 0.0
        %1269 = vmatpush2.xpose.msra.mxu0 0.0
        %1270 = vmatprep.subr.mxu0 0.0
        %1271 = vmatpush2.xpose.msra.mxu0 0.0
        %1272 = vmatprep.mubr.f32.mxu0 0.0
        %1273 = vmatmul.mubr.f32.gmra.mxu0 %v1200
        %v1274 = vpop.f32.mrf.mxu0
        %v1275 = vadd.f32 0.0, %v1274
        %v1276 = vpop.f32.mrf.mxu0
        %1277 = vdwg.mxu0
        %v1278 = vsel %vm390, %v1275, -inf
        %1279 = vmax.xlane.f32.xlu0 %v1278
        %v1280 = vpop.xlane.xlu0 %1279
        %v1281 = vsub.f32 %v1275, %v1280
        %v1282 = vmul.f32 %v1281, 1.442695
        %v1283 = vpow.pop %v1282
        %v1284 = vsel %vm390, %v1283, 0.0
        %1285 = vadd.xlane.f32.xlu0 %v1284
        %v1286 = vpop.xlane.xlu0 %1285
        %1287 = vrot.lane.b32.xlu0 %v629, 72
        %v1288 = vpop.permute.xlu0 %1287
        %1289 = vrot.lane.b32.xlu0 %v634, 72
        %v1290 = vpop.permute.xlu0 %1289
        %1291 = vrot.lane.b32.xlu0 %v639, 72
        %v1292 = vpop.permute.xlu0 %1291
        %v1296 = vsel %vm390, %v1283, 0
        %v1298 = vsel %vm394, %v1292, 0
        %1300 = vmatprep.subr.mxu0 0.0
        %1301 = vmatpush1.msra.mxu0 0.0
        %1302 = vmatprep.subr.mxu0 0.0
        %1303 = vmatpush1.msra.mxu0 0.0
        %1304 = vmatprep.subr.mxu0 0.0
        %1305 = vmatpush1.msra.mxu0 0.0
        %1306 = vmatprep.subr.mxu0 0.0
        %1307 = vmatpush1.msra.mxu0 0.0
        %1308 = vmatprep.subr.mxu0 0.0
        %1309 = vmatpush1.msra.mxu0 0.0
        %1310 = vmatprep.subr.mxu0 0.0
        %1311 = vmatpush1.msra.mxu0 0.0
        %1312 = vmatprep.subr.mxu0 0.0
        %1313 = vmatpush1.msra.mxu0 0.0
        %1314 = vmatprep.subr.mxu0 0.0
        %1315 = vmatpush1.msra.mxu0 0.0
        %1316 = vmatprep.subr.mxu0 0.0
        %1317 = vmatpush1.msra.mxu0 0.0
        %1318 = vmatprep.subr.mxu0 0.0
        %1319 = vmatpush1.msra.mxu0 0.0
        %1320 = vmatprep.subr.mxu0 0.0
        %1321 = vmatpush1.msra.mxu0 0.0
        %1322 = vmatprep.subr.mxu0 0.0
        %1323 = vmatpush1.msra.mxu0 0.0
        %1324 = vmatprep.subr.mxu0 0.0
        %1325 = vmatpush1.msra.mxu0 0.0
        %1326 = vmatprep.subr.mxu0 0.0
        %1327 = vmatpush1.msra.mxu0 %v1298
        %1328 = vmatprep.subr.mxu0 0.0
        %1329 = vmatpush1.msra.mxu0 %v1290
        %1330 = vmatprep.subr.mxu0 0.0
        %1331 = vmatpush1.msra.mxu0 %v1288
        %1332 = vmatprep.subr.mxu0 0.0
        %1333 = vmatpush2.msra.mxu0 0.0
        %1334 = vmatprep.subr.mxu0 0.0
        %1335 = vmatpush2.msra.mxu0 0.0
        %1336 = vmatprep.subr.mxu0 0.0
        %1337 = vmatpush2.msra.mxu0 0.0
        %1338 = vmatprep.subr.mxu0 0.0
        %1339 = vmatpush2.msra.mxu0 0.0
        %1340 = vmatprep.subr.mxu0 0.0
        %1341 = vmatpush2.msra.mxu0 0.0
        %1342 = vmatprep.subr.mxu0 0.0
        %1343 = vmatpush2.msra.mxu0 0.0
        %1344 = vmatprep.subr.mxu0 0.0
        %1345 = vmatpush2.msra.mxu0 0.0
        %1346 = vmatprep.subr.mxu0 0.0
        %1347 = vmatpush2.msra.mxu0 0.0
        %1348 = vmatprep.subr.mxu0 0.0
        %1349 = vmatpush2.msra.mxu0 0.0
        %1350 = vmatprep.subr.mxu0 0.0
        %1351 = vmatpush2.msra.mxu0 0.0
        %1352 = vmatprep.subr.mxu0 0.0
        %1353 = vmatpush2.msra.mxu0 0.0
        %1354 = vmatprep.subr.mxu0 0.0
        %1355 = vmatpush2.msra.mxu0 0.0
        %1356 = vmatprep.subr.mxu0 0.0
        %1357 = vmatpush2.msra.mxu0 0.0
        %1358 = vmatprep.subr.mxu0 0.0
        %1359 = vmatpush2.msra.mxu0 0.0
        %1360 = vmatprep.subr.mxu0 0.0
        %1361 = vmatpush2.msra.mxu0 0.0
        %1362 = vmatprep.subr.mxu0 0.0
        %1363 = vmatpush2.msra.mxu0 0.0
        %1364 = vmatprep.mubr.f32.mxu0 0.0
        %1365 = vmatmul.mubr.f32.gmra.mxu0 %v1296
        %v1366 = vpop.f32.mrf.mxu0
        %v1367 = vadd.f32 0.0, %v1366
        %v1368 = vpop.f32.mrf.mxu0
        %1369 = vdwg.mxu0
        %v1370 = vrcp.pop %v1286
        %v1371 = vmul.f32 %v1367, %v1370
        %1373 = vrot.lane.b32.xlu0 %v1371, 24
        %v1374 = vpop.permute.xlu0 %1373
        %vm1376 = vcmask 261312
        %1377 = vst.msk [vmem:[#allocation2] sm:$0xff] %vm1376, %v1374
        %v1378 = vld [vmem:[#allocation2] sm:$0xff]
        %v1380 = vlaneseq
        %v1381 = vshrl.u32 %v1380, 7
        %v1382 = vsub.s32 0, %v1381
        %v1383 = vrot.slane %v335, %v1382
        %v1386 = vsel %vm474, %v1378, 0
        %1388 = vmatprep.subr.mxu0 0.0
        %1389 = vmatpush1.msra.mxu0 0.0
        %1390 = vmatprep.subr.mxu0 0.0
        %1391 = vmatpush1.msra.mxu0 0.0
        %1392 = vmatprep.subr.mxu0 0.0
        %1393 = vmatpush1.msra.mxu0 0.0
        %1394 = vmatprep.subr.mxu0 0.0
        %1395 = vmatpush1.msra.mxu0 0.0
        %1396 = vmatprep.subr.mxu0 0.0
        %1397 = vmatpush1.msra.mxu0 0.0
        %1398 = vmatprep.subr.mxu0 0.0
        %1399 = vmatpush1.msra.mxu0 0.0
        %1400 = vmatprep.subr.mxu0 0.0
        %1401 = vmatpush1.msra.mxu0 0.0
        %1402 = vmatprep.subr.mxu0 0.0
        %1403 = vmatpush1.msra.mxu0 0.0
        %1404 = vmatprep.subr.mxu0 0.0
        %1405 = vmatpush1.msra.mxu0 0.0
        %1406 = vmatprep.subr.mxu0 0.0
        %1407 = vmatpush1.msra.mxu0 0.0
        %1408 = vmatprep.subr.mxu0 0.0
        %1409 = vmatpush1.msra.mxu0 0.0
        %1410 = vmatprep.subr.mxu0 0.0
        %1411 = vmatpush1.msra.mxu0 0.0
        %1412 = vmatprep.subr.mxu0 0.0
        %1413 = vmatpush1.msra.mxu0 %v332
        %1414 = vmatprep.subr.mxu0 0.0
        %1415 = vmatpush1.msra.mxu0 %v331
        %1416 = vmatprep.subr.mxu0 0.0
        %1417 = vmatpush1.msra.mxu0 %v330
        %1418 = vmatprep.subr.mxu0 0.0
        %1419 = vmatpush1.msra.mxu0 %v329
        %1420 = vmatprep.subr.mxu0 0.0
        %1421 = vmatpush2.msra.mxu0 0.0
        %1422 = vmatprep.subr.mxu0 0.0
        %1423 = vmatpush2.msra.mxu0 0.0
        %1424 = vmatprep.subr.mxu0 0.0
        %1425 = vmatpush2.msra.mxu0 0.0
        %1426 = vmatprep.subr.mxu0 0.0
        %1427 = vmatpush2.msra.mxu0 0.0
        %1428 = vmatprep.subr.mxu0 0.0
        %1429 = vmatpush2.msra.mxu0 0.0
        %1430 = vmatprep.subr.mxu0 0.0
        %1431 = vmatpush2.msra.mxu0 0.0
        %1432 = vmatprep.subr.mxu0 0.0
        %1433 = vmatpush2.msra.mxu0 0.0
        %1434 = vmatprep.subr.mxu0 0.0
        %1435 = vmatpush2.msra.mxu0 0.0
        %1436 = vmatprep.subr.mxu0 0.0
        %1437 = vmatpush2.msra.mxu0 0.0
        %1438 = vmatprep.subr.mxu0 0.0
        %1439 = vmatpush2.msra.mxu0 0.0
        %1440 = vmatprep.subr.mxu0 0.0
        %1441 = vmatpush2.msra.mxu0 0.0
        %1442 = vmatprep.subr.mxu0 0.0
        %1443 = vmatpush2.msra.mxu0 0.0
        %1444 = vmatprep.subr.mxu0 0.0
        %1445 = vmatpush2.msra.mxu0 0.0
        %1446 = vmatprep.subr.mxu0 0.0
        %1447 = vmatpush2.msra.mxu0 0.0
        %1448 = vmatprep.subr.mxu0 0.0
        %1449 = vmatpush2.msra.mxu0 0.0
        %1450 = vmatprep.subr.mxu0 0.0
        %1451 = vmatpush2.msra.mxu0 0.0
        %1452 = vmatprep.mubr.f32.mxu0 0.0
        %1453 = vmatmul.mubr.f32.gmra.mxu0 %v1386
        %v1454 = vpop.f32.mrf.mxu0
        %v1455 = vadd.f32 %v1383, %v1454
        %v1456 = vpop.f32.mrf.mxu0
        %1457 = vdwg.mxu0
        %v1459 = vsel %vm642, %v355, 0
        %v1462 = vsel %vm642, %v356, 0
        %v1465 = vsel %vm642, %v357, 0
        %1467 = vmatprep.subr.mxu0 0.0
        %1468 = vmatpush1.msra.mxu0 0.0
        %1469 = vmatprep.subr.mxu0 0.0
        %1470 = vmatpush1.msra.mxu0 0.0
        %1471 = vmatprep.subr.mxu0 0.0
        %1472 = vmatpush1.msra.mxu0 0.0
        %1473 = vmatprep.subr.mxu0 0.0
        %1474 = vmatpush1.msra.mxu0 0.0
        %1475 = vmatprep.subr.mxu0 0.0
        %1476 = vmatpush1.msra.mxu0 0.0
        %1477 = vmatprep.subr.mxu0 0.0
        %1478 = vmatpush1.msra.mxu0 0.0
        %1479 = vmatprep.subr.mxu0 0.0
        %1480 = vmatpush1.msra.mxu0 0.0
        %1481 = vmatprep.subr.mxu0 0.0
        %1482 = vmatpush1.msra.mxu0 0.0
        %1483 = vmatprep.subr.mxu0 0.0
        %1484 = vmatpush1.msra.mxu0 0.0
        %1485 = vmatprep.subr.mxu0 0.0
        %1486 = vmatpush1.msra.mxu0 0.0
        %1487 = vmatprep.subr.mxu0 0.0
        %1488 = vmatpush1.msra.mxu0 0.0
        %1489 = vmatprep.subr.mxu0 0.0
        %1490 = vmatpush1.msra.mxu0 0.0
        %1491 = vmatprep.subr.mxu0 0.0
        %1492 = vmatpush1.msra.mxu0 0.0
        %1493 = vmatprep.subr.mxu0 0.0
        %1494 = vmatpush1.msra.mxu0 0.0
        %1495 = vmatprep.subr.mxu0 0.0
        %1496 = vmatpush1.msra.mxu0 0.0
        %1497 = vmatprep.subr.mxu0 0.0
        %1498 = vmatpush1.msra.mxu0 %v1455
        %1499 = vmatprep.subr.mxu0 0.0
        %1500 = vmatpush2.msra.mxu0 0.0
        %1501 = vmatprep.subr.mxu0 0.0
        %1502 = vmatpush2.msra.mxu0 0.0
        %1503 = vmatprep.subr.mxu0 0.0
        %1504 = vmatpush2.msra.mxu0 0.0
        %1505 = vmatprep.subr.mxu0 0.0
        %1506 = vmatpush2.msra.mxu0 0.0
        %1507 = vmatprep.subr.mxu0 0.0
        %1508 = vmatpush2.msra.mxu0 0.0
        %1509 = vmatprep.subr.mxu0 0.0
        %1510 = vmatpush2.msra.mxu0 0.0
        %1511 = vmatprep.subr.mxu0 0.0
        %1512 = vmatpush2.msra.mxu0 0.0
        %1513 = vmatprep.subr.mxu0 0.0
        %1514 = vmatpush2.msra.mxu0 0.0
        %1515 = vmatprep.subr.mxu0 0.0
        %1516 = vmatpush2.msra.mxu0 0.0
        %1517 = vmatprep.subr.mxu0 0.0
        %1518 = vmatpush2.msra.mxu0 0.0
        %1519 = vmatprep.subr.mxu0 0.0
        %1520 = vmatpush2.msra.mxu0 0.0
        %1521 = vmatprep.subr.mxu0 0.0
        %1522 = vmatpush2.msra.mxu0 0.0
        %1523 = vmatprep.subr.mxu0 0.0
        %1524 = vmatpush2.msra.mxu0 0.0
        %1525 = vmatprep.subr.mxu0 0.0
        %1526 = vmatpush2.msra.mxu0 0.0
        %1527 = vmatprep.subr.mxu0 0.0
        %1528 = vmatpush2.msra.mxu0 0.0
        %1529 = vmatprep.subr.mxu0 0.0
        %1530 = vmatpush2.msra.mxu0 0.0
        %1531 = vmatprep.mubr.f32.mxu0 0.0
        %1532 = vmatmul.mubr.f32.gmra.mxu0 %v1459
        %v1533 = vpop.f32.mrf.mxu0
        %v1534 = vadd.f32 0.0, %v1533
        %v1535 = vpop.f32.mrf.mxu0
        %1536 = vmatprep.mubr.f32.mxu0 0.0
        %1537 = vmatmul.mubr.f32.gmra.mxu0 %v1462
        %v1538 = vpop.f32.mrf.mxu0
        %v1539 = vadd.f32 0.0, %v1538
        %v1540 = vpop.f32.mrf.mxu0
        %1541 = vmatprep.mubr.f32.mxu0 0.0
        %1542 = vmatmul.mubr.f32.gmra.mxu0 %v1465
        %v1543 = vpop.f32.mrf.mxu0
        %v1544 = vadd.f32 0.0, %v1543
        %v1545 = vpop.f32.mrf.mxu0
        %1546 = vdwg.mxu0
        %v1547 = vsel %vm642, %v355, 0.0
        %1548 = vadd.xlane.f32.xlu0 %v1547
        %v1549 = vpop.xlane.xlu0 %1548
        %v1550 = vsel %vm642, %v356, 0.0
        %1551 = vadd.xlane.f32.xlu0 %v1550
        %v1552 = vpop.xlane.xlu0 %1551
        %vm1553 = vcmask 57344
        %v1554 = vsel %vm1553, %v357, 0.0
        %1555 = vadd.xlane.f32.xlu0 %v1554
        %v1556 = vpop.xlane.xlu0 %1555
        %vm1557 = vcmp.gt.f32.partialorder %v1549, 0.5
        %vm1558 = vcmp.gt.f32.partialorder %v1552, 0.5
        %vm1559 = vcmp.gt.f32.partialorder %v1556, 0.5
        %v1560 = vsel %vm1557, 1, 0
        %v1561 = vsel %vm1558, 1, 0
        %v1562 = vsel %vm1559, 1, 0
        %vm1563 = vcmp.eq.s32.totalorder %v1560, 1
        %vm1564 = vcmp.eq.s32.totalorder %v1561, 1
        %vm1565 = vcmp.eq.s32.totalorder %v1562, 1
        %v1566 = vsel %vm1563, %v1534, %v336
        %v1567 = vsel %vm1564, %v1539, %v337
        %v1568 = vsel %vm1565, %v1544, %v338
        %1569 = vst.msk [vmem:[%s320] sm:$0xff] %vm474, %v1566
        %1570 = vst.msk [vmem:[%s320 + $0x8] sm:$0xff] %vm474, %v1567
        %vm1571 = vcmask 253952
        %1572 = vst.msk [vmem:[%s320 + $0x10] sm:$0x1] %vm1571, %v1568
        %p1573 = scmp.lt.s32.totalorder %s20, 1
        %s1574 = scalar_select %p1573, %s20, 1
        %s1575 = smul.addr %s1574, 3
        %s1576 = smul.addr %s1575, 8
        %s1577 = scalar_lea.vmem %s8, %s1576
        // Predicated region
        $region57: #{tpu_custom_call.1} parent=51 // pred_check
          %p1578 = pneg %p211
        $region58: #{tpu_custom_call.1} parent=51 // pred_check_branch
          %1580 = sbr.rel (%p1578) target = $region60
        $region59: #{tpu_custom_call.1} parent=51 // pred_region
          _
        $region60: #{tpu_custom_call.1} parent=51 // pred_fallthru
          _
      $region52: #{tpu_custom_call.1} parent=5 // pred_fallthru
        _
      %p1581 = scmp.le.s32.totalorder 2, %s15
      // Predicated region
      $region61: #{tpu_custom_call.1} parent=5 // pred_check
        %p1582 = pneg %p1581
      $region62: #{tpu_custom_call.1} parent=5 // pred_check_branch
        %1584 = sbr.rel (%p1582) target = $region64
      $region63: #{tpu_custom_call.1} parent=5 // pred_region
        %s1585 = ssub.s32 %s15, 2
        // Predicated region
        $region65: #{tpu_custom_call.1} parent=63 // pred_check
          %p1586 = pneg %p217
        $region66: #{tpu_custom_call.1} parent=63 // pred_check_branch
          %1588 = sbr.rel (%p1586) target = $region68
        $region67: #{tpu_custom_call.1} parent=63 // pred_region
          %p1589 = scmp.lt.s32.totalorder %s21, 1
          %s1590 = scalar_select %p1589, %s21, 1
          %s1591 = smul.addr %s1590, 3
          %s1592 = smul.addr %s1591, 8
          %s1593 = scalar_lea.vmem %s8, %s1592
        $region68: #{tpu_custom_call.1} parent=63 // pred_fallthru
          _
      $region64: #{tpu_custom_call.1} parent=5 // pred_fallthru
        _
    $region6: #{tpu_custom_call.1} parent=1 // loop_footer
      %s19 = sadd.s32 1, %s15
    $region7: #{tpu_custom_call.1} parent=1 // loop_footer_branch
      %14 = sbr.rel target = $region3
    $region8: #{tpu_custom_call.1} parent=1 // loop_exit
      _
    %1594 = vsyncpa [#allocation4], 1
    %s1595 = scalar_lea.sflag [#allocation4], 1
    %1596 = vsyncpa %s1595, 1

</llo_original>
